<compile_context>
chip_gen: v7x
topology: tpu7x:2x2x1
jax: 0.10.0
libtpu: 0.0.40
codegen_flags: <defaults>
</compile_context>

<pallas_src>
import functools

import jax
import jax.numpy as jnp
from jax.experimental import pallas as pl
from jax.experimental.pallas import tpu as pltpu

_LANE = 128
_SUBLANE = 8
_VMEM_BUDGET = 44 << 20          # conservative: fits v7x's 64 MiB with headroom


def _round_up(x, m):
    return (x + m - 1) // m * m


def _vmem_estimate(tc, bb, d_in, hp, act_bytes):
    """Rough per-layer VMEM residency (bytes) for the chosen tiling."""
    x_bufs = 2 * tc * bb * d_in * act_bytes          # double-buffered x chunk
    y_bufs = 2 * tc * bb * hp * act_bytes            # double-buffered y chunk
    hc_out = 2 * 2 * bb * hp * 4                     # h_n / c_n output blocks
    weights = (d_in + hp) * 4 * hp * act_bytes       # single-buffered W_ih/W_hh
    bias = 2 * 4 * hp * 4                            # bias (double-buffered)
    xg = tc * bb * 4 * hp * 4                        # hoisted input projection
    carries = 2 * bb * hp * 4                        # h / c carries
    return x_bufs + y_bufs + hc_out + weights + bias + xg + carries


def _pick_unroll(hp, tc):
    """Step unroll factor: big for small H, small for big H (avoid spills)."""
    u = 8 if hp <= 256 else (4 if hp <= 1024 else 2)
    while u > 1 and tc % u:
        u //= 2
    return max(u, 1)


def _lstm_layer_kernel(x_ref, wih_hbm, whh_hbm, b_ref,
                       y_ref, h_out_ref, c_out_ref,
                       h_scr, c_scr, xg_scr, wih_v, whh_v, dma_sem,
                       *, seq_len, t_chunk, unroll):
    """One LSTM layer.  Grid = (batch_block ['parallel'], time_chunk ['arbitrary']).

    x_ref:    (t_chunk, bb, Din)  input slab (compute dtype)
    wih_hbm:  (Din, 4*Hp)  HBM-resident input->gate weights (pl.ANY)
    whh_hbm:  (Hp, 4*Hp)   HBM-resident hidden->gate weights (pl.ANY)
    b_ref:    (1, 4*Hp)    combined bias b_ih + b_hh (f32, zero padded lanes)
    y_ref:    (t_chunk, bb, Hp)  per-step hidden output slab (compute dtype)
    h_out_ref, c_out_ref: (bb, Hp) f32, written on the last time chunk only
    h_scr, c_scr: (bb, Hp) f32 carries (persist across time chunks)
    xg_scr:   (t_chunk, bb, 4*Hp) f32 hoisted input projection
    wih_v, whh_v: VMEM copies of the weights (single-buffered)
    """
    c_id = pl.program_id(1)              # time-chunk axis (sequential)
    n_chunks = pl.num_programs(1)

    bb, Hp = h_scr.shape
    d_in = x_ref.shape[2]
    cdt = wih_v.dtype
    U = unroll
    n_groups = t_chunk // U
    needs_mask = (seq_len % t_chunk) != 0          # static

    @pl.when(c_id == 0)
    def _():
        # One weight DMA per time sweep into single-buffered VMEM scratch.
        cp_ih = pltpu.make_async_copy(wih_hbm, wih_v, dma_sem.at[0])
        cp_hh = pltpu.make_async_copy(whh_hbm, whh_v, dma_sem.at[1])
        cp_ih.start()
        cp_hh.start()
        h_scr[...] = jnp.zeros_like(h_scr)
        c_scr[...] = jnp.zeros_like(c_scr)
        cp_ih.wait()
        cp_hh.wait()

    def project(g):
        """Input projection for U consecutive steps: one lane-dense MXU matmul."""
        start = g * U
        if not isinstance(start, int):
            start = pl.multiple_of(start, U)
        x_slab = x_ref[pl.ds(start, U), :, :].reshape(U * bb, d_in).astype(cdt)
        proj = jnp.dot(x_slab, wih_v[...], preferred_element_type=jnp.float32)
        proj = proj + b_ref[...]
        xg_scr[pl.ds(start, U), :, :] = proj.reshape(U, bb, 4 * Hp)

    def run_group(g, h, c):
        """U recurrence steps (Python-unrolled).  h/c are (bb, Hp) f32."""
        for u in range(U):
            i = g * U + u
            # TODO(synk): consider pltpu.matmul_push_rhs to keep W_hh stationary.
            gates = xg_scr[i] + jnp.dot(h.astype(cdt), whh_v[...],
                                        preferred_element_type=jnp.float32)
            # PyTorch gate order i, f, g, o; each slab is lane-tile aligned
            # (Hp is a multiple of 128) so slices and stores are unmasked.
            i_g = jax.nn.sigmoid(gates[:, 0 * Hp:1 * Hp])
            f_g = jax.nn.sigmoid(gates[:, 1 * Hp:2 * Hp])
            g_g = jnp.tanh(gates[:, 2 * Hp:3 * Hp])
            o_g = jax.nn.sigmoid(gates[:, 3 * Hp:4 * Hp])
            c_new = f_g * c + i_g * g_g
            h_new = o_g * jnp.tanh(c_new)
            if needs_mask:
                # Padded time steps: freeze carries so h_n/c_n stay correct.
                valid = (c_id * t_chunk + i) < seq_len
                h_new = jnp.where(valid, h_new, h)
                c_new = jnp.where(valid, c_new, c)
            y_ref[i] = h_new.astype(y_ref.dtype)
            h, c = h_new, c_new
        return h, c

    # Prime projection for group 0; inside each group body, issue the next
    # group's projection so its MXU work overlaps this group's recurrence.
    project(0)
    h0, c0 = h_scr[...], c_scr[...]
    if n_groups > 1:
        def group_body(g, carry):
            h, c = carry
            project(g + 1)
            return run_group(g, h, c)
        h0, c0 = jax.lax.fori_loop(0, n_groups - 1, group_body, (h0, c0))
    h_fin, c_fin = run_group(n_groups - 1, h0, c0)

    h_scr[...] = h_fin
    c_scr[...] = c_fin

    @pl.when(c_id == n_chunks - 1)      # key off the time axis only
    def _():
        h_out_ref[...] = h_fin.astype(h_out_ref.dtype)
        c_out_ref[...] = c_fin.astype(c_out_ref.dtype)


def _lstm_layer(x_tbd, wih_p, whh_p, bias_p, *, seq_len, t_chunk, n_bb, bb):
    """x_tbd: (Tp, Bp, Din) time-major activations (compute dtype),
    Tp % t_chunk == 0, Bp = n_bb * bb, bb % 8 == 0.
    wih_p: (Din, 4*Hp), whh_p: (Hp, 4*Hp) compute dtype; bias_p: (1, 4*Hp) f32."""
    Tp, Bp, Din = x_tbd.shape
    Hp = whh_p.shape[0]
    num_chunks = Tp // t_chunk
    act_dtype = x_tbd.dtype
    act_bytes = jnp.dtype(act_dtype).itemsize
    unroll = _pick_unroll(Hp, t_chunk)

    kernel = functools.partial(_lstm_layer_kernel, seq_len=seq_len,
                               t_chunk=t_chunk, unroll=unroll)

    est = _vmem_estimate(t_chunk, bb, Din, Hp, act_bytes)
    vmem_limit = int(min(est + (16 << 20), 100 << 20))

    grid_spec = pltpu.PrefetchScalarGridSpec(
        num_scalar_prefetch=0,
        grid=(n_bb, num_chunks),
        in_specs=[
            pl.BlockSpec((t_chunk, bb, Din), lambda b, c: (c, b, 0)),  # x chunk
            pl.BlockSpec(memory_space=pl.ANY),                         # W_ih (HBM)
            pl.BlockSpec(memory_space=pl.ANY),                         # W_hh (HBM)
            pl.BlockSpec((1, 4 * Hp), lambda b, c: (0, 0)),            # bias
        ],
        out_specs=[
            pl.BlockSpec((t_chunk, bb, Hp), lambda b, c: (c, b, 0)),   # y
            pl.BlockSpec((bb, Hp), lambda b, c: (b, 0)),               # h_n
            pl.BlockSpec((bb, Hp), lambda b, c: (b, 0)),               # c_n
        ],
        scratch_shapes=[
            pltpu.VMEM((bb, Hp), jnp.float32),                  # h carry
            pltpu.VMEM((bb, Hp), jnp.float32),                  # c carry
            pltpu.VMEM((t_chunk, bb, 4 * Hp), jnp.float32),     # hoisted x-proj
            pltpu.VMEM((Din, 4 * Hp), wih_p.dtype),             # W_ih (resident)
            pltpu.VMEM((Hp, 4 * Hp), whh_p.dtype),              # W_hh (resident)
            pltpu.SemaphoreType.DMA((2,)),                      # weight copies
        ],
    )

    return pl.pallas_call(
        kernel,
        out_shape=(
            jax.ShapeDtypeStruct((Tp, Bp, Hp), act_dtype),
            jax.ShapeDtypeStruct((Bp, Hp), jnp.float32),
            jax.ShapeDtypeStruct((Bp, Hp), jnp.float32),
        ),
        grid_spec=grid_spec,
        compiler_params=pltpu.CompilerParams(
            dimension_semantics=("parallel", "arbitrary"),
            vmem_limit_bytes=vmem_limit,
        ),
    )(x_tbd, wih_p, whh_p, bias_p)


def init_encoder_params(key, input_size, hidden_size, num_layers):
    """Raw nn.LSTM-style parameters: per layer (W_ih (4H, in), W_hh (4H, H),
    b_ih (4H,), b_hh (4H,)), float32, U(-1/sqrt(H), 1/sqrt(H))."""
    params = []
    bound = float(hidden_size) ** -0.5
    in_dim = input_size
    for _ in range(num_layers):
        key, k1, k2, k3, k4 = jax.random.split(key, 5)
        w_ih = jax.random.uniform(k1, (4 * hidden_size, in_dim),
                                  jnp.float32, -bound, bound)
        w_hh = jax.random.uniform(k2, (4 * hidden_size, hidden_size),
                                  jnp.float32, -bound, bound)
        b_ih = jax.random.uniform(k3, (4 * hidden_size,), jnp.float32, -bound, bound)
        b_hh = jax.random.uniform(k4, (4 * hidden_size,), jnp.float32, -bound, bound)
        params.append((w_ih, w_hh, b_ih, b_hh))
        in_dim = hidden_size
    return params


def _pack_layer(w_ih, w_hh, b_ih, b_hh, d_in_p, hp, compute_dtype):
    """Pack PyTorch-layout weights into lane-aligned, pre-transposed slabs.
    Gate k occupies columns [k*hp, k*hp + H); padded rows/columns are ZERO so
    the padded hidden lanes provably stay at 0 through the recurrence."""
    h = w_ih.shape[0] // 4

    def pad_gates(w_t, rows_p):                      # (rows, 4H) -> (rows_p, 4*hp)
        rows = w_t.shape[0]
        w4 = w_t.reshape(rows, 4, h)
        w4 = jnp.pad(w4, ((0, rows_p - rows), (0, 0), (0, hp - h)))
        return w4.reshape(rows_p, 4 * hp)

    wih_p = pad_gates(w_ih.T, d_in_p).astype(compute_dtype)
    whh_p = pad_gates(w_hh.T, hp).astype(compute_dtype)
    bias_p = pad_gates((b_ih + b_hh)[None, :], 1).astype(jnp.float32)
    return wih_p, whh_p, bias_p


def encoder_forward(x_btd, params, *, t_chunk=64, compute_dtype=jnp.bfloat16):
    """Equivalent of Encoder.forward: x (B, T, input_size) -> (h_n, c_n),
    each (num_layers, B, hidden_size) float32.

    compute_dtype=bfloat16 feeds the MXU (and the inter-layer activation
    stream) in bf16 with f32 accumulation/carries; pass jnp.float32 for
    bit-closer parity with PyTorch fp32.
    """
    B, T, D = x_btd.shape
    H = params[0][1].shape[1]                     # W_hh is (4H, H)
    Hp = _round_up(H, _LANE)

    # Batch blocking: <= 8 rows -> one block; else two blocks so v7x's two
    # TensorCores each take one via the leading "parallel" grid axis.
    n_bb = 1 if B <= _SUBLANE else 2
    bb = _round_up(-(-B // n_bb), _SUBLANE)
    Bp = n_bb * bb

    # Shrink the time chunk until the worst-layer VMEM residency fits the
    # budget (keeps v7x's 64 MiB happy at realistic H).
    act_bytes = jnp.dtype(compute_dtype).itemsize
    tc = max(1, min(t_chunk, T))
    worst_din = max(D, Hp)
    while tc > 8 and _vmem_estimate(tc, bb, worst_din, Hp, act_bytes) > _VMEM_BUDGET:
        tc = max(8, tc // 2)
    Tp = _round_up(T, tc)

    # Inter-layer activations stay in the compute dtype (bf16 by default):
    # halves x/y DMA and store traffic; numerically identical since the very
    # next use is an MXU dot in that dtype.
    x = jnp.transpose(x_btd.astype(compute_dtype), (1, 0, 2))      # (T, B, D)
    x = jnp.pad(x, ((0, Tp - T), (0, Bp - B), (0, 0)))

    # TODO(synk): fuse layers into one pallas_call (stacked-weight layer axis)
    # to avoid the per-layer HBM round trip of the (Tp, Bp, Hp) y slab.
    h_ns, c_ns = [], []
    d_in_p = D
    for (w_ih, w_hh, b_ih, b_hh) in params:
        wih_p, whh_p, bias_p = _pack_layer(w_ih, w_hh, b_ih, b_hh,
                                           d_in_p, Hp, compute_dtype)
        y, h_n, c_n = _lstm_layer(x, wih_p, whh_p, bias_p,
                                  seq_len=T, t_chunk=tc, n_bb=n_bb, bb=bb)
        h_ns.append(h_n[:B, :H])
        c_ns.append(c_n[:B, :H])
        x = y                               # (Tp, Bp, Hp) feeds the next layer
        d_in_p = Hp
    return jnp.stack(h_ns, axis=0), jnp.stack(c_ns, axis=0)


def _encoder_reference(x_btd, params, compute_dtype=jnp.bfloat16):
    """Pure-JAX lax.scan reference with the same precision strategy
    (compute-dtype dot operands, f32 accumulation, f32 carries)."""
    B = x_btd.shape[0]
    layer_in = jnp.transpose(x_btd, (1, 0, 2)).astype(jnp.float32)   # (T, B, D)
    h_ns, c_ns = [], []
    for (w_ih, w_hh, b_ih, b_hh) in params:
        H = w_hh.shape[1]
        wih_c = w_ih.T.astype(compute_dtype)
        whh_c = w_hh.T.astype(compute_dtype)
        b = (b_ih + b_hh)[None, :]

        def step(carry, x_t, wih_c=wih_c, whh_c=whh_c, b=b, H=H):
            h, c = carry
            g = (jnp.dot(x_t.astype(compute_dtype), wih_c,
                         preferred_element_type=jnp.float32)
                 + jnp.dot(h.astype(compute_dtype), whh_c,
                           preferred_element_type=jnp.float32) + b)
            i_g = jax.nn.sigmoid(g[:, :H])
            f_g = jax.nn.sigmoid(g[:, H:2 * H])
            g_g = jnp.tanh(g[:, 2 * H:3 * H])
            o_g = jax.nn.sigmoid(g[:, 3 * H:])
            c = f_g * c + i_g * g_g
            h = o_g * jnp.tanh(c)
            return (h, c), h

        init = (jnp.zeros((B, H), jnp.float32), jnp.zeros((B, H), jnp.float32))
        (h, c), ys = jax.lax.scan(step, init, layer_in)
        layer_in = ys
        h_ns.append(h)
        c_ns.append(c)
    return jnp.stack(h_ns, axis=0), jnp.stack(c_ns, axis=0)


if __name__ == "__main__":
    key = jax.random.PRNGKey(0)

    # Shapes consistent with the module: batch=2, seq=8, input=4, hidden=32,
    # num_layers=2.
    batch, seq_len = 2, 8
    input_size, hidden_size, num_layers = 4, 32, 2

    key, k_x, k_p = jax.random.split(key, 3)
    x = jax.random.normal(k_x, (batch, seq_len, input_size), jnp.float32)
    params = init_encoder_params(k_p, input_size, hidden_size, num_layers)

    fwd = jax.jit(functools.partial(encoder_forward, t_chunk=64))
    h_n, c_n = fwd(x, params)
    jax.block_until_ready((h_n, c_n))
    assert h_n.shape == (num_layers, batch, hidden_size)
    assert c_n.shape == (num_layers, batch, hidden_size)

    h_ref, c_ref = _encoder_reference(x, params)
    assert jnp.allclose(h_n, h_ref, atol=5e-3, rtol=5e-3)
    assert jnp.allclose(c_n, c_ref, atol=5e-3, rtol=5e-3)

    # Second config: exercises multi-chunk time, the time-padding mask, the
    # dynamic group loop and the two-batch-block "parallel" axis.
    batch2, seq2, in2, hid2, layers2 = 12, 20, 3, 16, 2
    key, k_x2, k_p2 = jax.random.split(key, 3)
    x2 = jax.random.normal(k_x2, (batch2, seq2, in2), jnp.float32)
    params2 = init_encoder_params(k_p2, in2, hid2, layers2)
    fwd2 = jax.jit(functools.partial(encoder_forward, t_chunk=16))
    h2, c2 = fwd2(x2, params2)
    jax.block_until_ready((h2, c2))
    h2_ref, c2_ref = _encoder_reference(x2, params2)
    assert jnp.allclose(h2, h2_ref, atol=5e-3, rtol=5e-3)
    assert jnp.allclose(c2, c2_ref, atol=5e-3, rtol=5e-3)

    print("KERNEL_OK")
</pallas_src>

<mosaic_0001>
module attributes {stable_mosaic.version = 11 : i64} {
  func.func @_lstm_layer_kernel(%arg0: i32, %arg1: i32, %arg2: memref<8x8x4xbf16, #tpu.memory_space<vmem>>, %arg3: memref<4x512xbf16, #tpu.memory_space<any>>, %arg4: memref<128x512xbf16, #tpu.memory_space<any>>, %arg5: memref<1x512xf32, #tpu.memory_space<vmem>>, %arg6: memref<8x8x128xbf16, #tpu.memory_space<vmem>>, %arg7: memref<8x128xf32, #tpu.memory_space<vmem>>, %arg8: memref<8x128xf32, #tpu.memory_space<vmem>>, %arg9: memref<8x128xf32, #tpu.memory_space<vmem>>, %arg10: memref<8x128xf32, #tpu.memory_space<vmem>>, %arg11: memref<8x8x512xf32, #tpu.memory_space<vmem>>, %arg12: memref<4x512xbf16, #tpu.memory_space<vmem>>, %arg13: memref<128x512xbf16, #tpu.memory_space<vmem>>, %arg14: memref<2x!tpu.dma_semaphore, #tpu.memory_space<semaphore_mem>>) attributes {dimension_semantics = [#tpu.dimension_semantics<parallel>, #tpu.dimension_semantics<arbitrary>], iteration_bounds = array<i64: 1, 1>, scalar_prefetch = 0 : i64, scratch_operands = 6 : i64, tpu.core_type = #tpu.core_type<tc>, window_params = [{transform_indices = @transform_0, window_bounds = array<i64: 8, 8, 4>}, {}, {}, {pipeline_mode = #tpu.pipeline_mode<synchronous>, transform_indices = @transform_3, window_bounds = array<i64: 1, 512>}, {transform_indices = @transform_4, window_bounds = array<i64: 8, 8, 128>}, {transform_indices = @transform_5, window_bounds = array<i64: 8, 128>}, {transform_indices = @transform_6, window_bounds = array<i64: 8, 128>}]} {
    %c0_i32 = arith.constant 0 : i32
    %0 = arith.cmpi eq, %arg1, %c0_i32 : i32
    %1 = arith.extui %0 : i1 to i32
    %c0_i32_0 = arith.constant 0 : i32
    %2 = arith.cmpi ne, %1, %c0_i32_0 : i32
    scf.if %2 {
      %c0_i32_109 = arith.constant 0 : i32
      %299 = tpu.memref_slice %arg14[%c0_i32_109] : memref<2x!tpu.dma_semaphore, #tpu.memory_space<semaphore_mem>> -> memref<1x!tpu.dma_semaphore, #tpu.memory_space<semaphore_mem>>
      %300 = tpu.memref_squeeze %299 : memref<1x!tpu.dma_semaphore, #tpu.memory_space<semaphore_mem>> -> memref<!tpu.dma_semaphore, #tpu.memory_space<semaphore_mem>>
      tpu.enqueue_dma source(%arg3 : memref<4x512xbf16, #tpu.memory_space<any>>) target(%arg12 : memref<4x512xbf16, #tpu.memory_space<vmem>>) target_semaphore(%300 : memref<!tpu.dma_semaphore, #tpu.memory_space<semaphore_mem>>)
      %c1_i32 = arith.constant 1 : i32
      %301 = tpu.memref_slice %arg14[%c1_i32] : memref<2x!tpu.dma_semaphore, #tpu.memory_space<semaphore_mem>> -> memref<1x!tpu.dma_semaphore, #tpu.memory_space<semaphore_mem>>
      %302 = tpu.memref_squeeze %301 : memref<1x!tpu.dma_semaphore, #tpu.memory_space<semaphore_mem>> -> memref<!tpu.dma_semaphore, #tpu.memory_space<semaphore_mem>>
      tpu.enqueue_dma source(%arg4 : memref<128x512xbf16, #tpu.memory_space<any>>) target(%arg13 : memref<128x512xbf16, #tpu.memory_space<vmem>>) target_semaphore(%302 : memref<!tpu.dma_semaphore, #tpu.memory_space<semaphore_mem>>)
      %cst_110 = arith.constant 0.000000e+00 : f32
      %303 = vector.broadcast %cst_110 : f32 to vector<8x128xf32>
      %c0_111 = arith.constant 0 : index
      %c0_112 = arith.constant 0 : index
      %304 = vector.load %arg9[%c0_111, %c0_112] : memref<8x128xf32, #tpu.memory_space<vmem>>, vector<8x128xf32>
      tpu.vector_store %arg9[%c0_111, %c0_112], %303 {strides = array<i32>} : memref<8x128xf32, #tpu.memory_space<vmem>>, vector<8x128xf32>,
      %cst_113 = arith.constant 0.000000e+00 : f32
      %305 = vector.broadcast %cst_113 : f32 to vector<8x128xf32>
      %c0_114 = arith.constant 0 : index
      %c0_115 = arith.constant 0 : index
      %306 = vector.load %arg10[%c0_114, %c0_115] : memref<8x128xf32, #tpu.memory_space<vmem>>, vector<8x128xf32>
      tpu.vector_store %arg10[%c0_114, %c0_115], %305 {strides = array<i32>} : memref<8x128xf32, #tpu.memory_space<vmem>>, vector<8x128xf32>,
      %c0_i32_116 = arith.constant 0 : i32
      %307 = tpu.memref_slice %arg14[%c0_i32_116] : memref<2x!tpu.dma_semaphore, #tpu.memory_space<semaphore_mem>> -> memref<1x!tpu.dma_semaphore, #tpu.memory_space<semaphore_mem>>
      %308 = tpu.memref_squeeze %307 : memref<1x!tpu.dma_semaphore, #tpu.memory_space<semaphore_mem>> -> memref<!tpu.dma_semaphore, #tpu.memory_space<semaphore_mem>>
      tpu.wait_dma2 semaphore(%308 : memref<!tpu.dma_semaphore, #tpu.memory_space<semaphore_mem>>) src(%arg3 : memref<4x512xbf16, #tpu.memory_space<any>>) dst(%arg12 : memref<4x512xbf16, #tpu.memory_space<vmem>>)
      %c1_i32_117 = arith.constant 1 : i32
      %309 = tpu.memref_slice %arg14[%c1_i32_117] : memref<2x!tpu.dma_semaphore, #tpu.memory_space<semaphore_mem>> -> memref<1x!tpu.dma_semaphore, #tpu.memory_space<semaphore_mem>>
      %310 = tpu.memref_squeeze %309 : memref<1x!tpu.dma_semaphore, #tpu.memory_space<semaphore_mem>> -> memref<!tpu.dma_semaphore, #tpu.memory_space<semaphore_mem>>
      tpu.wait_dma2 semaphore(%310 : memref<!tpu.dma_semaphore, #tpu.memory_space<semaphore_mem>>) src(%arg4 : memref<128x512xbf16, #tpu.memory_space<any>>) dst(%arg13 : memref<128x512xbf16, #tpu.memory_space<vmem>>)
    } else {
    }
    %c0 = arith.constant 0 : index
    %c0_1 = arith.constant 0 : index
    %c0_2 = arith.constant 0 : index
    %3 = vector.load %arg2[%c0, %c0_1, %c0_2] : memref<8x8x4xbf16, #tpu.memory_space<vmem>>, vector<8x8x4xbf16>
    %4 = vector.shape_cast %3 : vector<8x8x4xbf16> to vector<64x4xbf16>
    %c0_3 = arith.constant 0 : index
    %c0_4 = arith.constant 0 : index
    %5 = vector.load %arg12[%c0_3, %c0_4] : memref<4x512xbf16, #tpu.memory_space<vmem>>, vector<4x512xbf16>
    %cst = arith.constant dense<0.000000e+00> : vector<64x512xf32>
    %6 = tpu.matmul %4, %5, %cst {dimension_numbers = #tpu.dot_dimension_numbers<[1], [0], [0], [1], [0, 0, 1, 1], [], []>} : vector<64x4xbf16>, vector<4x512xbf16>, vector<64x512xf32> -> vector<64x512xf32>
    %c0_5 = arith.constant 0 : index
    %c0_6 = arith.constant 0 : index
    %7 = vector.load %arg5[%c0_5, %c0_6] : memref<1x512xf32, #tpu.memory_space<vmem>>, vector<1x512xf32>
    %8 = vector.broadcast %7 : vector<1x512xf32> to vector<64x512xf32>
    %9 = arith.addf %6, %8 : vector<64x512xf32>
    %10 = vector.shape_cast %9 : vector<64x512xf32> to vector<8x8x512xf32>
    %c0_7 = arith.constant 0 : index
    %c0_8 = arith.constant 0 : index
    %c0_9 = arith.constant 0 : index
    %11 = vector.load %arg11[%c0_7, %c0_8, %c0_9] : memref<8x8x512xf32, #tpu.memory_space<vmem>>, vector<8x8x512xf32>
    tpu.vector_store %arg11[%c0_7, %c0_8, %c0_9], %10 {strides = array<i32>} : memref<8x8x512xf32, #tpu.memory_space<vmem>>, vector<8x8x512xf32>,
    %c0_10 = arith.constant 0 : index
    %c0_11 = arith.constant 0 : index
    %12 = vector.load %arg9[%c0_10, %c0_11] : memref<8x128xf32, #tpu.memory_space<vmem>>, vector<8x128xf32>
    %c0_12 = arith.constant 0 : index
    %c0_13 = arith.constant 0 : index
    %13 = vector.load %arg10[%c0_12, %c0_13] : memref<8x128xf32, #tpu.memory_space<vmem>>, vector<8x128xf32>
    %c0_14 = arith.constant 0 : index
    %c0_15 = arith.constant 0 : index
    %c0_16 = arith.constant 0 : index
    %14 = vector.load %arg11[%c0_14, %c0_15, %c0_16] : memref<8x8x512xf32, #tpu.memory_space<vmem>>, vector<1x8x512xf32>
    %15 = vector.shape_cast %14 : vector<1x8x512xf32> to vector<8x512xf32>
    %16 = arith.truncf %12 : vector<8x128xf32> to vector<8x128xbf16>
    %c0_17 = arith.constant 0 : index
    %c0_18 = arith.constant 0 : index
    %17 = vector.load %arg13[%c0_17, %c0_18] : memref<128x512xbf16, #tpu.memory_space<vmem>>, vector<128x512xbf16>
    %cst_19 = arith.constant dense<0.000000e+00> : vector<8x512xf32>
    %18 = tpu.matmul %16, %17, %cst_19 {dimension_numbers = #tpu.dot_dimension_numbers<[1], [0], [0], [1], [0, 0, 1, 1], [], []>} : vector<8x128xbf16>, vector<128x512xbf16>, vector<8x512xf32> -> vector<8x512xf32>
    %19 = arith.addf %15, %18 : vector<8x512xf32>
    %20 = vector.extract_strided_slice %19 {offsets = [0, 0], sizes = [8, 128], strides = [1, 1]} : vector<8x512xf32> to vector<8x128xf32>
    %21 = arith.negf %20 : vector<8x128xf32>
    %22 = math.exp %21 : vector<8x128xf32>
    %cst_20 = arith.constant 1.000000e+00 : f32
    %23 = vector.broadcast %cst_20 : f32 to vector<8x128xf32>
    %24 = arith.addf %23, %22 : vector<8x128xf32>
    %25 = arith.divf %23, %24 : vector<8x128xf32>
    %26 = vector.extract_strided_slice %19 {offsets = [0, 128], sizes = [8, 128], strides = [1, 1]} : vector<8x512xf32> to vector<8x128xf32>
    %27 = arith.negf %26 : vector<8x128xf32>
    %28 = math.exp %27 : vector<8x128xf32>
    %cst_21 = arith.constant 1.000000e+00 : f32
    %29 = vector.broadcast %cst_21 : f32 to vector<8x128xf32>
    %30 = arith.addf %29, %28 : vector<8x128xf32>
    %31 = arith.divf %29, %30 : vector<8x128xf32>
    %32 = vector.extract_strided_slice %19 {offsets = [0, 256], sizes = [8, 128], strides = [1, 1]} : vector<8x512xf32> to vector<8x128xf32>
    %33 = math.tanh %32 : vector<8x128xf32>
    %34 = vector.extract_strided_slice %19 {offsets = [0, 384], sizes = [8, 128], strides = [1, 1]} : vector<8x512xf32> to vector<8x128xf32>
    %35 = arith.negf %34 : vector<8x128xf32>
    %36 = math.exp %35 : vector<8x128xf32>
    %cst_22 = arith.constant 1.000000e+00 : f32
    %37 = vector.broadcast %cst_22 : f32 to vector<8x128xf32>
    %38 = arith.addf %37, %36 : vector<8x128xf32>
    %39 = arith.divf %37, %38 : vector<8x128xf32>
    %40 = arith.mulf %31, %13 : vector<8x128xf32>
    %41 = arith.mulf %25, %33 : vector<8x128xf32>
    %42 = arith.addf %40, %41 : vector<8x128xf32>
    %43 = math.tanh %42 : vector<8x128xf32>
    %44 = arith.mulf %39, %43 : vector<8x128xf32>
    %45 = arith.truncf %44 : vector<8x128xf32> to vector<8x128xbf16>
    %c0_23 = arith.constant 0 : index
    %c0_24 = arith.constant 0 : index
    %c0_25 = arith.constant 0 : index
    %46 = vector.load %arg6[%c0_23, %c0_24, %c0_25] : memref<8x8x128xbf16, #tpu.memory_space<vmem>>, vector<1x8x128xbf16>
    %47 = vector.shape_cast %46 : vector<1x8x128xbf16> to vector<8x128xbf16>
    %48 = vector.shape_cast %45 : vector<8x128xbf16> to vector<1x8x128xbf16>
    tpu.vector_store %arg6[%c0_23, %c0_24, %c0_25], %48 {strides = array<i32>} : memref<8x8x128xbf16, #tpu.memory_space<vmem>>, vector<1x8x128xbf16>,
    %c1 = arith.constant 1 : index
    %c0_26 = arith.constant 0 : index
    %c0_27 = arith.constant 0 : index
    %49 = vector.load %arg11[%c1, %c0_26, %c0_27] : memref<8x8x512xf32, #tpu.memory_space<vmem>>, vector<1x8x512xf32>
    %50 = vector.shape_cast %49 : vector<1x8x512xf32> to vector<8x512xf32>
    %51 = arith.truncf %44 : vector<8x128xf32> to vector<8x128xbf16>
    %c0_28 = arith.constant 0 : index
    %c0_29 = arith.constant 0 : index
    %52 = vector.load %arg13[%c0_28, %c0_29] : memref<128x512xbf16, #tpu.memory_space<vmem>>, vector<128x512xbf16>
    %cst_30 = arith.constant dense<0.000000e+00> : vector<8x512xf32>
    %53 = tpu.matmul %51, %52, %cst_30 {dimension_numbers = #tpu.dot_dimension_numbers<[1], [0], [0], [1], [0, 0, 1, 1], [], []>} : vector<8x128xbf16>, vector<128x512xbf16>, vector<8x512xf32> -> vector<8x512xf32>
    %54 = arith.addf %50, %53 : vector<8x512xf32>
    %55 = vector.extract_strided_slice %54 {offsets = [0, 0], sizes = [8, 128], strides = [1, 1]} : vector<8x512xf32> to vector<8x128xf32>
    %56 = arith.negf %55 : vector<8x128xf32>
    %57 = math.exp %56 : vector<8x128xf32>
    %cst_31 = arith.constant 1.000000e+00 : f32
    %58 = vector.broadcast %cst_31 : f32 to vector<8x128xf32>
    %59 = arith.addf %58, %57 : vector<8x128xf32>
    %60 = arith.divf %58, %59 : vector<8x128xf32>
    %61 = vector.extract_strided_slice %54 {offsets = [0, 128], sizes = [8, 128], strides = [1, 1]} : vector<8x512xf32> to vector<8x128xf32>
    %62 = arith.negf %61 : vector<8x128xf32>
    %63 = math.exp %62 : vector<8x128xf32>
    %cst_32 = arith.constant 1.000000e+00 : f32
    %64 = vector.broadcast %cst_32 : f32 to vector<8x128xf32>
    %65 = arith.addf %64, %63 : vector<8x128xf32>
    %66 = arith.divf %64, %65 : vector<8x128xf32>
    %67 = vector.extract_strided_slice %54 {offsets = [0, 256], sizes = [8, 128], strides = [1, 1]} : vector<8x512xf32> to vector<8x128xf32>
    %68 = math.tanh %67 : vector<8x128xf32>
    %69 = vector.extract_strided_slice %54 {offsets = [0, 384], sizes = [8, 128], strides = [1, 1]} : vector<8x512xf32> to vector<8x128xf32>
    %70 = arith.negf %69 : vector<8x128xf32>
    %71 = math.exp %70 : vector<8x128xf32>
    %cst_33 = arith.constant 1.000000e+00 : f32
    %72 = vector.broadcast %cst_33 : f32 to vector<8x128xf32>
    %73 = arith.addf %72, %71 : vector<8x128xf32>
    %74 = arith.divf %72, %73 : vector<8x128xf32>
    %75 = arith.mulf %66, %42 : vector<8x128xf32>
    %76 = arith.mulf %60, %68 : vector<8x128xf32>
    %77 = arith.addf %75, %76 : vector<8x128xf32>
    %78 = math.tanh %77 : vector<8x128xf32>
    %79 = arith.mulf %74, %78 : vector<8x128xf32>
    %80 = arith.truncf %79 : vector<8x128xf32> to vector<8x128xbf16>
    %c1_34 = arith.constant 1 : index
    %c0_35 = arith.constant 0 : index
    %c0_36 = arith.constant 0 : index
    %81 = vector.load %arg6[%c1_34, %c0_35, %c0_36] : memref<8x8x128xbf16, #tpu.memory_space<vmem>>, vector<1x8x128xbf16>
    %82 = vector.shape_cast %81 : vector<1x8x128xbf16> to vector<8x128xbf16>
    %83 = vector.shape_cast %80 : vector<8x128xbf16> to vector<1x8x128xbf16>
    tpu.vector_store %arg6[%c1_34, %c0_35, %c0_36], %83 {strides = array<i32>} : memref<8x8x128xbf16, #tpu.memory_space<vmem>>, vector<1x8x128xbf16>,
    %c2 = arith.constant 2 : index
    %c0_37 = arith.constant 0 : index
    %c0_38 = arith.constant 0 : index
    %84 = vector.load %arg11[%c2, %c0_37, %c0_38] : memref<8x8x512xf32, #tpu.memory_space<vmem>>, vector<1x8x512xf32>
    %85 = vector.shape_cast %84 : vector<1x8x512xf32> to vector<8x512xf32>
    %86 = arith.truncf %79 : vector<8x128xf32> to vector<8x128xbf16>
    %c0_39 = arith.constant 0 : index
    %c0_40 = arith.constant 0 : index
    %87 = vector.load %arg13[%c0_39, %c0_40] : memref<128x512xbf16, #tpu.memory_space<vmem>>, vector<128x512xbf16>
    %cst_41 = arith.constant dense<0.000000e+00> : vector<8x512xf32>
    %88 = tpu.matmul %86, %87, %cst_41 {dimension_numbers = #tpu.dot_dimension_numbers<[1], [0], [0], [1], [0, 0, 1, 1], [], []>} : vector<8x128xbf16>, vector<128x512xbf16>, vector<8x512xf32> -> vector<8x512xf32>
    %89 = arith.addf %85, %88 : vector<8x512xf32>
    %90 = vector.extract_strided_slice %89 {offsets = [0, 0], sizes = [8, 128], strides = [1, 1]} : vector<8x512xf32> to vector<8x128xf32>
    %91 = arith.negf %90 : vector<8x128xf32>
    %92 = math.exp %91 : vector<8x128xf32>
    %cst_42 = arith.constant 1.000000e+00 : f32
    %93 = vector.broadcast %cst_42 : f32 to vector<8x128xf32>
    %94 = arith.addf %93, %92 : vector<8x128xf32>
    %95 = arith.divf %93, %94 : vector<8x128xf32>
    %96 = vector.extract_strided_slice %89 {offsets = [0, 128], sizes = [8, 128], strides = [1, 1]} : vector<8x512xf32> to vector<8x128xf32>
    %97 = arith.negf %96 : vector<8x128xf32>
    %98 = math.exp %97 : vector<8x128xf32>
    %cst_43 = arith.constant 1.000000e+00 : f32
    %99 = vector.broadcast %cst_43 : f32 to vector<8x128xf32>
    %100 = arith.addf %99, %98 : vector<8x128xf32>
    %101 = arith.divf %99, %100 : vector<8x128xf32>
    %102 = vector.extract_strided_slice %89 {offsets = [0, 256], sizes = [8, 128], strides = [1, 1]} : vector<8x512xf32> to vector<8x128xf32>
    %103 = math.tanh %102 : vector<8x128xf32>
    %104 = vector.extract_strided_slice %89 {offsets = [0, 384], sizes = [8, 128], strides = [1, 1]} : vector<8x512xf32> to vector<8x128xf32>
    %105 = arith.negf %104 : vector<8x128xf32>
    %106 = math.exp %105 : vector<8x128xf32>
    %cst_44 = arith.constant 1.000000e+00 : f32
    %107 = vector.broadcast %cst_44 : f32 to vector<8x128xf32>
    %108 = arith.addf %107, %106 : vector<8x128xf32>
    %109 = arith.divf %107, %108 : vector<8x128xf32>
    %110 = arith.mulf %101, %77 : vector<8x128xf32>
    %111 = arith.mulf %95, %103 : vector<8x128xf32>
    %112 = arith.addf %110, %111 : vector<8x128xf32>
    %113 = math.tanh %112 : vector<8x128xf32>
    %114 = arith.mulf %109, %113 : vector<8x128xf32>
    %115 = arith.truncf %114 : vector<8x128xf32> to vector<8x128xbf16>
    %c2_45 = arith.constant 2 : index
    %c0_46 = arith.constant 0 : index
    %c0_47 = arith.constant 0 : index
    %116 = vector.load %arg6[%c2_45, %c0_46, %c0_47] : memref<8x8x128xbf16, #tpu.memory_space<vmem>>, vector<1x8x128xbf16>
    %117 = vector.shape_cast %116 : vector<1x8x128xbf16> to vector<8x128xbf16>
    %118 = vector.shape_cast %115 : vector<8x128xbf16> to vector<1x8x128xbf16>
    tpu.vector_store %arg6[%c2_45, %c0_46, %c0_47], %118 {strides = array<i32>} : memref<8x8x128xbf16, #tpu.memory_space<vmem>>, vector<1x8x128xbf16>,
    %c3 = arith.constant 3 : index
    %c0_48 = arith.constant 0 : index
    %c0_49 = arith.constant 0 : index
    %119 = vector.load %arg11[%c3, %c0_48, %c0_49] : memref<8x8x512xf32, #tpu.memory_space<vmem>>, vector<1x8x512xf32>
    %120 = vector.shape_cast %119 : vector<1x8x512xf32> to vector<8x512xf32>
    %121 = arith.truncf %114 : vector<8x128xf32> to vector<8x128xbf16>
    %c0_50 = arith.constant 0 : index
    %c0_51 = arith.constant 0 : index
    %122 = vector.load %arg13[%c0_50, %c0_51] : memref<128x512xbf16, #tpu.memory_space<vmem>>, vector<128x512xbf16>
    %cst_52 = arith.constant dense<0.000000e+00> : vector<8x512xf32>
    %123 = tpu.matmul %121, %122, %cst_52 {dimension_numbers = #tpu.dot_dimension_numbers<[1], [0], [0], [1], [0, 0, 1, 1], [], []>} : vector<8x128xbf16>, vector<128x512xbf16>, vector<8x512xf32> -> vector<8x512xf32>
    %124 = arith.addf %120, %123 : vector<8x512xf32>
    %125 = vector.extract_strided_slice %124 {offsets = [0, 0], sizes = [8, 128], strides = [1, 1]} : vector<8x512xf32> to vector<8x128xf32>
    %126 = arith.negf %125 : vector<8x128xf32>
    %127 = math.exp %126 : vector<8x128xf32>
    %cst_53 = arith.constant 1.000000e+00 : f32
    %128 = vector.broadcast %cst_53 : f32 to vector<8x128xf32>
    %129 = arith.addf %128, %127 : vector<8x128xf32>
    %130 = arith.divf %128, %129 : vector<8x128xf32>
    %131 = vector.extract_strided_slice %124 {offsets = [0, 128], sizes = [8, 128], strides = [1, 1]} : vector<8x512xf32> to vector<8x128xf32>
    %132 = arith.negf %131 : vector<8x128xf32>
    %133 = math.exp %132 : vector<8x128xf32>
    %cst_54 = arith.constant 1.000000e+00 : f32
    %134 = vector.broadcast %cst_54 : f32 to vector<8x128xf32>
    %135 = arith.addf %134, %133 : vector<8x128xf32>
    %136 = arith.divf %134, %135 : vector<8x128xf32>
    %137 = vector.extract_strided_slice %124 {offsets = [0, 256], sizes = [8, 128], strides = [1, 1]} : vector<8x512xf32> to vector<8x128xf32>
    %138 = math.tanh %137 : vector<8x128xf32>
    %139 = vector.extract_strided_slice %124 {offsets = [0, 384], sizes = [8, 128], strides = [1, 1]} : vector<8x512xf32> to vector<8x128xf32>
    %140 = arith.negf %139 : vector<8x128xf32>
    %141 = math.exp %140 : vector<8x128xf32>
    %cst_55 = arith.constant 1.000000e+00 : f32
    %142 = vector.broadcast %cst_55 : f32 to vector<8x128xf32>
    %143 = arith.addf %142, %141 : vector<8x128xf32>
    %144 = arith.divf %142, %143 : vector<8x128xf32>
    %145 = arith.mulf %136, %112 : vector<8x128xf32>
    %146 = arith.mulf %130, %138 : vector<8x128xf32>
    %147 = arith.addf %145, %146 : vector<8x128xf32>
    %148 = math.tanh %147 : vector<8x128xf32>
    %149 = arith.mulf %144, %148 : vector<8x128xf32>
    %150 = arith.truncf %149 : vector<8x128xf32> to vector<8x128xbf16>
    %c3_56 = arith.constant 3 : index
    %c0_57 = arith.constant 0 : index
    %c0_58 = arith.constant 0 : index
    %151 = vector.load %arg6[%c3_56, %c0_57, %c0_58] : memref<8x8x128xbf16, #tpu.memory_space<vmem>>, vector<1x8x128xbf16>
    %152 = vector.shape_cast %151 : vector<1x8x128xbf16> to vector<8x128xbf16>
    %153 = vector.shape_cast %150 : vector<8x128xbf16> to vector<1x8x128xbf16>
    tpu.vector_store %arg6[%c3_56, %c0_57, %c0_58], %153 {strides = array<i32>} : memref<8x8x128xbf16, #tpu.memory_space<vmem>>, vector<1x8x128xbf16>,
    %c4 = arith.constant 4 : index
    %c0_59 = arith.constant 0 : index
    %c0_60 = arith.constant 0 : index
    %154 = vector.load %arg11[%c4, %c0_59, %c0_60] : memref<8x8x512xf32, #tpu.memory_space<vmem>>, vector<1x8x512xf32>
    %155 = vector.shape_cast %154 : vector<1x8x512xf32> to vector<8x512xf32>
    %156 = arith.truncf %149 : vector<8x128xf32> to vector<8x128xbf16>
    %c0_61 = arith.constant 0 : index
    %c0_62 = arith.constant 0 : index
    %157 = vector.load %arg13[%c0_61, %c0_62] : memref<128x512xbf16, #tpu.memory_space<vmem>>, vector<128x512xbf16>
    %cst_63 = arith.constant dense<0.000000e+00> : vector<8x512xf32>
    %158 = tpu.matmul %156, %157, %cst_63 {dimension_numbers = #tpu.dot_dimension_numbers<[1], [0], [0], [1], [0, 0, 1, 1], [], []>} : vector<8x128xbf16>, vector<128x512xbf16>, vector<8x512xf32> -> vector<8x512xf32>
    %159 = arith.addf %155, %158 : vector<8x512xf32>
    %160 = vector.extract_strided_slice %159 {offsets = [0, 0], sizes = [8, 128], strides = [1, 1]} : vector<8x512xf32> to vector<8x128xf32>
    %161 = arith.negf %160 : vector<8x128xf32>
    %162 = math.exp %161 : vector<8x128xf32>
    %cst_64 = arith.constant 1.000000e+00 : f32
    %163 = vector.broadcast %cst_64 : f32 to vector<8x128xf32>
    %164 = arith.addf %163, %162 : vector<8x128xf32>
    %165 = arith.divf %163, %164 : vector<8x128xf32>
    %166 = vector.extract_strided_slice %159 {offsets = [0, 128], sizes = [8, 128], strides = [1, 1]} : vector<8x512xf32> to vector<8x128xf32>
    %167 = arith.negf %166 : vector<8x128xf32>
    %168 = math.exp %167 : vector<8x128xf32>
    %cst_65 = arith.constant 1.000000e+00 : f32
    %169 = vector.broadcast %cst_65 : f32 to vector<8x128xf32>
    %170 = arith.addf %169, %168 : vector<8x128xf32>
    %171 = arith.divf %169, %170 : vector<8x128xf32>
    %172 = vector.extract_strided_slice %159 {offsets = [0, 256], sizes = [8, 128], strides = [1, 1]} : vector<8x512xf32> to vector<8x128xf32>
    %173 = math.tanh %172 : vector<8x128xf32>
    %174 = vector.extract_strided_slice %159 {offsets = [0, 384], sizes = [8, 128], strides = [1, 1]} : vector<8x512xf32> to vector<8x128xf32>
    %175 = arith.negf %174 : vector<8x128xf32>
    %176 = math.exp %175 : vector<8x128xf32>
    %cst_66 = arith.constant 1.000000e+00 : f32
    %177 = vector.broadcast %cst_66 : f32 to vector<8x128xf32>
    %178 = arith.addf %177, %176 : vector<8x128xf32>
    %179 = arith.divf %177, %178 : vector<8x128xf32>
    %180 = arith.mulf %171, %147 : vector<8x128xf32>
    %181 = arith.mulf %165, %173 : vector<8x128xf32>
    %182 = arith.addf %180, %181 : vector<8x128xf32>
    %183 = math.tanh %182 : vector<8x128xf32>
    %184 = arith.mulf %179, %183 : vector<8x128xf32>
    %185 = arith.truncf %184 : vector<8x128xf32> to vector<8x128xbf16>
    %c4_67 = arith.constant 4 : index
    %c0_68 = arith.constant 0 : index
    %c0_69 = arith.constant 0 : index
    %186 = vector.load %arg6[%c4_67, %c0_68, %c0_69] : memref<8x8x128xbf16, #tpu.memory_space<vmem>>, vector<1x8x128xbf16>
    %187 = vector.shape_cast %186 : vector<1x8x128xbf16> to vector<8x128xbf16>
    %188 = vector.shape_cast %185 : vector<8x128xbf16> to vector<1x8x128xbf16>
    tpu.vector_store %arg6[%c4_67, %c0_68, %c0_69], %188 {strides = array<i32>} : memref<8x8x128xbf16, #tpu.memory_space<vmem>>, vector<1x8x128xbf16>,
    %c5 = arith.constant 5 : index
    %c0_70 = arith.constant 0 : index
    %c0_71 = arith.constant 0 : index
    %189 = vector.load %arg11[%c5, %c0_70, %c0_71] : memref<8x8x512xf32, #tpu.memory_space<vmem>>, vector<1x8x512xf32>
    %190 = vector.shape_cast %189 : vector<1x8x512xf32> to vector<8x512xf32>
    %191 = arith.truncf %184 : vector<8x128xf32> to vector<8x128xbf16>
    %c0_72 = arith.constant 0 : index
    %c0_73 = arith.constant 0 : index
    %192 = vector.load %arg13[%c0_72, %c0_73] : memref<128x512xbf16, #tpu.memory_space<vmem>>, vector<128x512xbf16>
    %cst_74 = arith.constant dense<0.000000e+00> : vector<8x512xf32>
    %193 = tpu.matmul %191, %192, %cst_74 {dimension_numbers = #tpu.dot_dimension_numbers<[1], [0], [0], [1], [0, 0, 1, 1], [], []>} : vector<8x128xbf16>, vector<128x512xbf16>, vector<8x512xf32> -> vector<8x512xf32>
    %194 = arith.addf %190, %193 : vector<8x512xf32>
    %195 = vector.extract_strided_slice %194 {offsets = [0, 0], sizes = [8, 128], strides = [1, 1]} : vector<8x512xf32> to vector<8x128xf32>
    %196 = arith.negf %195 : vector<8x128xf32>
    %197 = math.exp %196 : vector<8x128xf32>
    %cst_75 = arith.constant 1.000000e+00 : f32
    %198 = vector.broadcast %cst_75 : f32 to vector<8x128xf32>
    %199 = arith.addf %198, %197 : vector<8x128xf32>
    %200 = arith.divf %198, %199 : vector<8x128xf32>
    %201 = vector.extract_strided_slice %194 {offsets = [0, 128], sizes = [8, 128], strides = [1, 1]} : vector<8x512xf32> to vector<8x128xf32>
    %202 = arith.negf %201 : vector<8x128xf32>
    %203 = math.exp %202 : vector<8x128xf32>
    %cst_76 = arith.constant 1.000000e+00 : f32
    %204 = vector.broadcast %cst_76 : f32 to vector<8x128xf32>
    %205 = arith.addf %204, %203 : vector<8x128xf32>
    %206 = arith.divf %204, %205 : vector<8x128xf32>
    %207 = vector.extract_strided_slice %194 {offsets = [0, 256], sizes = [8, 128], strides = [1, 1]} : vector<8x512xf32> to vector<8x128xf32>
    %208 = math.tanh %207 : vector<8x128xf32>
    %209 = vector.extract_strided_slice %194 {offsets = [0, 384], sizes = [8, 128], strides = [1, 1]} : vector<8x512xf32> to vector<8x128xf32>
    %210 = arith.negf %209 : vector<8x128xf32>
    %211 = math.exp %210 : vector<8x128xf32>
    %cst_77 = arith.constant 1.000000e+00 : f32
    %212 = vector.broadcast %cst_77 : f32 to vector<8x128xf32>
    %213 = arith.addf %212, %211 : vector<8x128xf32>
    %214 = arith.divf %212, %213 : vector<8x128xf32>
    %215 = arith.mulf %206, %182 : vector<8x128xf32>
    %216 = arith.mulf %200, %208 : vector<8x128xf32>
    %217 = arith.addf %215, %216 : vector<8x128xf32>
    %218 = math.tanh %217 : vector<8x128xf32>
    %219 = arith.mulf %214, %218 : vector<8x128xf32>
    %220 = arith.truncf %219 : vector<8x128xf32> to vector<8x128xbf16>
    %c5_78 = arith.constant 5 : index
    %c0_79 = arith.constant 0 : index
    %c0_80 = arith.constant 0 : index
    %221 = vector.load %arg6[%c5_78, %c0_79, %c0_80] : memref<8x8x128xbf16, #tpu.memory_space<vmem>>, vector<1x8x128xbf16>
    %222 = vector.shape_cast %221 : vector<1x8x128xbf16> to vector<8x128xbf16>
    %223 = vector.shape_cast %220 : vector<8x128xbf16> to vector<1x8x128xbf16>
    tpu.vector_store %arg6[%c5_78, %c0_79, %c0_80], %223 {strides = array<i32>} : memref<8x8x128xbf16, #tpu.memory_space<vmem>>, vector<1x8x128xbf16>,
    %c6 = arith.constant 6 : index
    %c0_81 = arith.constant 0 : index
    %c0_82 = arith.constant 0 : index
    %224 = vector.load %arg11[%c6, %c0_81, %c0_82] : memref<8x8x512xf32, #tpu.memory_space<vmem>>, vector<1x8x512xf32>
    %225 = vector.shape_cast %224 : vector<1x8x512xf32> to vector<8x512xf32>
    %226 = arith.truncf %219 : vector<8x128xf32> to vector<8x128xbf16>
    %c0_83 = arith.constant 0 : index
    %c0_84 = arith.constant 0 : index
    %227 = vector.load %arg13[%c0_83, %c0_84] : memref<128x512xbf16, #tpu.memory_space<vmem>>, vector<128x512xbf16>
    %cst_85 = arith.constant dense<0.000000e+00> : vector<8x512xf32>
    %228 = tpu.matmul %226, %227, %cst_85 {dimension_numbers = #tpu.dot_dimension_numbers<[1], [0], [0], [1], [0, 0, 1, 1], [], []>} : vector<8x128xbf16>, vector<128x512xbf16>, vector<8x512xf32> -> vector<8x512xf32>
    %229 = arith.addf %225, %228 : vector<8x512xf32>
    %230 = vector.extract_strided_slice %229 {offsets = [0, 0], sizes = [8, 128], strides = [1, 1]} : vector<8x512xf32> to vector<8x128xf32>
    %231 = arith.negf %230 : vector<8x128xf32>
    %232 = math.exp %231 : vector<8x128xf32>
    %cst_86 = arith.constant 1.000000e+00 : f32
    %233 = vector.broadcast %cst_86 : f32 to vector<8x128xf32>
    %234 = arith.addf %233, %232 : vector<8x128xf32>
    %235 = arith.divf %233, %234 : vector<8x128xf32>
    %236 = vector.extract_strided_slice %229 {offsets = [0, 128], sizes = [8, 128], strides = [1, 1]} : vector<8x512xf32> to vector<8x128xf32>
    %237 = arith.negf %236 : vector<8x128xf32>
    %238 = math.exp %237 : vector<8x128xf32>
    %cst_87 = arith.constant 1.000000e+00 : f32
    %239 = vector.broadcast %cst_87 : f32 to vector<8x128xf32>
    %240 = arith.addf %239, %238 : vector<8x128xf32>
    %241 = arith.divf %239, %240 : vector<8x128xf32>
    %242 = vector.extract_strided_slice %229 {offsets = [0, 256], sizes = [8, 128], strides = [1, 1]} : vector<8x512xf32> to vector<8x128xf32>
    %243 = math.tanh %242 : vector<8x128xf32>
    %244 = vector.extract_strided_slice %229 {offsets = [0, 384], sizes = [8, 128], strides = [1, 1]} : vector<8x512xf32> to vector<8x128xf32>
    %245 = arith.negf %244 : vector<8x128xf32>
    %246 = math.exp %245 : vector<8x128xf32>
    %cst_88 = arith.constant 1.000000e+00 : f32
    %247 = vector.broadcast %cst_88 : f32 to vector<8x128xf32>
    %248 = arith.addf %247, %246 : vector<8x128xf32>
    %249 = arith.divf %247, %248 : vector<8x128xf32>
    %250 = arith.mulf %241, %217 : vector<8x128xf32>
    %251 = arith.mulf %235, %243 : vector<8x128xf32>
    %252 = arith.addf %250, %251 : vector<8x128xf32>
    %253 = math.tanh %252 : vector<8x128xf32>
    %254 = arith.mulf %249, %253 : vector<8x128xf32>
    %255 = arith.truncf %254 : vector<8x128xf32> to vector<8x128xbf16>
    %c6_89 = arith.constant 6 : index
    %c0_90 = arith.constant 0 : index
    %c0_91 = arith.constant 0 : index
    %256 = vector.load %arg6[%c6_89, %c0_90, %c0_91] : memref<8x8x128xbf16, #tpu.memory_space<vmem>>, vector<1x8x128xbf16>
    %257 = vector.shape_cast %256 : vector<1x8x128xbf16> to vector<8x128xbf16>
    %258 = vector.shape_cast %255 : vector<8x128xbf16> to vector<1x8x128xbf16>
    tpu.vector_store %arg6[%c6_89, %c0_90, %c0_91], %258 {strides = array<i32>} : memref<8x8x128xbf16, #tpu.memory_space<vmem>>, vector<1x8x128xbf16>,
    %c7 = arith.constant 7 : index
    %c0_92 = arith.constant 0 : index
    %c0_93 = arith.constant 0 : index
    %259 = vector.load %arg11[%c7, %c0_92, %c0_93] : memref<8x8x512xf32, #tpu.memory_space<vmem>>, vector<1x8x512xf32>
    %260 = vector.shape_cast %259 : vector<1x8x512xf32> to vector<8x512xf32>
    %261 = arith.truncf %254 : vector<8x128xf32> to vector<8x128xbf16>
    %c0_94 = arith.constant 0 : index
    %c0_95 = arith.constant 0 : index
    %262 = vector.load %arg13[%c0_94, %c0_95] : memref<128x512xbf16, #tpu.memory_space<vmem>>, vector<128x512xbf16>
    %cst_96 = arith.constant dense<0.000000e+00> : vector<8x512xf32>
    %263 = tpu.matmul %261, %262, %cst_96 {dimension_numbers = #tpu.dot_dimension_numbers<[1], [0], [0], [1], [0, 0, 1, 1], [], []>} : vector<8x128xbf16>, vector<128x512xbf16>, vector<8x512xf32> -> vector<8x512xf32>
    %264 = arith.addf %260, %263 : vector<8x512xf32>
    %265 = vector.extract_strided_slice %264 {offsets = [0, 0], sizes = [8, 128], strides = [1, 1]} : vector<8x512xf32> to vector<8x128xf32>
    %266 = arith.negf %265 : vector<8x128xf32>
    %267 = math.exp %266 : vector<8x128xf32>
    %cst_97 = arith.constant 1.000000e+00 : f32
    %268 = vector.broadcast %cst_97 : f32 to vector<8x128xf32>
    %269 = arith.addf %268, %267 : vector<8x128xf32>
    %270 = arith.divf %268, %269 : vector<8x128xf32>
    %271 = vector.extract_strided_slice %264 {offsets = [0, 128], sizes = [8, 128], strides = [1, 1]} : vector<8x512xf32> to vector<8x128xf32>
    %272 = arith.negf %271 : vector<8x128xf32>
    %273 = math.exp %272 : vector<8x128xf32>
    %cst_98 = arith.constant 1.000000e+00 : f32
    %274 = vector.broadcast %cst_98 : f32 to vector<8x128xf32>
    %275 = arith.addf %274, %273 : vector<8x128xf32>
    %276 = arith.divf %274, %275 : vector<8x128xf32>
    %277 = vector.extract_strided_slice %264 {offsets = [0, 256], sizes = [8, 128], strides = [1, 1]} : vector<8x512xf32> to vector<8x128xf32>
    %278 = math.tanh %277 : vector<8x128xf32>
    %279 = vector.extract_strided_slice %264 {offsets = [0, 384], sizes = [8, 128], strides = [1, 1]} : vector<8x512xf32> to vector<8x128xf32>
    %280 = arith.negf %279 : vector<8x128xf32>
    %281 = math.exp %280 : vector<8x128xf32>
    %cst_99 = arith.constant 1.000000e+00 : f32
    %282 = vector.broadcast %cst_99 : f32 to vector<8x128xf32>
    %283 = arith.addf %282, %281 : vector<8x128xf32>
    %284 = arith.divf %282, %283 : vector<8x128xf32>
    %285 = arith.mulf %276, %252 : vector<8x128xf32>
    %286 = arith.mulf %270, %278 : vector<8x128xf32>
    %287 = arith.addf %285, %286 : vector<8x128xf32>
    %288 = math.tanh %287 : vector<8x128xf32>
    %289 = arith.mulf %284, %288 : vector<8x128xf32>
    %290 = arith.truncf %289 : vector<8x128xf32> to vector<8x128xbf16>
    %c7_100 = arith.constant 7 : index
    %c0_101 = arith.constant 0 : index
    %c0_102 = arith.constant 0 : index
    %291 = vector.load %arg6[%c7_100, %c0_101, %c0_102] : memref<8x8x128xbf16, #tpu.memory_space<vmem>>, vector<1x8x128xbf16>
    %292 = vector.shape_cast %291 : vector<1x8x128xbf16> to vector<8x128xbf16>
    %293 = vector.shape_cast %290 : vector<8x128xbf16> to vector<1x8x128xbf16>
    tpu.vector_store %arg6[%c7_100, %c0_101, %c0_102], %293 {strides = array<i32>} : memref<8x8x128xbf16, #tpu.memory_space<vmem>>, vector<1x8x128xbf16>,
    %c0_103 = arith.constant 0 : index
    %c0_104 = arith.constant 0 : index
    %294 = vector.load %arg9[%c0_103, %c0_104] : memref<8x128xf32, #tpu.memory_space<vmem>>, vector<8x128xf32>
    tpu.vector_store %arg9[%c0_103, %c0_104], %289 {strides = array<i32>} : memref<8x128xf32, #tpu.memory_space<vmem>>, vector<8x128xf32>,
    %c0_105 = arith.constant 0 : index
    %c0_106 = arith.constant 0 : index
    %295 = vector.load %arg10[%c0_105, %c0_106] : memref<8x128xf32, #tpu.memory_space<vmem>>, vector<8x128xf32>
    tpu.vector_store %arg10[%c0_105, %c0_106], %287 {strides = array<i32>} : memref<8x128xf32, #tpu.memory_space<vmem>>, vector<8x128xf32>,
    %c0_i32_107 = arith.constant 0 : i32
    %296 = arith.cmpi eq, %arg1, %c0_i32_107 : i32
    %297 = arith.extui %296 : i1 to i32
    %c0_i32_108 = arith.constant 0 : i32
    %298 = arith.cmpi ne, %297, %c0_i32_108 : i32
    scf.if %298 {
      %c0_109 = arith.constant 0 : index
      %c0_110 = arith.constant 0 : index
      %299 = vector.load %arg7[%c0_109, %c0_110] : memref<8x128xf32, #tpu.memory_space<vmem>>, vector<8x128xf32>
      tpu.vector_store %arg7[%c0_109, %c0_110], %289 {strides = array<i32>} : memref<8x128xf32, #tpu.memory_space<vmem>>, vector<8x128xf32>,
      %c0_111 = arith.constant 0 : index
      %c0_112 = arith.constant 0 : index
      %300 = vector.load %arg8[%c0_111, %c0_112] : memref<8x128xf32, #tpu.memory_space<vmem>>, vector<8x128xf32>
      tpu.vector_store %arg8[%c0_111, %c0_112], %287 {strides = array<i32>} : memref<8x128xf32, #tpu.memory_space<vmem>>, vector<8x128xf32>,
    } else {
    }
    return
  }
  func.func @transform_0(%arg0: i32, %arg1: i32) -> (i32, i32, i32) {
    %c0_i32 = arith.constant 0 : i32
    %c0_i32_0 = arith.constant 0 : i32
    return %arg1, %arg0, %c0_i32 : i32, i32, i32
  }
  func.func @transform_3(%arg0: i32, %arg1: i32) -> (i32, i32) {
    %c0_i32 = arith.constant 0 : i32
    %c0_i32_0 = arith.constant 0 : i32
    %c0_i32_1 = arith.constant 0 : i32
    return %c0_i32, %c0_i32_0 : i32, i32
  }
  func.func @transform_4(%arg0: i32, %arg1: i32) -> (i32, i32, i32) {
    %c0_i32 = arith.constant 0 : i32
    %c0_i32_0 = arith.constant 0 : i32
    return %arg1, %arg0, %c0_i32 : i32, i32, i32
  }
  func.func @transform_5(%arg0: i32, %arg1: i32) -> (i32, i32) {
    %c0_i32 = arith.constant 0 : i32
    %c0_i32_0 = arith.constant 0 : i32
    return %arg0, %c0_i32 : i32, i32
  }
  func.func @transform_6(%arg0: i32, %arg1: i32) -> (i32, i32) {
    %c0_i32 = arith.constant 0 : i32
    %c0_i32_0 = arith.constant 0 : i32
    return %arg0, %c0_i32 : i32, i32
  }
}

module attributes {stable_mosaic.version = 11 : i64} {
  func.func @_lstm_layer_kernel(%arg0: i32, %arg1: i32, %arg2: memref<8x8x128xbf16, #tpu.memory_space<vmem>>, %arg3: memref<128x512xbf16, #tpu.memory_space<any>>, %arg4: memref<128x512xbf16, #tpu.memory_space<any>>, %arg5: memref<1x512xf32, #tpu.memory_space<vmem>>, %arg6: memref<8x8x128xbf16, #tpu.memory_space<vmem>>, %arg7: memref<8x128xf32, #tpu.memory_space<vmem>>, %arg8: memref<8x128xf32, #tpu.memory_space<vmem>>, %arg9: memref<8x128xf32, #tpu.memory_space<vmem>>, %arg10: memref<8x128xf32, #tpu.memory_space<vmem>>, %arg11: memref<8x8x512xf32, #tpu.memory_space<vmem>>, %arg12: memref<128x512xbf16, #tpu.memory_space<vmem>>, %arg13: memref<128x512xbf16, #tpu.memory_space<vmem>>, %arg14: memref<2x!tpu.dma_semaphore, #tpu.memory_space<semaphore_mem>>) attributes {dimension_semantics = [#tpu.dimension_semantics<parallel>, #tpu.dimension_semantics<arbitrary>], iteration_bounds = array<i64: 1, 1>, scalar_prefetch = 0 : i64, scratch_operands = 6 : i64, tpu.core_type = #tpu.core_type<tc>, window_params = [{transform_indices = @transform_0, window_bounds = array<i64: 8, 8, 128>}, {}, {}, {pipeline_mode = #tpu.pipeline_mode<synchronous>, transform_indices = @transform_3, window_bounds = array<i64: 1, 512>}, {transform_indices = @transform_4, window_bounds = array<i64: 8, 8, 128>}, {transform_indices = @transform_5, window_bounds = array<i64: 8, 128>}, {transform_indices = @transform_6, window_bounds = array<i64: 8, 128>}]} {
    %c0_i32 = arith.constant 0 : i32
    %0 = arith.cmpi eq, %arg1, %c0_i32 : i32
    %1 = arith.extui %0 : i1 to i32
    %c0_i32_0 = arith.constant 0 : i32
    %2 = arith.cmpi ne, %1, %c0_i32_0 : i32
    scf.if %2 {
      %c0_i32_109 = arith.constant 0 : i32
      %299 = tpu.memref_slice %arg14[%c0_i32_109] : memref<2x!tpu.dma_semaphore, #tpu.memory_space<semaphore_mem>> -> memref<1x!tpu.dma_semaphore, #tpu.memory_space<semaphore_mem>>
      %300 = tpu.memref_squeeze %299 : memref<1x!tpu.dma_semaphore, #tpu.memory_space<semaphore_mem>> -> memref<!tpu.dma_semaphore, #tpu.memory_space<semaphore_mem>>
      tpu.enqueue_dma source(%arg3 : memref<128x512xbf16, #tpu.memory_space<any>>) target(%arg12 : memref<128x512xbf16, #tpu.memory_space<vmem>>) target_semaphore(%300 : memref<!tpu.dma_semaphore, #tpu.memory_space<semaphore_mem>>)
      %c1_i32 = arith.constant 1 : i32
      %301 = tpu.memref_slice %arg14[%c1_i32] : memref<2x!tpu.dma_semaphore, #tpu.memory_space<semaphore_mem>> -> memref<1x!tpu.dma_semaphore, #tpu.memory_space<semaphore_mem>>
      %302 = tpu.memref_squeeze %301 : memref<1x!tpu.dma_semaphore, #tpu.memory_space<semaphore_mem>> -> memref<!tpu.dma_semaphore, #tpu.memory_space<semaphore_mem>>
      tpu.enqueue_dma source(%arg4 : memref<128x512xbf16, #tpu.memory_space<any>>) target(%arg13 : memref<128x512xbf16, #tpu.memory_space<vmem>>) target_semaphore(%302 : memref<!tpu.dma_semaphore, #tpu.memory_space<semaphore_mem>>)
      %cst_110 = arith.constant 0.000000e+00 : f32
      %303 = vector.broadcast %cst_110 : f32 to vector<8x128xf32>
      %c0_111 = arith.constant 0 : index
      %c0_112 = arith.constant 0 : index
      %304 = vector.load %arg9[%c0_111, %c0_112] : memref<8x128xf32, #tpu.memory_space<vmem>>, vector<8x128xf32>
      tpu.vector_store %arg9[%c0_111, %c0_112], %303 {strides = array<i32>} : memref<8x128xf32, #tpu.memory_space<vmem>>, vector<8x128xf32>,
      %cst_113 = arith.constant 0.000000e+00 : f32
      %305 = vector.broadcast %cst_113 : f32 to vector<8x128xf32>
      %c0_114 = arith.constant 0 : index
      %c0_115 = arith.constant 0 : index
      %306 = vector.load %arg10[%c0_114, %c0_115] : memref<8x128xf32, #tpu.memory_space<vmem>>, vector<8x128xf32>
      tpu.vector_store %arg10[%c0_114, %c0_115], %305 {strides = array<i32>} : memref<8x128xf32, #tpu.memory_space<vmem>>, vector<8x128xf32>,
      %c0_i32_116 = arith.constant 0 : i32
      %307 = tpu.memref_slice %arg14[%c0_i32_116] : memref<2x!tpu.dma_semaphore, #tpu.memory_space<semaphore_mem>> -> memref<1x!tpu.dma_semaphore, #tpu.memory_space<semaphore_mem>>
      %308 = tpu.memref_squeeze %307 : memref<1x!tpu.dma_semaphore, #tpu.memory_space<semaphore_mem>> -> memref<!tpu.dma_semaphore, #tpu.memory_space<semaphore_mem>>
      tpu.wait_dma2 semaphore(%308 : memref<!tpu.dma_semaphore, #tpu.memory_space<semaphore_mem>>) src(%arg3 : memref<128x512xbf16, #tpu.memory_space<any>>) dst(%arg12 : memref<128x512xbf16, #tpu.memory_space<vmem>>)
      %c1_i32_117 = arith.constant 1 : i32
      %309 = tpu.memref_slice %arg14[%c1_i32_117] : memref<2x!tpu.dma_semaphore, #tpu.memory_space<semaphore_mem>> -> memref<1x!tpu.dma_semaphore, #tpu.memory_space<semaphore_mem>>
      %310 = tpu.memref_squeeze %309 : memref<1x!tpu.dma_semaphore, #tpu.memory_space<semaphore_mem>> -> memref<!tpu.dma_semaphore, #tpu.memory_space<semaphore_mem>>
      tpu.wait_dma2 semaphore(%310 : memref<!tpu.dma_semaphore, #tpu.memory_space<semaphore_mem>>) src(%arg4 : memref<128x512xbf16, #tpu.memory_space<any>>) dst(%arg13 : memref<128x512xbf16, #tpu.memory_space<vmem>>)
    } else {
    }
    %c0 = arith.constant 0 : index
    %c0_1 = arith.constant 0 : index
    %c0_2 = arith.constant 0 : index
    %3 = vector.load %arg2[%c0, %c0_1, %c0_2] : memref<8x8x128xbf16, #tpu.memory_space<vmem>>, vector<8x8x128xbf16>
    %4 = vector.shape_cast %3 : vector<8x8x128xbf16> to vector<64x128xbf16>
    %c0_3 = arith.constant 0 : index
    %c0_4 = arith.constant 0 : index
    %5 = vector.load %arg12[%c0_3, %c0_4] : memref<128x512xbf16, #tpu.memory_space<vmem>>, vector<128x512xbf16>
    %cst = arith.constant dense<0.000000e+00> : vector<64x512xf32>
    %6 = tpu.matmul %4, %5, %cst {dimension_numbers = #tpu.dot_dimension_numbers<[1], [0], [0], [1], [0, 0, 1, 1], [], []>} : vector<64x128xbf16>, vector<128x512xbf16>, vector<64x512xf32> -> vector<64x512xf32>
    %c0_5 = arith.constant 0 : index
    %c0_6 = arith.constant 0 : index
    %7 = vector.load %arg5[%c0_5, %c0_6] : memref<1x512xf32, #tpu.memory_space<vmem>>, vector<1x512xf32>
    %8 = vector.broadcast %7 : vector<1x512xf32> to vector<64x512xf32>
    %9 = arith.addf %6, %8 : vector<64x512xf32>
    %10 = vector.shape_cast %9 : vector<64x512xf32> to vector<8x8x512xf32>
    %c0_7 = arith.constant 0 : index
    %c0_8 = arith.constant 0 : index
    %c0_9 = arith.constant 0 : index
    %11 = vector.load %arg11[%c0_7, %c0_8, %c0_9] : memref<8x8x512xf32, #tpu.memory_space<vmem>>, vector<8x8x512xf32>
    tpu.vector_store %arg11[%c0_7, %c0_8, %c0_9], %10 {strides = array<i32>} : memref<8x8x512xf32, #tpu.memory_space<vmem>>, vector<8x8x512xf32>,
    %c0_10 = arith.constant 0 : index
    %c0_11 = arith.constant 0 : index
    %12 = vector.load %arg9[%c0_10, %c0_11] : memref<8x128xf32, #tpu.memory_space<vmem>>, vector<8x128xf32>
    %c0_12 = arith.constant 0 : index
    %c0_13 = arith.constant 0 : index
    %13 = vector.load %arg10[%c0_12, %c0_13] : memref<8x128xf32, #tpu.memory_space<vmem>>, vector<8x128xf32>
    %c0_14 = arith.constant 0 : index
    %c0_15 = arith.constant 0 : index
    %c0_16 = arith.constant 0 : index
    %14 = vector.load %arg11[%c0_14, %c0_15, %c0_16] : memref<8x8x512xf32, #tpu.memory_space<vmem>>, vector<1x8x512xf32>
    %15 = vector.shape_cast %14 : vector<1x8x512xf32> to vector<8x512xf32>
    %16 = arith.truncf %12 : vector<8x128xf32> to vector<8x128xbf16>
    %c0_17 = arith.constant 0 : index
    %c0_18 = arith.constant 0 : index
    %17 = vector.load %arg13[%c0_17, %c0_18] : memref<128x512xbf16, #tpu.memory_space<vmem>>, vector<128x512xbf16>
    %cst_19 = arith.constant dense<0.000000e+00> : vector<8x512xf32>
    %18 = tpu.matmul %16, %17, %cst_19 {dimension_numbers = #tpu.dot_dimension_numbers<[1], [0], [0], [1], [0, 0, 1, 1], [], []>} : vector<8x128xbf16>, vector<128x512xbf16>, vector<8x512xf32> -> vector<8x512xf32>
    %19 = arith.addf %15, %18 : vector<8x512xf32>
    %20 = vector.extract_strided_slice %19 {offsets = [0, 0], sizes = [8, 128], strides = [1, 1]} : vector<8x512xf32> to vector<8x128xf32>
    %21 = arith.negf %20 : vector<8x128xf32>
    %22 = math.exp %21 : vector<8x128xf32>
    %cst_20 = arith.constant 1.000000e+00 : f32
    %23 = vector.broadcast %cst_20 : f32 to vector<8x128xf32>
    %24 = arith.addf %23, %22 : vector<8x128xf32>
    %25 = arith.divf %23, %24 : vector<8x128xf32>
    %26 = vector.extract_strided_slice %19 {offsets = [0, 128], sizes = [8, 128], strides = [1, 1]} : vector<8x512xf32> to vector<8x128xf32>
    %27 = arith.negf %26 : vector<8x128xf32>
    %28 = math.exp %27 : vector<8x128xf32>
    %cst_21 = arith.constant 1.000000e+00 : f32
    %29 = vector.broadcast %cst_21 : f32 to vector<8x128xf32>
    %30 = arith.addf %29, %28 : vector<8x128xf32>
    %31 = arith.divf %29, %30 : vector<8x128xf32>
    %32 = vector.extract_strided_slice %19 {offsets = [0, 256], sizes = [8, 128], strides = [1, 1]} : vector<8x512xf32> to vector<8x128xf32>
    %33 = math.tanh %32 : vector<8x128xf32>
    %34 = vector.extract_strided_slice %19 {offsets = [0, 384], sizes = [8, 128], strides = [1, 1]} : vector<8x512xf32> to vector<8x128xf32>
    %35 = arith.negf %34 : vector<8x128xf32>
    %36 = math.exp %35 : vector<8x128xf32>
    %cst_22 = arith.constant 1.000000e+00 : f32
    %37 = vector.broadcast %cst_22 : f32 to vector<8x128xf32>
    %38 = arith.addf %37, %36 : vector<8x128xf32>
    %39 = arith.divf %37, %38 : vector<8x128xf32>
    %40 = arith.mulf %31, %13 : vector<8x128xf32>
    %41 = arith.mulf %25, %33 : vector<8x128xf32>
    %42 = arith.addf %40, %41 : vector<8x128xf32>
    %43 = math.tanh %42 : vector<8x128xf32>
    %44 = arith.mulf %39, %43 : vector<8x128xf32>
    %45 = arith.truncf %44 : vector<8x128xf32> to vector<8x128xbf16>
    %c0_23 = arith.constant 0 : index
    %c0_24 = arith.constant 0 : index
    %c0_25 = arith.constant 0 : index
    %46 = vector.load %arg6[%c0_23, %c0_24, %c0_25] : memref<8x8x128xbf16, #tpu.memory_space<vmem>>, vector<1x8x128xbf16>
    %47 = vector.shape_cast %46 : vector<1x8x128xbf16> to vector<8x128xbf16>
    %48 = vector.shape_cast %45 : vector<8x128xbf16> to vector<1x8x128xbf16>
    tpu.vector_store %arg6[%c0_23, %c0_24, %c0_25], %48 {strides = array<i32>} : memref<8x8x128xbf16, #tpu.memory_space<vmem>>, vector<1x8x128xbf16>,
    %c1 = arith.constant 1 : index
    %c0_26 = arith.constant 0 : index
    %c0_27 = arith.constant 0 : index
    %49 = vector.load %arg11[%c1, %c0_26, %c0_27] : memref<8x8x512xf32, #tpu.memory_space<vmem>>, vector<1x8x512xf32>
    %50 = vector.shape_cast %49 : vector<1x8x512xf32> to vector<8x512xf32>
    %51 = arith.truncf %44 : vector<8x128xf32> to vector<8x128xbf16>
    %c0_28 = arith.constant 0 : index
    %c0_29 = arith.constant 0 : index
    %52 = vector.load %arg13[%c0_28, %c0_29] : memref<128x512xbf16, #tpu.memory_space<vmem>>, vector<128x512xbf16>
    %cst_30 = arith.constant dense<0.000000e+00> : vector<8x512xf32>
    %53 = tpu.matmul %51, %52, %cst_30 {dimension_numbers = #tpu.dot_dimension_numbers<[1], [0], [0], [1], [0, 0, 1, 1], [], []>} : vector<8x128xbf16>, vector<128x512xbf16>, vector<8x512xf32> -> vector<8x512xf32>
    %54 = arith.addf %50, %53 : vector<8x512xf32>
    %55 = vector.extract_strided_slice %54 {offsets = [0, 0], sizes = [8, 128], strides = [1, 1]} : vector<8x512xf32> to vector<8x128xf32>
    %56 = arith.negf %55 : vector<8x128xf32>
    %57 = math.exp %56 : vector<8x128xf32>
    %cst_31 = arith.constant 1.000000e+00 : f32
    %58 = vector.broadcast %cst_31 : f32 to vector<8x128xf32>
    %59 = arith.addf %58, %57 : vector<8x128xf32>
    %60 = arith.divf %58, %59 : vector<8x128xf32>
    %61 = vector.extract_strided_slice %54 {offsets = [0, 128], sizes = [8, 128], strides = [1, 1]} : vector<8x512xf32> to vector<8x128xf32>
    %62 = arith.negf %61 : vector<8x128xf32>
    %63 = math.exp %62 : vector<8x128xf32>
    %cst_32 = arith.constant 1.000000e+00 : f32
    %64 = vector.broadcast %cst_32 : f32 to vector<8x128xf32>
    %65 = arith.addf %64, %63 : vector<8x128xf32>
    %66 = arith.divf %64, %65 : vector<8x128xf32>
    %67 = vector.extract_strided_slice %54 {offsets = [0, 256], sizes = [8, 128], strides = [1, 1]} : vector<8x512xf32> to vector<8x128xf32>
    %68 = math.tanh %67 : vector<8x128xf32>
    %69 = vector.extract_strided_slice %54 {offsets = [0, 384], sizes = [8, 128], strides = [1, 1]} : vector<8x512xf32> to vector<8x128xf32>
    %70 = arith.negf %69 : vector<8x128xf32>
    %71 = math.exp %70 : vector<8x128xf32>
    %cst_33 = arith.constant 1.000000e+00 : f32
    %72 = vector.broadcast %cst_33 : f32 to vector<8x128xf32>
    %73 = arith.addf %72, %71 : vector<8x128xf32>
    %74 = arith.divf %72, %73 : vector<8x128xf32>
    %75 = arith.mulf %66, %42 : vector<8x128xf32>
    %76 = arith.mulf %60, %68 : vector<8x128xf32>
    %77 = arith.addf %75, %76 : vector<8x128xf32>
    %78 = math.tanh %77 : vector<8x128xf32>
    %79 = arith.mulf %74, %78 : vector<8x128xf32>
    %80 = arith.truncf %79 : vector<8x128xf32> to vector<8x128xbf16>
    %c1_34 = arith.constant 1 : index
    %c0_35 = arith.constant 0 : index
    %c0_36 = arith.constant 0 : index
    %81 = vector.load %arg6[%c1_34, %c0_35, %c0_36] : memref<8x8x128xbf16, #tpu.memory_space<vmem>>, vector<1x8x128xbf16>
    %82 = vector.shape_cast %81 : vector<1x8x128xbf16> to vector<8x128xbf16>
    %83 = vector.shape_cast %80 : vector<8x128xbf16> to vector<1x8x128xbf16>
    tpu.vector_store %arg6[%c1_34, %c0_35, %c0_36], %83 {strides = array<i32>} : memref<8x8x128xbf16, #tpu.memory_space<vmem>>, vector<1x8x128xbf16>,
    %c2 = arith.constant 2 : index
    %c0_37 = arith.constant 0 : index
    %c0_38 = arith.constant 0 : index
    %84 = vector.load %arg11[%c2, %c0_37, %c0_38] : memref<8x8x512xf32, #tpu.memory_space<vmem>>, vector<1x8x512xf32>
    %85 = vector.shape_cast %84 : vector<1x8x512xf32> to vector<8x512xf32>
    %86 = arith.truncf %79 : vector<8x128xf32> to vector<8x128xbf16>
    %c0_39 = arith.constant 0 : index
    %c0_40 = arith.constant 0 : index
    %87 = vector.load %arg13[%c0_39, %c0_40] : memref<128x512xbf16, #tpu.memory_space<vmem>>, vector<128x512xbf16>
    %cst_41 = arith.constant dense<0.000000e+00> : vector<8x512xf32>
    %88 = tpu.matmul %86, %87, %cst_41 {dimension_numbers = #tpu.dot_dimension_numbers<[1], [0], [0], [1], [0, 0, 1, 1], [], []>} : vector<8x128xbf16>, vector<128x512xbf16>, vector<8x512xf32> -> vector<8x512xf32>
    %89 = arith.addf %85, %88 : vector<8x512xf32>
    %90 = vector.extract_strided_slice %89 {offsets = [0, 0], sizes = [8, 128], strides = [1, 1]} : vector<8x512xf32> to vector<8x128xf32>
    %91 = arith.negf %90 : vector<8x128xf32>
    %92 = math.exp %91 : vector<8x128xf32>
    %cst_42 = arith.constant 1.000000e+00 : f32
    %93 = vector.broadcast %cst_42 : f32 to vector<8x128xf32>
    %94 = arith.addf %93, %92 : vector<8x128xf32>
    %95 = arith.divf %93, %94 : vector<8x128xf32>
    %96 = vector.extract_strided_slice %89 {offsets = [0, 128], sizes = [8, 128], strides = [1, 1]} : vector<8x512xf32> to vector<8x128xf32>
    %97 = arith.negf %96 : vector<8x128xf32>
    %98 = math.exp %97 : vector<8x128xf32>
    %cst_43 = arith.constant 1.000000e+00 : f32
    %99 = vector.broadcast %cst_43 : f32 to vector<8x128xf32>
    %100 = arith.addf %99, %98 : vector<8x128xf32>
    %101 = arith.divf %99, %100 : vector<8x128xf32>
    %102 = vector.extract_strided_slice %89 {offsets = [0, 256], sizes = [8, 128], strides = [1, 1]} : vector<8x512xf32> to vector<8x128xf32>
    %103 = math.tanh %102 : vector<8x128xf32>
    %104 = vector.extract_strided_slice %89 {offsets = [0, 384], sizes = [8, 128], strides = [1, 1]} : vector<8x512xf32> to vector<8x128xf32>
    %105 = arith.negf %104 : vector<8x128xf32>
    %106 = math.exp %105 : vector<8x128xf32>
    %cst_44 = arith.constant 1.000000e+00 : f32
    %107 = vector.broadcast %cst_44 : f32 to vector<8x128xf32>
    %108 = arith.addf %107, %106 : vector<8x128xf32>
    %109 = arith.divf %107, %108 : vector<8x128xf32>
    %110 = arith.mulf %101, %77 : vector<8x128xf32>
    %111 = arith.mulf %95, %103 : vector<8x128xf32>
    %112 = arith.addf %110, %111 : vector<8x128xf32>
    %113 = math.tanh %112 : vector<8x128xf32>
    %114 = arith.mulf %109, %113 : vector<8x128xf32>
    %115 = arith.truncf %114 : vector<8x128xf32> to vector<8x128xbf16>
    %c2_45 = arith.constant 2 : index
    %c0_46 = arith.constant 0 : index
    %c0_47 = arith.constant 0 : index
    %116 = vector.load %arg6[%c2_45, %c0_46, %c0_47] : memref<8x8x128xbf16, #tpu.memory_space<vmem>>, vector<1x8x128xbf16>
    %117 = vector.shape_cast %116 : vector<1x8x128xbf16> to vector<8x128xbf16>
    %118 = vector.shape_cast %115 : vector<8x128xbf16> to vector<1x8x128xbf16>
    tpu.vector_store %arg6[%c2_45, %c0_46, %c0_47], %118 {strides = array<i32>} : memref<8x8x128xbf16, #tpu.memory_space<vmem>>, vector<1x8x128xbf16>,
    %c3 = arith.constant 3 : index
    %c0_48 = arith.constant 0 : index
    %c0_49 = arith.constant 0 : index
    %119 = vector.load %arg11[%c3, %c0_48, %c0_49] : memref<8x8x512xf32, #tpu.memory_space<vmem>>, vector<1x8x512xf32>
    %120 = vector.shape_cast %119 : vector<1x8x512xf32> to vector<8x512xf32>
    %121 = arith.truncf %114 : vector<8x128xf32> to vector<8x128xbf16>
    %c0_50 = arith.constant 0 : index
    %c0_51 = arith.constant 0 : index
    %122 = vector.load %arg13[%c0_50, %c0_51] : memref<128x512xbf16, #tpu.memory_space<vmem>>, vector<128x512xbf16>
    %cst_52 = arith.constant dense<0.000000e+00> : vector<8x512xf32>
    %123 = tpu.matmul %121, %122, %cst_52 {dimension_numbers = #tpu.dot_dimension_numbers<[1], [0], [0], [1], [0, 0, 1, 1], [], []>} : vector<8x128xbf16>, vector<128x512xbf16>, vector<8x512xf32> -> vector<8x512xf32>
    %124 = arith.addf %120, %123 : vector<8x512xf32>
    %125 = vector.extract_strided_slice %124 {offsets = [0, 0], sizes = [8, 128], strides = [1, 1]} : vector<8x512xf32> to vector<8x128xf32>
    %126 = arith.negf %125 : vector<8x128xf32>
    %127 = math.exp %126 : vector<8x128xf32>
    %cst_53 = arith.constant 1.000000e+00 : f32
    %128 = vector.broadcast %cst_53 : f32 to vector<8x128xf32>
    %129 = arith.addf %128, %127 : vector<8x128xf32>
    %130 = arith.divf %128, %129 : vector<8x128xf32>
    %131 = vector.extract_strided_slice %124 {offsets = [0, 128], sizes = [8, 128], strides = [1, 1]} : vector<8x512xf32> to vector<8x128xf32>
    %132 = arith.negf %131 : vector<8x128xf32>
    %133 = math.exp %132 : vector<8x128xf32>
    %cst_54 = arith.constant 1.000000e+00 : f32
    %134 = vector.broadcast %cst_54 : f32 to vector<8x128xf32>
    %135 = arith.addf %134, %133 : vector<8x128xf32>
    %136 = arith.divf %134, %135 : vector<8x128xf32>
    %137 = vector.extract_strided_slice %124 {offsets = [0, 256], sizes = [8, 128], strides = [1, 1]} : vector<8x512xf32> to vector<8x128xf32>
    %138 = math.tanh %137 : vector<8x128xf32>
    %139 = vector.extract_strided_slice %124 {offsets = [0, 384], sizes = [8, 128], strides = [1, 1]} : vector<8x512xf32> to vector<8x128xf32>
    %140 = arith.negf %139 : vector<8x128xf32>
    %141 = math.exp %140 : vector<8x128xf32>
    %cst_55 = arith.constant 1.000000e+00 : f32
    %142 = vector.broadcast %cst_55 : f32 to vector<8x128xf32>
    %143 = arith.addf %142, %141 : vector<8x128xf32>
    %144 = arith.divf %142, %143 : vector<8x128xf32>
    %145 = arith.mulf %136, %112 : vector<8x128xf32>
    %146 = arith.mulf %130, %138 : vector<8x128xf32>
    %147 = arith.addf %145, %146 : vector<8x128xf32>
    %148 = math.tanh %147 : vector<8x128xf32>
    %149 = arith.mulf %144, %148 : vector<8x128xf32>
    %150 = arith.truncf %149 : vector<8x128xf32> to vector<8x128xbf16>
    %c3_56 = arith.constant 3 : index
    %c0_57 = arith.constant 0 : index
    %c0_58 = arith.constant 0 : index
    %151 = vector.load %arg6[%c3_56, %c0_57, %c0_58] : memref<8x8x128xbf16, #tpu.memory_space<vmem>>, vector<1x8x128xbf16>
    %152 = vector.shape_cast %151 : vector<1x8x128xbf16> to vector<8x128xbf16>
    %153 = vector.shape_cast %150 : vector<8x128xbf16> to vector<1x8x128xbf16>
    tpu.vector_store %arg6[%c3_56, %c0_57, %c0_58], %153 {strides = array<i32>} : memref<8x8x128xbf16, #tpu.memory_space<vmem>>, vector<1x8x128xbf16>,
    %c4 = arith.constant 4 : index
    %c0_59 = arith.constant 0 : index
    %c0_60 = arith.constant 0 : index
    %154 = vector.load %arg11[%c4, %c0_59, %c0_60] : memref<8x8x512xf32, #tpu.memory_space<vmem>>, vector<1x8x512xf32>
    %155 = vector.shape_cast %154 : vector<1x8x512xf32> to vector<8x512xf32>
    %156 = arith.truncf %149 : vector<8x128xf32> to vector<8x128xbf16>
    %c0_61 = arith.constant 0 : index
    %c0_62 = arith.constant 0 : index
    %157 = vector.load %arg13[%c0_61, %c0_62] : memref<128x512xbf16, #tpu.memory_space<vmem>>, vector<128x512xbf16>
    %cst_63 = arith.constant dense<0.000000e+00> : vector<8x512xf32>
    %158 = tpu.matmul %156, %157, %cst_63 {dimension_numbers = #tpu.dot_dimension_numbers<[1], [0], [0], [1], [0, 0, 1, 1], [], []>} : vector<8x128xbf16>, vector<128x512xbf16>, vector<8x512xf32> -> vector<8x512xf32>
    %159 = arith.addf %155, %158 : vector<8x512xf32>
    %160 = vector.extract_strided_slice %159 {offsets = [0, 0], sizes = [8, 128], strides = [1, 1]} : vector<8x512xf32> to vector<8x128xf32>
    %161 = arith.negf %160 : vector<8x128xf32>
    %162 = math.exp %161 : vector<8x128xf32>
    %cst_64 = arith.constant 1.000000e+00 : f32
    %163 = vector.broadcast %cst_64 : f32 to vector<8x128xf32>
    %164 = arith.addf %163, %162 : vector<8x128xf32>
    %165 = arith.divf %163, %164 : vector<8x128xf32>
    %166 = vector.extract_strided_slice %159 {offsets = [0, 128], sizes = [8, 128], strides = [1, 1]} : vector<8x512xf32> to vector<8x128xf32>
    %167 = arith.negf %166 : vector<8x128xf32>
    %168 = math.exp %167 : vector<8x128xf32>
    %cst_65 = arith.constant 1.000000e+00 : f32
    %169 = vector.broadcast %cst_65 : f32 to vector<8x128xf32>
    %170 = arith.addf %169, %168 : vector<8x128xf32>
    %171 = arith.divf %169, %170 : vector<8x128xf32>
    %172 = vector.extract_strided_slice %159 {offsets = [0, 256], sizes = [8, 128], strides = [1, 1]} : vector<8x512xf32> to vector<8x128xf32>
    %173 = math.tanh %172 : vector<8x128xf32>
    %174 = vector.extract_strided_slice %159 {offsets = [0, 384], sizes = [8, 128], strides = [1, 1]} : vector<8x512xf32> to vector<8x128xf32>
    %175 = arith.negf %174 : vector<8x128xf32>
    %176 = math.exp %175 : vector<8x128xf32>
    %cst_66 = arith.constant 1.000000e+00 : f32
    %177 = vector.broadcast %cst_66 : f32 to vector<8x128xf32>
    %178 = arith.addf %177, %176 : vector<8x128xf32>
    %179 = arith.divf %177, %178 : vector<8x128xf32>
    %180 = arith.mulf %171, %147 : vector<8x128xf32>
    %181 = arith.mulf %165, %173 : vector<8x128xf32>
    %182 = arith.addf %180, %181 : vector<8x128xf32>
    %183 = math.tanh %182 : vector<8x128xf32>
    %184 = arith.mulf %179, %183 : vector<8x128xf32>
    %185 = arith.truncf %184 : vector<8x128xf32> to vector<8x128xbf16>
    %c4_67 = arith.constant 4 : index
    %c0_68 = arith.constant 0 : index
    %c0_69 = arith.constant 0 : index
    %186 = vector.load %arg6[%c4_67, %c0_68, %c0_69] : memref<8x8x128xbf16, #tpu.memory_space<vmem>>, vector<1x8x128xbf16>
    %187 = vector.shape_cast %186 : vector<1x8x128xbf16> to vector<8x128xbf16>
    %188 = vector.shape_cast %185 : vector<8x128xbf16> to vector<1x8x128xbf16>
    tpu.vector_store %arg6[%c4_67, %c0_68, %c0_69], %188 {strides = array<i32>} : memref<8x8x128xbf16, #tpu.memory_space<vmem>>, vector<1x8x128xbf16>,
    %c5 = arith.constant 5 : index
    %c0_70 = arith.constant 0 : index
    %c0_71 = arith.constant 0 : index
    %189 = vector.load %arg11[%c5, %c0_70, %c0_71] : memref<8x8x512xf32, #tpu.memory_space<vmem>>, vector<1x8x512xf32>
    %190 = vector.shape_cast %189 : vector<1x8x512xf32> to vector<8x512xf32>
    %191 = arith.truncf %184 : vector<8x128xf32> to vector<8x128xbf16>
    %c0_72 = arith.constant 0 : index
    %c0_73 = arith.constant 0 : index
    %192 = vector.load %arg13[%c0_72, %c0_73] : memref<128x512xbf16, #tpu.memory_space<vmem>>, vector<128x512xbf16>
    %cst_74 = arith.constant dense<0.000000e+00> : vector<8x512xf32>
    %193 = tpu.matmul %191, %192, %cst_74 {dimension_numbers = #tpu.dot_dimension_numbers<[1], [0], [0], [1], [0, 0, 1, 1], [], []>} : vector<8x128xbf16>, vector<128x512xbf16>, vector<8x512xf32> -> vector<8x512xf32>
    %194 = arith.addf %190, %193 : vector<8x512xf32>
    %195 = vector.extract_strided_slice %194 {offsets = [0, 0], sizes = [8, 128], strides = [1, 1]} : vector<8x512xf32> to vector<8x128xf32>
    %196 = arith.negf %195 : vector<8x128xf32>
    %197 = math.exp %196 : vector<8x128xf32>
    %cst_75 = arith.constant 1.000000e+00 : f32
    %198 = vector.broadcast %cst_75 : f32 to vector<8x128xf32>
    %199 = arith.addf %198, %197 : vector<8x128xf32>
    %200 = arith.divf %198, %199 : vector<8x128xf32>
    %201 = vector.extract_strided_slice %194 {offsets = [0, 128], sizes = [8, 128], strides = [1, 1]} : vector<8x512xf32> to vector<8x128xf32>
    %202 = arith.negf %201 : vector<8x128xf32>
    %203 = math.exp %202 : vector<8x128xf32>
    %cst_76 = arith.constant 1.000000e+00 : f32
    %204 = vector.broadcast %cst_76 : f32 to vector<8x128xf32>
    %205 = arith.addf %204, %203 : vector<8x128xf32>
    %206 = arith.divf %204, %205 : vector<8x128xf32>
    %207 = vector.extract_strided_slice %194 {offsets = [0, 256], sizes = [8, 128], strides = [1, 1]} : vector<8x512xf32> to vector<8x128xf32>
    %208 = math.tanh %207 : vector<8x128xf32>
    %209 = vector.extract_strided_slice %194 {offsets = [0, 384], sizes = [8, 128], strides = [1, 1]} : vector<8x512xf32> to vector<8x128xf32>
    %210 = arith.negf %209 : vector<8x128xf32>
    %211 = math.exp %210 : vector<8x128xf32>
    %cst_77 = arith.constant 1.000000e+00 : f32
    %212 = vector.broadcast %cst_77 : f32 to vector<8x128xf32>
    %213 = arith.addf %212, %211 : vector<8x128xf32>
    %214 = arith.divf %212, %213 : vector<8x128xf32>
    %215 = arith.mulf %206, %182 : vector<8x128xf32>
    %216 = arith.mulf %200, %208 : vector<8x128xf32>
    %217 = arith.addf %215, %216 : vector<8x128xf32>
    %218 = math.tanh %217 : vector<8x128xf32>
    %219 = arith.mulf %214, %218 : vector<8x128xf32>
    %220 = arith.truncf %219 : vector<8x128xf32> to vector<8x128xbf16>
    %c5_78 = arith.constant 5 : index
    %c0_79 = arith.constant 0 : index
    %c0_80 = arith.constant 0 : index
    %221 = vector.load %arg6[%c5_78, %c0_79, %c0_80] : memref<8x8x128xbf16, #tpu.memory_space<vmem>>, vector<1x8x128xbf16>
    %222 = vector.shape_cast %221 : vector<1x8x128xbf16> to vector<8x128xbf16>
    %223 = vector.shape_cast %220 : vector<8x128xbf16> to vector<1x8x128xbf16>
    tpu.vector_store %arg6[%c5_78, %c0_79, %c0_80], %223 {strides = array<i32>} : memref<8x8x128xbf16, #tpu.memory_space<vmem>>, vector<1x8x128xbf16>,
    %c6 = arith.constant 6 : index
    %c0_81 = arith.constant 0 : index
    %c0_82 = arith.constant 0 : index
    %224 = vector.load %arg11[%c6, %c0_81, %c0_82] : memref<8x8x512xf32, #tpu.memory_space<vmem>>, vector<1x8x512xf32>
    %225 = vector.shape_cast %224 : vector<1x8x512xf32> to vector<8x512xf32>
    %226 = arith.truncf %219 : vector<8x128xf32> to vector<8x128xbf16>
    %c0_83 = arith.constant 0 : index
    %c0_84 = arith.constant 0 : index
    %227 = vector.load %arg13[%c0_83, %c0_84] : memref<128x512xbf16, #tpu.memory_space<vmem>>, vector<128x512xbf16>
    %cst_85 = arith.constant dense<0.000000e+00> : vector<8x512xf32>
    %228 = tpu.matmul %226, %227, %cst_85 {dimension_numbers = #tpu.dot_dimension_numbers<[1], [0], [0], [1], [0, 0, 1, 1], [], []>} : vector<8x128xbf16>, vector<128x512xbf16>, vector<8x512xf32> -> vector<8x512xf32>
    %229 = arith.addf %225, %228 : vector<8x512xf32>
    %230 = vector.extract_strided_slice %229 {offsets = [0, 0], sizes = [8, 128], strides = [1, 1]} : vector<8x512xf32> to vector<8x128xf32>
    %231 = arith.negf %230 : vector<8x128xf32>
    %232 = math.exp %231 : vector<8x128xf32>
    %cst_86 = arith.constant 1.000000e+00 : f32
    %233 = vector.broadcast %cst_86 : f32 to vector<8x128xf32>
    %234 = arith.addf %233, %232 : vector<8x128xf32>
    %235 = arith.divf %233, %234 : vector<8x128xf32>
    %236 = vector.extract_strided_slice %229 {offsets = [0, 128], sizes = [8, 128], strides = [1, 1]} : vector<8x512xf32> to vector<8x128xf32>
    %237 = arith.negf %236 : vector<8x128xf32>
    %238 = math.exp %237 : vector<8x128xf32>
    %cst_87 = arith.constant 1.000000e+00 : f32
    %239 = vector.broadcast %cst_87 : f32 to vector<8x128xf32>
    %240 = arith.addf %239, %238 : vector<8x128xf32>
    %241 = arith.divf %239, %240 : vector<8x128xf32>
    %242 = vector.extract_strided_slice %229 {offsets = [0, 256], sizes = [8, 128], strides = [1, 1]} : vector<8x512xf32> to vector<8x128xf32>
    %243 = math.tanh %242 : vector<8x128xf32>
    %244 = vector.extract_strided_slice %229 {offsets = [0, 384], sizes = [8, 128], strides = [1, 1]} : vector<8x512xf32> to vector<8x128xf32>
    %245 = arith.negf %244 : vector<8x128xf32>
    %246 = math.exp %245 : vector<8x128xf32>
    %cst_88 = arith.constant 1.000000e+00 : f32
    %247 = vector.broadcast %cst_88 : f32 to vector<8x128xf32>
    %248 = arith.addf %247, %246 : vector<8x128xf32>
    %249 = arith.divf %247, %248 : vector<8x128xf32>
    %250 = arith.mulf %241, %217 : vector<8x128xf32>
    %251 = arith.mulf %235, %243 : vector<8x128xf32>
    %252 = arith.addf %250, %251 : vector<8x128xf32>
    %253 = math.tanh %252 : vector<8x128xf32>
    %254 = arith.mulf %249, %253 : vector<8x128xf32>
    %255 = arith.truncf %254 : vector<8x128xf32> to vector<8x128xbf16>
    %c6_89 = arith.constant 6 : index
    %c0_90 = arith.constant 0 : index
    %c0_91 = arith.constant 0 : index
    %256 = vector.load %arg6[%c6_89, %c0_90, %c0_91] : memref<8x8x128xbf16, #tpu.memory_space<vmem>>, vector<1x8x128xbf16>
    %257 = vector.shape_cast %256 : vector<1x8x128xbf16> to vector<8x128xbf16>
    %258 = vector.shape_cast %255 : vector<8x128xbf16> to vector<1x8x128xbf16>
    tpu.vector_store %arg6[%c6_89, %c0_90, %c0_91], %258 {strides = array<i32>} : memref<8x8x128xbf16, #tpu.memory_space<vmem>>, vector<1x8x128xbf16>,
    %c7 = arith.constant 7 : index
    %c0_92 = arith.constant 0 : index
    %c0_93 = arith.constant 0 : index
    %259 = vector.load %arg11[%c7, %c0_92, %c0_93] : memref<8x8x512xf32, #tpu.memory_space<vmem>>, vector<1x8x512xf32>
    %260 = vector.shape_cast %259 : vector<1x8x512xf32> to vector<8x512xf32>
    %261 = arith.truncf %254 : vector<8x128xf32> to vector<8x128xbf16>
    %c0_94 = arith.constant 0 : index
    %c0_95 = arith.constant 0 : index
    %262 = vector.load %arg13[%c0_94, %c0_95] : memref<128x512xbf16, #tpu.memory_space<vmem>>, vector<128x512xbf16>
    %cst_96 = arith.constant dense<0.000000e+00> : vector<8x512xf32>
    %263 = tpu.matmul %261, %262, %cst_96 {dimension_numbers = #tpu.dot_dimension_numbers<[1], [0], [0], [1], [0, 0, 1, 1], [], []>} : vector<8x128xbf16>, vector<128x512xbf16>, vector<8x512xf32> -> vector<8x512xf32>
    %264 = arith.addf %260, %263 : vector<8x512xf32>
    %265 = vector.extract_strided_slice %264 {offsets = [0, 0], sizes = [8, 128], strides = [1, 1]} : vector<8x512xf32> to vector<8x128xf32>
    %266 = arith.negf %265 : vector<8x128xf32>
    %267 = math.exp %266 : vector<8x128xf32>
    %cst_97 = arith.constant 1.000000e+00 : f32
    %268 = vector.broadcast %cst_97 : f32 to vector<8x128xf32>
    %269 = arith.addf %268, %267 : vector<8x128xf32>
    %270 = arith.divf %268, %269 : vector<8x128xf32>
    %271 = vector.extract_strided_slice %264 {offsets = [0, 128], sizes = [8, 128], strides = [1, 1]} : vector<8x512xf32> to vector<8x128xf32>
    %272 = arith.negf %271 : vector<8x128xf32>
    %273 = math.exp %272 : vector<8x128xf32>
    %cst_98 = arith.constant 1.000000e+00 : f32
    %274 = vector.broadcast %cst_98 : f32 to vector<8x128xf32>
    %275 = arith.addf %274, %273 : vector<8x128xf32>
    %276 = arith.divf %274, %275 : vector<8x128xf32>
    %277 = vector.extract_strided_slice %264 {offsets = [0, 256], sizes = [8, 128], strides = [1, 1]} : vector<8x512xf32> to vector<8x128xf32>
    %278 = math.tanh %277 : vector<8x128xf32>
    %279 = vector.extract_strided_slice %264 {offsets = [0, 384], sizes = [8, 128], strides = [1, 1]} : vector<8x512xf32> to vector<8x128xf32>
    %280 = arith.negf %279 : vector<8x128xf32>
    %281 = math.exp %280 : vector<8x128xf32>
    %cst_99 = arith.constant 1.000000e+00 : f32
    %282 = vector.broadcast %cst_99 : f32 to vector<8x128xf32>
    %283 = arith.addf %282, %281 : vector<8x128xf32>
    %284 = arith.divf %282, %283 : vector<8x128xf32>
    %285 = arith.mulf %276, %252 : vector<8x128xf32>
    %286 = arith.mulf %270, %278 : vector<8x128xf32>
    %287 = arith.addf %285, %286 : vector<8x128xf32>
    %288 = math.tanh %287 : vector<8x128xf32>
    %289 = arith.mulf %284, %288 : vector<8x128xf32>
    %290 = arith.truncf %289 : vector<8x128xf32> to vector<8x128xbf16>
    %c7_100 = arith.constant 7 : index
    %c0_101 = arith.constant 0 : index
    %c0_102 = arith.constant 0 : index
    %291 = vector.load %arg6[%c7_100, %c0_101, %c0_102] : memref<8x8x128xbf16, #tpu.memory_space<vmem>>, vector<1x8x128xbf16>
    %292 = vector.shape_cast %291 : vector<1x8x128xbf16> to vector<8x128xbf16>
    %293 = vector.shape_cast %290 : vector<8x128xbf16> to vector<1x8x128xbf16>
    tpu.vector_store %arg6[%c7_100, %c0_101, %c0_102], %293 {strides = array<i32>} : memref<8x8x128xbf16, #tpu.memory_space<vmem>>, vector<1x8x128xbf16>,
    %c0_103 = arith.constant 0 : index
    %c0_104 = arith.constant 0 : index
    %294 = vector.load %arg9[%c0_103, %c0_104] : memref<8x128xf32, #tpu.memory_space<vmem>>, vector<8x128xf32>
    tpu.vector_store %arg9[%c0_103, %c0_104], %289 {strides = array<i32>} : memref<8x128xf32, #tpu.memory_space<vmem>>, vector<8x128xf32>,
    %c0_105 = arith.constant 0 : index
    %c0_106 = arith.constant 0 : index
    %295 = vector.load %arg10[%c0_105, %c0_106] : memref<8x128xf32, #tpu.memory_space<vmem>>, vector<8x128xf32>
    tpu.vector_store %arg10[%c0_105, %c0_106], %287 {strides = array<i32>} : memref<8x128xf32, #tpu.memory_space<vmem>>, vector<8x128xf32>,
    %c0_i32_107 = arith.constant 0 : i32
    %296 = arith.cmpi eq, %arg1, %c0_i32_107 : i32
    %297 = arith.extui %296 : i1 to i32
    %c0_i32_108 = arith.constant 0 : i32
    %298 = arith.cmpi ne, %297, %c0_i32_108 : i32
    scf.if %298 {
      %c0_109 = arith.constant 0 : index
      %c0_110 = arith.constant 0 : index
      %299 = vector.load %arg7[%c0_109, %c0_110] : memref<8x128xf32, #tpu.memory_space<vmem>>, vector<8x128xf32>
      tpu.vector_store %arg7[%c0_109, %c0_110], %289 {strides = array<i32>} : memref<8x128xf32, #tpu.memory_space<vmem>>, vector<8x128xf32>,
      %c0_111 = arith.constant 0 : index
      %c0_112 = arith.constant 0 : index
      %300 = vector.load %arg8[%c0_111, %c0_112] : memref<8x128xf32, #tpu.memory_space<vmem>>, vector<8x128xf32>
      tpu.vector_store %arg8[%c0_111, %c0_112], %287 {strides = array<i32>} : memref<8x128xf32, #tpu.memory_space<vmem>>, vector<8x128xf32>,
    } else {
    }
    return
  }
  func.func @transform_0(%arg0: i32, %arg1: i32) -> (i32, i32, i32) {
    %c0_i32 = arith.constant 0 : i32
    %c0_i32_0 = arith.constant 0 : i32
    return %arg1, %arg0, %c0_i32 : i32, i32, i32
  }
  func.func @transform_3(%arg0: i32, %arg1: i32) -> (i32, i32) {
    %c0_i32 = arith.constant 0 : i32
    %c0_i32_0 = arith.constant 0 : i32
    %c0_i32_1 = arith.constant 0 : i32
    return %c0_i32, %c0_i32_0 : i32, i32
  }
  func.func @transform_4(%arg0: i32, %arg1: i32) -> (i32, i32, i32) {
    %c0_i32 = arith.constant 0 : i32
    %c0_i32_0 = arith.constant 0 : i32
    return %arg1, %arg0, %c0_i32 : i32, i32, i32
  }
  func.func @transform_5(%arg0: i32, %arg1: i32) -> (i32, i32) {
    %c0_i32 = arith.constant 0 : i32
    %c0_i32_0 = arith.constant 0 : i32
    return %arg0, %c0_i32 : i32, i32
  }
  func.func @transform_6(%arg0: i32, %arg1: i32) -> (i32, i32) {
    %c0_i32 = arith.constant 0 : i32
    %c0_i32_0 = arith.constant 0 : i32
    return %arg0, %c0_i32 : i32, i32
  }
}

</mosaic_0001>

<llo_original>
// kernel: encoder_forward.2
$region0: #{encoder_forward.2}
  #allocation0 [shape = 'u32[]', space=smem, size = 0x4, offset = 0x4, fixed_abs, tag = 'smem constant byte address 0x4 - core index']
  #allocation1 [shape = 'u32[144,128]{1,0:T(1,128)}', space=vmem, size = 0x12000, scoped, tag = 'internal scratch']
  #allocation2 [shape = 'f32[8,128]{1,0:T(8,128)}', space=vmem, size = 0x1000, scoped, tag = 'scratch operand']
  #allocation3 [shape = 'f32[8,128]{1,0:T(8,128)}', space=vmem, size = 0x1000, scoped, tag = 'scratch operand']
  #allocation4 [shape = 'f32[8,8,512]{2,1,0:T(8,128)}', space=vmem, size = 0x20000, scoped, tag = 'scratch operand']
  #allocation5 [shape = 'bf16[4,512]{1,0:T(4,128)(2,1)}', space=vmem, size = 0x1000, scoped, tag = 'scratch operand']
  #allocation6 [shape = 'bf16[128,512]{1,0:T(16,128)(2,1)}', space=vmem, size = 0x20000, scoped, tag = 'scratch operand']
  #allocation7 [shape = 's32[2]{0}', space=sflag, size = 0x8, scoped, tag = 'scratch operand']
  #allocation8 [shape = 's32[]', space=sflag, size = 0x4, offset = 0, fixed_abs, tag = 'sflag constant byte address 0x0 - dummy sync flag']
  #allocation9 [shape = 's32[]', space=sflag, size = 0x4, offset = 0, fixed_abs, tag = 'sflag constant byte address 0x0 - dummy sync flag']
  %s0 = inlined_call_operand.vmem [shape: bf16[8,8,4], index: 0, kind: input, shape index: {}]
  %s1 = inlined_call_operand.vmem [shape: bf16[4,512], index: 1, kind: input, shape index: {}]
  %s2 = inlined_call_operand.vmem [shape: bf16[128,512], index: 2, kind: input, shape index: {}]
  %s3 = inlined_call_operand.vmem [shape: f32[1,512], index: 3, kind: input, shape index: {}]
  %s4 = inlined_call_operand.vmem [shape: bf16[8,8,128], index: 4, kind: output, shape index: {0}]
  %s5 = inlined_call_operand.vmem [shape: f32[8,128], index: 5, kind: output, shape index: {1}]
  %s6 = inlined_call_operand.vmem [shape: f32[8,128], index: 6, kind: output, shape index: {2}]
  %7 = xla_tuple %s4, %s5, %s6
  %s8 = sld [smem:[#allocation0]]
  $region113: #{encoder_forward.2} parent=0
    _
  %s10 = ssub.s32 1, %s8
  %s11 = scalar_select 0, %s10, %s8
  // Predicated region
  $region2: #{encoder_forward.2} parent=0 // pred_check
    _
  $region3: #{encoder_forward.2} parent=0 // pred_check_branch
    %13 = sbr.rel (0) target = $region5
  $region4: #{encoder_forward.2} parent=0 // pred_region
    _
  $region5: #{encoder_forward.2} parent=0 // pred_fallthru
    _
  // Predicated region
  $region6: #{encoder_forward.2} parent=0 // pred_check
    _
  $region7: #{encoder_forward.2} parent=0 // pred_check_branch
    %15 = sbr.rel (0) target = $region9
  $region8: #{encoder_forward.2} parent=0 // pred_region
    _
  $region9: #{encoder_forward.2} parent=0 // pred_fallthru
    _
  %p17 = scmp.eq.s32.totalorder 0, 0
  // Predicated region
  $region10: #{encoder_forward.2} parent=0 // pred_check
    %p18 = pneg %p17
  $region11: #{encoder_forward.2} parent=0 // pred_check_branch
    %20 = sbr.rel (%p18) target = $region13
  $region12: #{encoder_forward.2} parent=0 // pred_region
    %p22 = scmp.lt.u32.totalorder 8, 8
    %p23 = pneg %p22
    // Predicated region
    $region14: #{encoder_forward.2} parent=12 // pred_check
      _
    $region15: #{encoder_forward.2} parent=12 // pred_check_branch
      %25 = sbr.rel (%p22) target = $region17
    $region16: #{encoder_forward.2} parent=12 // pred_region
      %s40 = sand.u32 8, 7
      %p41 = scmp.eq.s32.totalorder %s40, 0
      // Predicated region
      $region29: #{encoder_forward.2} parent=16 // pred_check
        %p42 = pneg %p41
      $region30: #{encoder_forward.2} parent=16 // pred_check_branch
        %44 = sbr.rel (%p42) target = $region32
      $region31: #{encoder_forward.2} parent=16 // pred_region
        loop: start=0, step=1, limit=1
        $region33: #{encoder_forward.2} parent=31 // loop_pre_header
          _
        $region34: #{encoder_forward.2} parent=31 // loop_header
          %s46 = sphi 0, %s50
          %p47 = scmp.ge.s32.totalorder %s46, 1
          %s51 = sphi %s1, %s1
          %s52 = sphi [#allocation5], [#allocation5]
        $region35: #{encoder_forward.2} parent=31 // loop_header_branch
          %49 = sbr.rel (%p47) target = $region39
        $region36: #{encoder_forward.2} parent=31 // loop_body
          %v53 = vld [vmem:[%s51] sm:$0xff]
          %54 = vst [vmem:[%s52] sm:$0xff] %v53
        $region37: #{encoder_forward.2} parent=31 // loop_footer
          %s50 = sadd.s32 1, %s46
        $region38: #{encoder_forward.2} parent=31 // loop_footer_branch
          %45 = sbr.rel target = $region34
        $region39: #{encoder_forward.2} parent=31 // loop_exit
          _
      $region32: #{encoder_forward.2} parent=16 // pred_fallthru
        _
      %p55 = pneg %p41
      // Predicated region
      $region40: #{encoder_forward.2} parent=16 // pred_check
        _
      $region41: #{encoder_forward.2} parent=16 // pred_check_branch
        %57 = sbr.rel (%p41) target = $region43
      $region42: #{encoder_forward.2} parent=16 // pred_region
        %s58 = sand.u32 8, 7
      $region43: #{encoder_forward.2} parent=16 // pred_fallthru
        _
    $region17: #{encoder_forward.2} parent=12 // pred_fallthru
      _
    // Predicated region
    $region18: #{encoder_forward.2} parent=12 // pred_check
      %p26 = pneg %p22
    $region19: #{encoder_forward.2} parent=12 // pred_check_branch
      %28 = sbr.rel (%p26) target = $region21
    $region20: #{encoder_forward.2} parent=12 // pred_region
      %s29 = sshllo.u32 0, 8
      loop: start=0, step=1, limit=1
      $region22: #{encoder_forward.2} parent=20 // loop_pre_header
        _
      $region23: #{encoder_forward.2} parent=20 // loop_header
        %s31 = sphi 0, %s35
        %p32 = scmp.ge.s32.totalorder %s31, 1
        %s36 = sphi %s1, %s1
        %s37 = sphi [#allocation5], [#allocation5]
      $region24: #{encoder_forward.2} parent=20 // loop_header_branch
        %34 = sbr.rel (%p32) target = $region28
      $region25: #{encoder_forward.2} parent=20 // loop_body
        %v38 = vld [vmem:[%s36] sm:%s29]
        %39 = vst [vmem:[%s37] sm:%s29] %v38
      $region26: #{encoder_forward.2} parent=20 // loop_footer
        %s35 = sadd.s32 1, %s31
      $region27: #{encoder_forward.2} parent=20 // loop_footer_branch
        %30 = sbr.rel target = $region23
      $region28: #{encoder_forward.2} parent=20 // loop_exit
        _
    $region21: #{encoder_forward.2} parent=12 // pred_fallthru
      _
    // Predicated region
    $region44: #{encoder_forward.2} parent=12 // pred_check
      _
    $region45: #{encoder_forward.2} parent=12 // pred_check_branch
      %61 = sbr.rel (0) target = $region47
    $region46: #{encoder_forward.2} parent=12 // pred_region
      %62 = vsyncadd [#allocation7], 128
    $region47: #{encoder_forward.2} parent=12 // pred_fallthru
      _
    %s63 = scalar_lea.sflag [#allocation7], 1
    %p65 = scmp.lt.u32.totalorder 4, 8
    %p66 = pneg %p65
    // Predicated region
    $region48: #{encoder_forward.2} parent=12 // pred_check
      _
    $region49: #{encoder_forward.2} parent=12 // pred_check_branch
      %68 = sbr.rel (%p65) target = $region51
    $region50: #{encoder_forward.2} parent=12 // pred_region
      %s209 = sand.u32 4, 7
      %p210 = scmp.eq.s32.totalorder %s209, 0
      %p211 = pneg %p210
      // Predicated region
      $region63: #{encoder_forward.2} parent=50 // pred_check
        _
      $region64: #{encoder_forward.2} parent=50 // pred_check_branch
        %213 = sbr.rel (%p210) target = $region66
      $region65: #{encoder_forward.2} parent=50 // pred_region
        %s214 = sand.u32 4, 7
        %s215 = ssub.s32 4, %s214
        %s216 = scalar_lea.vmem %s2, %s215
        %s217 = ssub.s32 4, %s214
        %s218 = scalar_lea.vmem [#allocation6], %s217
        loop: start=0, step=1, limit=1
        $region67: #{encoder_forward.2} parent=65 // loop_pre_header
          _
        $region68: #{encoder_forward.2} parent=65 // loop_header
          %s220 = sphi 0, %s224
          %p221 = scmp.ge.s32.totalorder %s220, 1
          %s225 = sphi %s2, %s2
          %s226 = sphi [#allocation6], [#allocation6]
        $region69: #{encoder_forward.2} parent=65 // loop_header_branch
          %223 = sbr.rel (%p221) target = $region73
        $region70: #{encoder_forward.2} parent=65 // loop_body
          _
        $region71: #{encoder_forward.2} parent=65 // loop_footer
          %s224 = sadd.s32 1, %s220
        $region72: #{encoder_forward.2} parent=65 // loop_footer_branch
          %219 = sbr.rel target = $region68
        $region73: #{encoder_forward.2} parent=65 // loop_exit
          _
        %s227 = sshllo.u32 0, %s214
        loop: start=0, step=1, limit=1
        $region74: #{encoder_forward.2} parent=65 // loop_pre_header
          _
        $region75: #{encoder_forward.2} parent=65 // loop_header
          %s229 = sphi 0, %s233
          %p230 = scmp.ge.s32.totalorder %s229, 1
          %s234 = sphi %s216, %s216
          %s235 = sphi %s218, %s218
        $region76: #{encoder_forward.2} parent=65 // loop_header_branch
          %232 = sbr.rel (%p230) target = $region80
        $region77: #{encoder_forward.2} parent=65 // loop_body
          %v236 = vld [vmem:[%s234] sm:%s227]
          %237 = vst [vmem:[%s235] sm:%s227] %v236
          %v238 = vld [vmem:[%s234 + $0x10] sm:%s227]
          %239 = vst [vmem:[%s235 + $0x4] sm:%s227] %v238
          %v240 = vld [vmem:[%s234 + $0x4] sm:%s227]
          %241 = vst [vmem:[%s235 + $0x8] sm:%s227] %v240
          %v242 = vld [vmem:[%s234 + $0x14] sm:%s227]
          %243 = vst [vmem:[%s235 + $0xc] sm:%s227] %v242
          %v244 = vld [vmem:[%s234 + $0x8] sm:%s227]
          %245 = vst [vmem:[%s235 + $0x10] sm:%s227] %v244
          %v246 = vld [vmem:[%s234 + $0x18] sm:%s227]
          %247 = vst [vmem:[%s235 + $0x14] sm:%s227] %v246
          %v248 = vld [vmem:[%s234 + $0xc] sm:%s227]
          %249 = vst [vmem:[%s235 + $0x18] sm:%s227] %v248
          %v250 = vld [vmem:[%s234 + $0x1c] sm:%s227]
          %251 = vst [vmem:[%s235 + $0x1c] sm:%s227] %v250
          %v252 = vld [vmem:[%s234 + $0x20] sm:%s227]
          %253 = vst [vmem:[%s235 + $0x20] sm:%s227] %v252
          %v254 = vld [vmem:[%s234 + $0x30] sm:%s227]
          %255 = vst [vmem:[%s235 + $0x24] sm:%s227] %v254
          %v256 = vld [vmem:[%s234 + $0x24] sm:%s227]
          %257 = vst [vmem:[%s235 + $0x28] sm:%s227] %v256
          %v258 = vld [vmem:[%s234 + $0x34] sm:%s227]
          %259 = vst [vmem:[%s235 + $0x2c] sm:%s227] %v258
          %v260 = vld [vmem:[%s234 + $0x28] sm:%s227]
          %261 = vst [vmem:[%s235 + $0x30] sm:%s227] %v260
          %v262 = vld [vmem:[%s234 + $0x38] sm:%s227]
          %263 = vst [vmem:[%s235 + $0x34] sm:%s227] %v262
          %v264 = vld [vmem:[%s234 + $0x2c] sm:%s227]
          %265 = vst [vmem:[%s235 + $0x38] sm:%s227] %v264
          %v266 = vld [vmem:[%s234 + $0x3c] sm:%s227]
          %267 = vst [vmem:[%s235 + $0x3c] sm:%s227] %v266
          %v268 = vld [vmem:[%s234 + $0x40] sm:%s227]
          %269 = vst [vmem:[%s235 + $0x40] sm:%s227] %v268
          %v270 = vld [vmem:[%s234 + $0x50] sm:%s227]
          %271 = vst [vmem:[%s235 + $0x44] sm:%s227] %v270
          %v272 = vld [vmem:[%s234 + $0x44] sm:%s227]
          %273 = vst [vmem:[%s235 + $0x48] sm:%s227] %v272
          %v274 = vld [vmem:[%s234 + $0x54] sm:%s227]
          %275 = vst [vmem:[%s235 + $0x4c] sm:%s227] %v274
          %v276 = vld [vmem:[%s234 + $0x48] sm:%s227]
          %277 = vst [vmem:[%s235 + $0x50] sm:%s227] %v276
          %v278 = vld [vmem:[%s234 + $0x58] sm:%s227]
          %279 = vst [vmem:[%s235 + $0x54] sm:%s227] %v278
          %v280 = vld [vmem:[%s234 + $0x4c] sm:%s227]
          %281 = vst [vmem:[%s235 + $0x58] sm:%s227] %v280
          %v282 = vld [vmem:[%s234 + $0x5c] sm:%s227]
          %283 = vst [vmem:[%s235 + $0x5c] sm:%s227] %v282
          %v284 = vld [vmem:[%s234 + $0x60] sm:%s227]
          %285 = vst [vmem:[%s235 + $0x60] sm:%s227] %v284
          %v286 = vld [vmem:[%s234 + $0x70] sm:%s227]
          %287 = vst [vmem:[%s235 + $0x64] sm:%s227] %v286
          %v288 = vld [vmem:[%s234 + $0x64] sm:%s227]
          %289 = vst [vmem:[%s235 + $0x68] sm:%s227] %v288
          %v290 = vld [vmem:[%s234 + $0x74] sm:%s227]
          %291 = vst [vmem:[%s235 + $0x6c] sm:%s227] %v290
          %v292 = vld [vmem:[%s234 + $0x68] sm:%s227]
          %293 = vst [vmem:[%s235 + $0x70] sm:%s227] %v292
          %v294 = vld [vmem:[%s234 + $0x78] sm:%s227]
          %295 = vst [vmem:[%s235 + $0x74] sm:%s227] %v294
          %v296 = vld [vmem:[%s234 + $0x6c] sm:%s227]
          %297 = vst [vmem:[%s235 + $0x78] sm:%s227] %v296
          %v298 = vld [vmem:[%s234 + $0x7c] sm:%s227]
          %299 = vst [vmem:[%s235 + $0x7c] sm:%s227] %v298
          %v300 = vld [vmem:[%s234 + $0x80] sm:%s227]
          %301 = vst [vmem:[%s235 + $0x80] sm:%s227] %v300
          %v302 = vld [vmem:[%s234 + $0x90] sm:%s227]
          %303 = vst [vmem:[%s235 + $0x84] sm:%s227] %v302
          %v304 = vld [vmem:[%s234 + $0x84] sm:%s227]
          %305 = vst [vmem:[%s235 + $0x88] sm:%s227] %v304
          %v306 = vld [vmem:[%s234 + $0x94] sm:%s227]
          %307 = vst [vmem:[%s235 + $0x8c] sm:%s227] %v306
          %v308 = vld [vmem:[%s234 + $0x88] sm:%s227]
          %309 = vst [vmem:[%s235 + $0x90] sm:%s227] %v308
          %v310 = vld [vmem:[%s234 + $0x98] sm:%s227]
          %311 = vst [vmem:[%s235 + $0x94] sm:%s227] %v310
          %v312 = vld [vmem:[%s234 + $0x8c] sm:%s227]
          %313 = vst [vmem:[%s235 + $0x98] sm:%s227] %v312
          %v314 = vld [vmem:[%s234 + $0x9c] sm:%s227]
          %315 = vst [vmem:[%s235 + $0x9c] sm:%s227] %v314
          %v316 = vld [vmem:[%s234 + $0xa0] sm:%s227]
          %317 = vst [vmem:[%s235 + $0xa0] sm:%s227] %v316
          %v318 = vld [vmem:[%s234 + $0xb0] sm:%s227]
          %319 = vst [vmem:[%s235 + $0xa4] sm:%s227] %v318
          %v320 = vld [vmem:[%s234 + $0xa4] sm:%s227]
          %321 = vst [vmem:[%s235 + $0xa8] sm:%s227] %v320
          %v322 = vld [vmem:[%s234 + $0xb4] sm:%s227]
          %323 = vst [vmem:[%s235 + $0xac] sm:%s227] %v322
          %v324 = vld [vmem:[%s234 + $0xa8] sm:%s227]
          %325 = vst [vmem:[%s235 + $0xb0] sm:%s227] %v324
          %v326 = vld [vmem:[%s234 + $0xb8] sm:%s227]
          %327 = vst [vmem:[%s235 + $0xb4] sm:%s227] %v326
          %v328 = vld [vmem:[%s234 + $0xac] sm:%s227]
          %329 = vst [vmem:[%s235 + $0xb8] sm:%s227] %v328
          %v330 = vld [vmem:[%s234 + $0xbc] sm:%s227]
          %331 = vst [vmem:[%s235 + $0xbc] sm:%s227] %v330
          %v332 = vld [vmem:[%s234 + $0xc0] sm:%s227]
          %333 = vst [vmem:[%s235 + $0xc0] sm:%s227] %v332
          %v334 = vld [vmem:[%s234 + $0xd0] sm:%s227]
          %335 = vst [vmem:[%s235 + $0xc4] sm:%s227] %v334
          %v336 = vld [vmem:[%s234 + $0xc4] sm:%s227]
          %337 = vst [vmem:[%s235 + $0xc8] sm:%s227] %v336
          %v338 = vld [vmem:[%s234 + $0xd4] sm:%s227]
          %339 = vst [vmem:[%s235 + $0xcc] sm:%s227] %v338
          %v340 = vld [vmem:[%s234 + $0xc8] sm:%s227]
          %341 = vst [vmem:[%s235 + $0xd0] sm:%s227] %v340
          %v342 = vld [vmem:[%s234 + $0xd8] sm:%s227]
          %343 = vst [vmem:[%s235 + $0xd4] sm:%s227] %v342
          %v344 = vld [vmem:[%s234 + $0xcc] sm:%s227]
          %345 = vst [vmem:[%s235 + $0xd8] sm:%s227] %v344
          %v346 = vld [vmem:[%s234 + $0xdc] sm:%s227]
          %347 = vst [vmem:[%s235 + $0xdc] sm:%s227] %v346
          %v348 = vld [vmem:[%s234 + $0xe0] sm:%s227]
          %349 = vst [vmem:[%s235 + $0xe0] sm:%s227] %v348
          %v350 = vld [vmem:[%s234 + $0xf0] sm:%s227]
          %351 = vst [vmem:[%s235 + $0xe4] sm:%s227] %v350
          %v352 = vld [vmem:[%s234 + $0xe4] sm:%s227]
          %353 = vst [vmem:[%s235 + $0xe8] sm:%s227] %v352
          %v354 = vld [vmem:[%s234 + $0xf4] sm:%s227]
          %355 = vst [vmem:[%s235 + $0xec] sm:%s227] %v354
          %v356 = vld [vmem:[%s234 + $0xe8] sm:%s227]
          %357 = vst [vmem:[%s235 + $0xf0] sm:%s227] %v356
          %v358 = vld [vmem:[%s234 + $0xf8] sm:%s227]
          %359 = vst [vmem:[%s235 + $0xf4] sm:%s227] %v358
          %v360 = vld [vmem:[%s234 + $0xec] sm:%s227]
          %361 = vst [vmem:[%s235 + $0xf8] sm:%s227] %v360
          %v362 = vld [vmem:[%s234 + $0xfc] sm:%s227]
          %363 = vst [vmem:[%s235 + $0xfc] sm:%s227] %v362
        $region78: #{encoder_forward.2} parent=65 // loop_footer
          %s233 = sadd.s32 1, %s229
        $region79: #{encoder_forward.2} parent=65 // loop_footer_branch
          %228 = sbr.rel target = $region75
        $region80: #{encoder_forward.2} parent=65 // loop_exit
          _
      $region66: #{encoder_forward.2} parent=50 // pred_fallthru
        _
    $region51: #{encoder_forward.2} parent=12 // pred_fallthru
      _
    // Predicated region
    $region52: #{encoder_forward.2} parent=12 // pred_check
      %p69 = pneg %p65
    $region53: #{encoder_forward.2} parent=12 // pred_check_branch
      %71 = sbr.rel (%p69) target = $region55
    $region54: #{encoder_forward.2} parent=12 // pred_region
      %s72 = sshllo.u32 0, 4
      loop: start=0, step=1, limit=1
      $region56: #{encoder_forward.2} parent=54 // loop_pre_header
        _
      $region57: #{encoder_forward.2} parent=54 // loop_header
        %s74 = sphi 0, %s78
        %p75 = scmp.ge.s32.totalorder %s74, 1
        %s79 = sphi %s2, %s2
        %s80 = sphi [#allocation6], [#allocation6]
      $region58: #{encoder_forward.2} parent=54 // loop_header_branch
        %77 = sbr.rel (%p75) target = $region62
      $region59: #{encoder_forward.2} parent=54 // loop_body
        %v81 = vld [vmem:[%s79] sm:%s72]
        %82 = vst [vmem:[%s80] sm:%s72] %v81
        %v83 = vld [vmem:[%s79 + $0x10] sm:%s72]
        %84 = vst [vmem:[%s80 + $0x4] sm:%s72] %v83
        %v85 = vld [vmem:[%s79 + $0x4] sm:%s72]
        %86 = vst [vmem:[%s80 + $0x8] sm:%s72] %v85
        %v87 = vld [vmem:[%s79 + $0x14] sm:%s72]
        %88 = vst [vmem:[%s80 + $0xc] sm:%s72] %v87
        %v89 = vld [vmem:[%s79 + $0x8] sm:%s72]
        %90 = vst [vmem:[%s80 + $0x10] sm:%s72] %v89
        %v91 = vld [vmem:[%s79 + $0x18] sm:%s72]
        %92 = vst [vmem:[%s80 + $0x14] sm:%s72] %v91
        %v93 = vld [vmem:[%s79 + $0xc] sm:%s72]
        %94 = vst [vmem:[%s80 + $0x18] sm:%s72] %v93
        %v95 = vld [vmem:[%s79 + $0x1c] sm:%s72]
        %96 = vst [vmem:[%s80 + $0x1c] sm:%s72] %v95
        %v97 = vld [vmem:[%s79 + $0x20] sm:%s72]
        %98 = vst [vmem:[%s80 + $0x20] sm:%s72] %v97
        %v99 = vld [vmem:[%s79 + $0x30] sm:%s72]
        %100 = vst [vmem:[%s80 + $0x24] sm:%s72] %v99
        %v101 = vld [vmem:[%s79 + $0x24] sm:%s72]
        %102 = vst [vmem:[%s80 + $0x28] sm:%s72] %v101
        %v103 = vld [vmem:[%s79 + $0x34] sm:%s72]
        %104 = vst [vmem:[%s80 + $0x2c] sm:%s72] %v103
        %v105 = vld [vmem:[%s79 + $0x28] sm:%s72]
        %106 = vst [vmem:[%s80 + $0x30] sm:%s72] %v105
        %v107 = vld [vmem:[%s79 + $0x38] sm:%s72]
        %108 = vst [vmem:[%s80 + $0x34] sm:%s72] %v107
        %v109 = vld [vmem:[%s79 + $0x2c] sm:%s72]
        %110 = vst [vmem:[%s80 + $0x38] sm:%s72] %v109
        %v111 = vld [vmem:[%s79 + $0x3c] sm:%s72]
        %112 = vst [vmem:[%s80 + $0x3c] sm:%s72] %v111
        %v113 = vld [vmem:[%s79 + $0x40] sm:%s72]
        %114 = vst [vmem:[%s80 + $0x40] sm:%s72] %v113
        %v115 = vld [vmem:[%s79 + $0x50] sm:%s72]
        %116 = vst [vmem:[%s80 + $0x44] sm:%s72] %v115
        %v117 = vld [vmem:[%s79 + $0x44] sm:%s72]
        %118 = vst [vmem:[%s80 + $0x48] sm:%s72] %v117
        %v119 = vld [vmem:[%s79 + $0x54] sm:%s72]
        %120 = vst [vmem:[%s80 + $0x4c] sm:%s72] %v119
        %v121 = vld [vmem:[%s79 + $0x48] sm:%s72]
        %122 = vst [vmem:[%s80 + $0x50] sm:%s72] %v121
        %v123 = vld [vmem:[%s79 + $0x58] sm:%s72]
        %124 = vst [vmem:[%s80 + $0x54] sm:%s72] %v123
        %v125 = vld [vmem:[%s79 + $0x4c] sm:%s72]
        %126 = vst [vmem:[%s80 + $0x58] sm:%s72] %v125
        %v127 = vld [vmem:[%s79 + $0x5c] sm:%s72]
        %128 = vst [vmem:[%s80 + $0x5c] sm:%s72] %v127
        %v129 = vld [vmem:[%s79 + $0x60] sm:%s72]
        %130 = vst [vmem:[%s80 + $0x60] sm:%s72] %v129
        %v131 = vld [vmem:[%s79 + $0x70] sm:%s72]
        %132 = vst [vmem:[%s80 + $0x64] sm:%s72] %v131
        %v133 = vld [vmem:[%s79 + $0x64] sm:%s72]
        %134 = vst [vmem:[%s80 + $0x68] sm:%s72] %v133
        %v135 = vld [vmem:[%s79 + $0x74] sm:%s72]
        %136 = vst [vmem:[%s80 + $0x6c] sm:%s72] %v135
        %v137 = vld [vmem:[%s79 + $0x68] sm:%s72]
        %138 = vst [vmem:[%s80 + $0x70] sm:%s72] %v137
        %v139 = vld [vmem:[%s79 + $0x78] sm:%s72]
        %140 = vst [vmem:[%s80 + $0x74] sm:%s72] %v139
        %v141 = vld [vmem:[%s79 + $0x6c] sm:%s72]
        %142 = vst [vmem:[%s80 + $0x78] sm:%s72] %v141
        %v143 = vld [vmem:[%s79 + $0x7c] sm:%s72]
        %144 = vst [vmem:[%s80 + $0x7c] sm:%s72] %v143
        %v145 = vld [vmem:[%s79 + $0x80] sm:%s72]
        %146 = vst [vmem:[%s80 + $0x80] sm:%s72] %v145
        %v147 = vld [vmem:[%s79 + $0x90] sm:%s72]
        %148 = vst [vmem:[%s80 + $0x84] sm:%s72] %v147
        %v149 = vld [vmem:[%s79 + $0x84] sm:%s72]
        %150 = vst [vmem:[%s80 + $0x88] sm:%s72] %v149
        %v151 = vld [vmem:[%s79 + $0x94] sm:%s72]
        %152 = vst [vmem:[%s80 + $0x8c] sm:%s72] %v151
        %v153 = vld [vmem:[%s79 + $0x88] sm:%s72]
        %154 = vst [vmem:[%s80 + $0x90] sm:%s72] %v153
        %v155 = vld [vmem:[%s79 + $0x98] sm:%s72]
        %156 = vst [vmem:[%s80 + $0x94] sm:%s72] %v155
        %v157 = vld [vmem:[%s79 + $0x8c] sm:%s72]
        %158 = vst [vmem:[%s80 + $0x98] sm:%s72] %v157
        %v159 = vld [vmem:[%s79 + $0x9c] sm:%s72]
        %160 = vst [vmem:[%s80 + $0x9c] sm:%s72] %v159
        %v161 = vld [vmem:[%s79 + $0xa0] sm:%s72]
        %162 = vst [vmem:[%s80 + $0xa0] sm:%s72] %v161
        %v163 = vld [vmem:[%s79 + $0xb0] sm:%s72]
        %164 = vst [vmem:[%s80 + $0xa4] sm:%s72] %v163
        %v165 = vld [vmem:[%s79 + $0xa4] sm:%s72]
        %166 = vst [vmem:[%s80 + $0xa8] sm:%s72] %v165
        %v167 = vld [vmem:[%s79 + $0xb4] sm:%s72]
        %168 = vst [vmem:[%s80 + $0xac] sm:%s72] %v167
        %v169 = vld [vmem:[%s79 + $0xa8] sm:%s72]
        %170 = vst [vmem:[%s80 + $0xb0] sm:%s72] %v169
        %v171 = vld [vmem:[%s79 + $0xb8] sm:%s72]
        %172 = vst [vmem:[%s80 + $0xb4] sm:%s72] %v171
        %v173 = vld [vmem:[%s79 + $0xac] sm:%s72]
        %174 = vst [vmem:[%s80 + $0xb8] sm:%s72] %v173
        %v175 = vld [vmem:[%s79 + $0xbc] sm:%s72]
        %176 = vst [vmem:[%s80 + $0xbc] sm:%s72] %v175
        %v177 = vld [vmem:[%s79 + $0xc0] sm:%s72]
        %178 = vst [vmem:[%s80 + $0xc0] sm:%s72] %v177
        %v179 = vld [vmem:[%s79 + $0xd0] sm:%s72]
        %180 = vst [vmem:[%s80 + $0xc4] sm:%s72] %v179
        %v181 = vld [vmem:[%s79 + $0xc4] sm:%s72]
        %182 = vst [vmem:[%s80 + $0xc8] sm:%s72] %v181
        %v183 = vld [vmem:[%s79 + $0xd4] sm:%s72]
        %184 = vst [vmem:[%s80 + $0xcc] sm:%s72] %v183
        %v185 = vld [vmem:[%s79 + $0xc8] sm:%s72]
        %186 = vst [vmem:[%s80 + $0xd0] sm:%s72] %v185
        %v187 = vld [vmem:[%s79 + $0xd8] sm:%s72]
        %188 = vst [vmem:[%s80 + $0xd4] sm:%s72] %v187
        %v189 = vld [vmem:[%s79 + $0xcc] sm:%s72]
        %190 = vst [vmem:[%s80 + $0xd8] sm:%s72] %v189
        %v191 = vld [vmem:[%s79 + $0xdc] sm:%s72]
        %192 = vst [vmem:[%s80 + $0xdc] sm:%s72] %v191
        %v193 = vld [vmem:[%s79 + $0xe0] sm:%s72]
        %194 = vst [vmem:[%s80 + $0xe0] sm:%s72] %v193
        %v195 = vld [vmem:[%s79 + $0xf0] sm:%s72]
        %196 = vst [vmem:[%s80 + $0xe4] sm:%s72] %v195
        %v197 = vld [vmem:[%s79 + $0xe4] sm:%s72]
        %198 = vst [vmem:[%s80 + $0xe8] sm:%s72] %v197
        %v199 = vld [vmem:[%s79 + $0xf4] sm:%s72]
        %200 = vst [vmem:[%s80 + $0xec] sm:%s72] %v199
        %v201 = vld [vmem:[%s79 + $0xe8] sm:%s72]
        %202 = vst [vmem:[%s80 + $0xf0] sm:%s72] %v201
        %v203 = vld [vmem:[%s79 + $0xf8] sm:%s72]
        %204 = vst [vmem:[%s80 + $0xf4] sm:%s72] %v203
        %v205 = vld [vmem:[%s79 + $0xec] sm:%s72]
        %206 = vst [vmem:[%s80 + $0xf8] sm:%s72] %v205
        %v207 = vld [vmem:[%s79 + $0xfc] sm:%s72]
        %208 = vst [vmem:[%s80 + $0xfc] sm:%s72] %v207
      $region60: #{encoder_forward.2} parent=54 // loop_footer
        %s78 = sadd.s32 1, %s74
      $region61: #{encoder_forward.2} parent=54 // loop_footer_branch
        %73 = sbr.rel target = $region57
      $region62: #{encoder_forward.2} parent=54 // loop_exit
        _
    $region55: #{encoder_forward.2} parent=12 // pred_fallthru
      _
    // Predicated region
    $region81: #{encoder_forward.2} parent=12 // pred_check
      _
    $region82: #{encoder_forward.2} parent=12 // pred_check_branch
      %366 = sbr.rel (0) target = $region84
    $region83: #{encoder_forward.2} parent=12 // pred_region
      %367 = vsyncadd %s63, 4096
    $region84: #{encoder_forward.2} parent=12 // pred_fallthru
      _
    %368 = vst [vmem:[#allocation2] sm:$0xff] 0.0
    %369 = vst [vmem:[#allocation3] sm:$0xff] 0.0
    %s370 = smul.u32 2, 1
    %s371 = smul.u32 %s370, 4
    %s372 = sshll.u32 %s371, 4
    %373 = dma.done [#allocation7], %s372
    %s374 = smul.u32 4, 16
    %s375 = smul.u32 %s374, 4
    %s376 = sshll.u32 %s375, 4
    %377 = dma.done %s63, %s376
  $region13: #{encoder_forward.2} parent=0 // pred_fallthru
    _
  %v378 = vld [vmem:[%s0] sm:$0xf]
  %v379 = vld [vmem:[%s0 + $0x4] sm:$0xf]
  %v380 = vld [vmem:[%s0 + $0x8] sm:$0xf]
  %v381 = vld [vmem:[%s0 + $0xc] sm:$0xf]
  %v382 = vld [vmem:[%s0 + $0x10] sm:$0xf]
  %v383 = vld [vmem:[%s0 + $0x14] sm:$0xf]
  %v384 = vld [vmem:[%s0 + $0x18] sm:$0xf]
  %v385 = vld [vmem:[%s0 + $0x1c] sm:$0xf]
  %v386 = vld [vmem:[#allocation5] sm:$0xff]
  %v387 = vld [vmem:[%s3] sm:$0xf]
  %v389 = vlaneseq
  %v390 = vshrl.u32 %v389, 7
  %v391 = vsub.s32 0, %v390
  %v392 = vrot.slane %v387, %v391
  %v393 = vlaneseq
  %v394 = vshrl.u32 %v393, 7
  %v395 = vsub.s32 1, %v394
  %v396 = vrot.slane %v387, %v395
  %v397 = vlaneseq
  %v398 = vshrl.u32 %v397, 7
  %v399 = vsub.s32 2, %v398
  %v400 = vrot.slane %v387, %v399
  %v401 = vlaneseq
  %v402 = vshrl.u32 %v401, 7
  %v403 = vsub.s32 3, %v402
  %v404 = vrot.slane %v387, %v403
  %v417 = vunpack.c.l.b16 %v378
  %v418 = vunpack.c.l.b16 %v379
  %v419 = vunpack.c.l.b16 %v380
  %v420 = vunpack.c.l.b16 %v381
  %v421 = vunpack.c.l.b16 %v382
  %v422 = vunpack.c.l.b16 %v383
  %v423 = vunpack.c.l.b16 %v384
  %v424 = vunpack.c.l.b16 %v385
  %v425 = vpack.c.b16 %v418, %v417
  %v426 = vpack.c.b16 %v420, %v419
  %v427 = vpack.c.b16 %v422, %v421
  %v428 = vpack.c.b16 %v424, %v423
  %v430 = vcombine.high %v386, %v386
  %v432 = vunpack.c.l.s4 1983009808
  %v433 = vunpack.c.0.s8 %v432
  %v434 = vlaneseq
  %v435 = vshrl.u32 %v434, 7
  %v436 = vsub.s32 %v433, %v435
  %v437 = vrot.slane %v386, %v436
  %v439 = vunpack.c.l.s4 1983009808
  %v440 = vunpack.c.0.s8 %v439
  %v441 = vlaneseq
  %v442 = vshrl.u32 %v441, 7
  %v443 = vsub.s32 %v440, %v442
  %v444 = vrot.slane %v430, %v443
  %v445 = vcombine.high %v437, %v437
  %v446 = vcombine.high %v444, %v444
  %vm447 = vcmask 31744
  %v449 = vsel %vm447, %v425, 0
  %v452 = vsel %vm447, %v426, 0
  %v455 = vsel %vm447, %v427, 0
  %v458 = vsel %vm447, %v428, 0
  %vm460 = vcmask 1041408
  %v462 = vsel %vm460, %v437, 0
  %v465 = vsel %vm460, %v445, 0
  %v468 = vsel %vm460, %v444, 0
  %v471 = vsel %vm460, %v446, 0
  %473 = vmatprep.subr.bf16.mxu0 %v465
  %474 = vmatpush1.bf16.msra.mxu0 %v462
  %475 = vmatprep.subr.bf16.mxu0 0
  %476 = vmatpush1.bf16.msra.mxu0 0
  %477 = vmatprep.subr.bf16.mxu0 0
  %478 = vmatpush1.bf16.msra.mxu0 0
  %479 = vmatprep.subr.bf16.mxu0 0
  %480 = vmatpush1.bf16.msra.mxu0 0
  %481 = vmatprep.subr.bf16.mxu0 0
  %482 = vmatpush1.bf16.msra.mxu0 0
  %483 = vmatprep.subr.bf16.mxu0 0
  %484 = vmatpush1.bf16.msra.mxu0 0
  %485 = vmatprep.subr.bf16.mxu0 0
  %486 = vmatpush1.bf16.msra.mxu0 0
  %487 = vmatprep.subr.bf16.mxu0 0
  %488 = vmatpush1.bf16.msra.mxu0 0
  %489 = vmatprep.subr.bf16.mxu0 0
  %490 = vmatpush1.bf16.msra.mxu0 0
  %491 = vmatprep.subr.bf16.mxu0 0
  %492 = vmatpush1.bf16.msra.mxu0 0
  %493 = vmatprep.subr.bf16.mxu0 0
  %494 = vmatpush1.bf16.msra.mxu0 0
  %495 = vmatprep.subr.bf16.mxu0 0
  %496 = vmatpush1.bf16.msra.mxu0 0
  %497 = vmatprep.subr.bf16.mxu0 0
  %498 = vmatpush1.bf16.msra.mxu0 0
  %499 = vmatprep.subr.bf16.mxu0 0
  %500 = vmatpush1.bf16.msra.mxu0 0
  %501 = vmatprep.subr.bf16.mxu0 0
  %502 = vmatpush1.bf16.msra.mxu0 0
  %503 = vmatprep.subr.bf16.mxu0 0
  %504 = vmatpush1.bf16.msra.mxu0 0
  %505 = vmatprep.mubr.bf16.mxu0 0
  %506 = vmatmul.mubr.bf16.gmra.mrb[0].mxu0 %v449
  %v507 = vpop.f32.mrb[0].mxu0
  %v508 = vadd.f32 %v392, %v507
  %v509 = vpop.f32.mrb[0].mxu0
  %v510 = vadd.f32 %v396, %v509
  %v511 = vpop.f32.mrb[0].mxu0
  %v512 = vadd.f32 %v392, %v511
  %v513 = vpop.f32.mrb[0].mxu0
  %v514 = vadd.f32 %v396, %v513
  %515 = vmatprep.mubr.bf16.mxu0 0
  %516 = vmatmul.mubr.bf16.gmra.mrb[0].mxu0 %v452
  %v517 = vpop.f32.mrb[0].mxu0
  %v518 = vadd.f32 %v392, %v517
  %v519 = vpop.f32.mrb[0].mxu0
  %v520 = vadd.f32 %v396, %v519
  %v521 = vpop.f32.mrb[0].mxu0
  %v522 = vadd.f32 %v392, %v521
  %v523 = vpop.f32.mrb[0].mxu0
  %v524 = vadd.f32 %v396, %v523
  %525 = vmatprep.mubr.bf16.mxu0 0
  %526 = vmatmul.mubr.bf16.gmra.mrb[0].mxu0 %v455
  %v527 = vpop.f32.mrb[0].mxu0
  %v528 = vadd.f32 %v392, %v527
  %v529 = vpop.f32.mrb[0].mxu0
  %v530 = vadd.f32 %v396, %v529
  %v531 = vpop.f32.mrb[0].mxu0
  %v532 = vadd.f32 %v392, %v531
  %v533 = vpop.f32.mrb[0].mxu0
  %v534 = vadd.f32 %v396, %v533
  %535 = vmatprep.mubr.bf16.mxu0 0
  %536 = vmatmul.mubr.bf16.gmra.mrb[0].mxu0 %v458
  %v537 = vpop.f32.mrb[0].mxu0
  %v538 = vadd.f32 %v392, %v537
  %v539 = vpop.f32.mrb[0].mxu0
  %v540 = vadd.f32 %v396, %v539
  %v541 = vpop.f32.mrb[0].mxu0
  %v542 = vadd.f32 %v392, %v541
  %v543 = vpop.f32.mrb[0].mxu0
  %v544 = vadd.f32 %v396, %v543
  %545 = vdwg.mxu0
  %546 = vmatprep.subr.bf16.mxu0 %v471
  %547 = vmatpush1.bf16.msra.mxu0 %v468
  %548 = vmatprep.subr.bf16.mxu0 0
  %549 = vmatpush1.bf16.msra.mxu0 0
  %550 = vmatprep.subr.bf16.mxu0 0
  %551 = vmatpush1.bf16.msra.mxu0 0
  %552 = vmatprep.subr.bf16.mxu0 0
  %553 = vmatpush1.bf16.msra.mxu0 0
  %554 = vmatprep.subr.bf16.mxu0 0
  %555 = vmatpush1.bf16.msra.mxu0 0
  %556 = vmatprep.subr.bf16.mxu0 0
  %557 = vmatpush1.bf16.msra.mxu0 0
  %558 = vmatprep.subr.bf16.mxu0 0
  %559 = vmatpush1.bf16.msra.mxu0 0
  %560 = vmatprep.subr.bf16.mxu0 0
  %561 = vmatpush1.bf16.msra.mxu0 0
  %562 = vmatprep.subr.bf16.mxu0 0
  %563 = vmatpush1.bf16.msra.mxu0 0
  %564 = vmatprep.subr.bf16.mxu0 0
  %565 = vmatpush1.bf16.msra.mxu0 0
  %566 = vmatprep.subr.bf16.mxu0 0
  %567 = vmatpush1.bf16.msra.mxu0 0
  %568 = vmatprep.subr.bf16.mxu0 0
  %569 = vmatpush1.bf16.msra.mxu0 0
  %570 = vmatprep.subr.bf16.mxu0 0
  %571 = vmatpush1.bf16.msra.mxu0 0
  %572 = vmatprep.subr.bf16.mxu0 0
  %573 = vmatpush1.bf16.msra.mxu0 0
  %574 = vmatprep.subr.bf16.mxu0 0
  %575 = vmatpush1.bf16.msra.mxu0 0
  %576 = vmatprep.subr.bf16.mxu0 0
  %577 = vmatpush1.bf16.msra.mxu0 0
  %578 = vmatprep.mubr.bf16.mxu0 0
  %579 = vmatmul.mubr.bf16.gmra.mrb[0].mxu0 %v449
  %v580 = vpop.f32.mrb[0].mxu0
  %v581 = vadd.f32 %v400, %v580
  %v582 = vpop.f32.mrb[0].mxu0
  %v583 = vadd.f32 %v404, %v582
  %v584 = vpop.f32.mrb[0].mxu0
  %v585 = vadd.f32 %v400, %v584
  %v586 = vpop.f32.mrb[0].mxu0
  %v587 = vadd.f32 %v404, %v586
  %588 = vmatprep.mubr.bf16.mxu0 0
  %589 = vmatmul.mubr.bf16.gmra.mrb[0].mxu0 %v452
  %v590 = vpop.f32.mrb[0].mxu0
  %v591 = vadd.f32 %v400, %v590
  %v592 = vpop.f32.mrb[0].mxu0
  %v593 = vadd.f32 %v404, %v592
  %v594 = vpop.f32.mrb[0].mxu0
  %v595 = vadd.f32 %v400, %v594
  %v596 = vpop.f32.mrb[0].mxu0
  %v597 = vadd.f32 %v404, %v596
  %598 = vmatprep.mubr.bf16.mxu0 0
  %599 = vmatmul.mubr.bf16.gmra.mrb[0].mxu0 %v455
  %v600 = vpop.f32.mrb[0].mxu0
  %v601 = vadd.f32 %v400, %v600
  %v602 = vpop.f32.mrb[0].mxu0
  %v603 = vadd.f32 %v404, %v602
  %v604 = vpop.f32.mrb[0].mxu0
  %v605 = vadd.f32 %v400, %v604
  %v606 = vpop.f32.mrb[0].mxu0
  %v607 = vadd.f32 %v404, %v606
  %608 = vmatprep.mubr.bf16.mxu0 0
  %609 = vmatmul.mubr.bf16.gmra.mrb[0].mxu0 %v458
  %v610 = vpop.f32.mrb[0].mxu0
  %v611 = vadd.f32 %v400, %v610
  %v612 = vpop.f32.mrb[0].mxu0
  %v613 = vadd.f32 %v404, %v612
  %v614 = vpop.f32.mrb[0].mxu0
  %v615 = vadd.f32 %v400, %v614
  %v616 = vpop.f32.mrb[0].mxu0
  %v617 = vadd.f32 %v404, %v616
  %618 = vdwg.mxu0
  %619 = vst [vmem:[#allocation4] sm:$0xff] %v508
  %620 = vst [vmem:[#allocation4 + $0x8] sm:$0xff] %v510
  %621 = vst [vmem:[#allocation4 + $0x10] sm:$0xff] %v581
  %622 = vst [vmem:[#allocation4 + $0x18] sm:$0xff] %v583
  %623 = vst [vmem:[#allocation4 + $0x20] sm:$0xff] %v512
  %624 = vst [vmem:[#allocation4 + $0x28] sm:$0xff] %v514
  %625 = vst [vmem:[#allocation4 + $0x30] sm:$0xff] %v585
  %626 = vst [vmem:[#allocation4 + $0x38] sm:$0xff] %v587
  %627 = vst [vmem:[#allocation4 + $0x40] sm:$0xff] %v518
  %628 = vst [vmem:[#allocation4 + $0x48] sm:$0xff] %v520
  %629 = vst [vmem:[#allocation4 + $0x50] sm:$0xff] %v591
  %630 = vst [vmem:[#allocation4 + $0x58] sm:$0xff] %v593
  %631 = vst [vmem:[#allocation4 + $0x60] sm:$0xff] %v522
  %632 = vst [vmem:[#allocation4 + $0x68] sm:$0xff] %v524
  %633 = vst [vmem:[#allocation4 + $0x70] sm:$0xff] %v595
  %634 = vst [vmem:[#allocation4 + $0x78] sm:$0xff] %v597
  %635 = vst [vmem:[#allocation4 + $0x80] sm:$0xff] %v528
  %636 = vst [vmem:[#allocation4 + $0x88] sm:$0xff] %v530
  %637 = vst [vmem:[#allocation4 + $0x90] sm:$0xff] %v601
  %638 = vst [vmem:[#allocation4 + $0x98] sm:$0xff] %v603
  %639 = vst [vmem:[#allocation4 + $0xa0] sm:$0xff] %v532
  %640 = vst [vmem:[#allocation4 + $0xa8] sm:$0xff] %v534
  %641 = vst [vmem:[#allocation4 + $0xb0] sm:$0xff] %v605
  %642 = vst [vmem:[#allocation4 + $0xb8] sm:$0xff] %v607
  %643 = vst [vmem:[#allocation4 + $0xc0] sm:$0xff] %v538
  %644 = vst [vmem:[#allocation4 + $0xc8] sm:$0xff] %v540
  %645 = vst [vmem:[#allocation4 + $0xd0] sm:$0xff] %v611
  %646 = vst [vmem:[#allocation4 + $0xd8] sm:$0xff] %v613
  %647 = vst [vmem:[#allocation4 + $0xe0] sm:$0xff] %v542
  %648 = vst [vmem:[#allocation4 + $0xe8] sm:$0xff] %v544
  %649 = vst [vmem:[#allocation4 + $0xf0] sm:$0xff] %v615
  %650 = vst [vmem:[#allocation4 + $0xf8] sm:$0xff] %v617
  %v651 = vld [vmem:[#allocation2] sm:$0xff]
  %v652 = vld [vmem:[#allocation3] sm:$0xff]
  %v653 = vld [vmem:[#allocation4] sm:$0xff]
  %v654 = vld [vmem:[#allocation4 + $0x8] sm:$0xff]
  %v655 = vld [vmem:[#allocation4 + $0x10] sm:$0xff]
  %v656 = vld [vmem:[#allocation4 + $0x18] sm:$0xff]
  %v657 = vpack.c.bf16 %v651, %v651
  %v658 = vld [vmem:[#allocation6] sm:$0xff]
  %v659 = vld [vmem:[#allocation6 + $0x8] sm:$0xff]
  %v660 = vld [vmem:[#allocation6 + $0x10] sm:$0xff]
  %v661 = vld [vmem:[#allocation6 + $0x18] sm:$0xff]
  %v662 = vld [vmem:[#allocation6 + $0x20] sm:$0xff]
  %v663 = vld [vmem:[#allocation6 + $0x28] sm:$0xff]
  %v664 = vld [vmem:[#allocation6 + $0x30] sm:$0xff]
  %v665 = vld [vmem:[#allocation6 + $0x38] sm:$0xff]
  %v666 = vld [vmem:[#allocation6 + $0x40] sm:$0xff]
  %v667 = vld [vmem:[#allocation6 + $0x48] sm:$0xff]
  %v668 = vld [vmem:[#allocation6 + $0x50] sm:$0xff]
  %v669 = vld [vmem:[#allocation6 + $0x58] sm:$0xff]
  %v670 = vld [vmem:[#allocation6 + $0x60] sm:$0xff]
  %v671 = vld [vmem:[#allocation6 + $0x68] sm:$0xff]
  %v672 = vld [vmem:[#allocation6 + $0x70] sm:$0xff]
  %v673 = vld [vmem:[#allocation6 + $0x78] sm:$0xff]
  %v674 = vld [vmem:[#allocation6 + $0x80] sm:$0xff]
  %v675 = vld [vmem:[#allocation6 + $0x88] sm:$0xff]
  %v676 = vld [vmem:[#allocation6 + $0x90] sm:$0xff]
  %v677 = vld [vmem:[#allocation6 + $0x98] sm:$0xff]
  %v678 = vld [vmem:[#allocation6 + $0xa0] sm:$0xff]
  %v679 = vld [vmem:[#allocation6 + $0xa8] sm:$0xff]
  %v680 = vld [vmem:[#allocation6 + $0xb0] sm:$0xff]
  %v681 = vld [vmem:[#allocation6 + $0xb8] sm:$0xff]
  %v682 = vld [vmem:[#allocation6 + $0xc0] sm:$0xff]
  %v683 = vld [vmem:[#allocation6 + $0xc8] sm:$0xff]
  %v684 = vld [vmem:[#allocation6 + $0xd0] sm:$0xff]
  %v685 = vld [vmem:[#allocation6 + $0xd8] sm:$0xff]
  %v686 = vld [vmem:[#allocation6 + $0xe0] sm:$0xff]
  %v687 = vld [vmem:[#allocation6 + $0xe8] sm:$0xff]
  %v688 = vld [vmem:[#allocation6 + $0xf0] sm:$0xff]
  %v689 = vld [vmem:[#allocation6 + $0xf8] sm:$0xff]
  %690 = vmatprep.subr.bf16.mxu0 %v659
  %691 = vmatpush1.bf16.msra.mxu0 %v658
  %692 = vmatprep.subr.bf16.mxu0 %v663
  %693 = vmatpush1.bf16.msra.mxu0 %v662
  %694 = vmatprep.subr.bf16.mxu0 %v667
  %695 = vmatpush1.bf16.msra.mxu0 %v666
  %696 = vmatprep.subr.bf16.mxu0 %v671
  %697 = vmatpush1.bf16.msra.mxu0 %v670
  %698 = vmatprep.subr.bf16.mxu0 %v675
  %699 = vmatpush1.bf16.msra.mxu0 %v674
  %700 = vmatprep.subr.bf16.mxu0 %v679
  %701 = vmatpush1.bf16.msra.mxu0 %v678
  %702 = vmatprep.subr.bf16.mxu0 %v683
  %703 = vmatpush1.bf16.msra.mxu0 %v682
  %704 = vmatprep.subr.bf16.mxu0 %v687
  %705 = vmatpush1.bf16.msra.mxu0 %v686
  %706 = vmatprep.subr.bf16.mxu0 0
  %707 = vmatpush1.bf16.msra.mxu0 0
  %708 = vmatprep.subr.bf16.mxu0 0
  %709 = vmatpush1.bf16.msra.mxu0 0
  %710 = vmatprep.subr.bf16.mxu0 0
  %711 = vmatpush1.bf16.msra.mxu0 0
  %712 = vmatprep.subr.bf16.mxu0 0
  %713 = vmatpush1.bf16.msra.mxu0 0
  %714 = vmatprep.subr.bf16.mxu0 0
  %715 = vmatpush1.bf16.msra.mxu0 0
  %716 = vmatprep.subr.bf16.mxu0 0
  %717 = vmatpush1.bf16.msra.mxu0 0
  %718 = vmatprep.subr.bf16.mxu0 0
  %719 = vmatpush1.bf16.msra.mxu0 0
  %720 = vmatprep.subr.bf16.mxu0 0
  %721 = vmatpush1.bf16.msra.mxu0 0
  %722 = vmatprep.mubr.bf16.mxu0 0
  %723 = vmatmul.mubr.bf16.gmra.mrb[0].mxu0 %v657
  %v724 = vpop.f32.mrb[0].mxu0
  %v725 = vadd.f32 0.0, %v724
  %v726 = vpop.f32.mrb[0].mxu0
  %v727 = vadd.f32 0.0, %v726
  %v728 = vpop.f32.mrb[0].mxu0
  %v729 = vpop.f32.mrb[0].mxu0
  %730 = vdwg.mxu0
  %731 = vmatprep.subr.bf16.mxu0 %v661
  %732 = vmatpush1.bf16.msra.mxu0 %v660
  %733 = vmatprep.subr.bf16.mxu0 %v665
  %734 = vmatpush1.bf16.msra.mxu0 %v664
  %735 = vmatprep.subr.bf16.mxu0 %v669
  %736 = vmatpush1.bf16.msra.mxu0 %v668
  %737 = vmatprep.subr.bf16.mxu0 %v673
  %738 = vmatpush1.bf16.msra.mxu0 %v672
  %739 = vmatprep.subr.bf16.mxu0 %v677
  %740 = vmatpush1.bf16.msra.mxu0 %v676
  %741 = vmatprep.subr.bf16.mxu0 %v681
  %742 = vmatpush1.bf16.msra.mxu0 %v680
  %743 = vmatprep.subr.bf16.mxu0 %v685
  %744 = vmatpush1.bf16.msra.mxu0 %v684
  %745 = vmatprep.subr.bf16.mxu0 %v689
  %746 = vmatpush1.bf16.msra.mxu0 %v688
  %747 = vmatprep.subr.bf16.mxu0 0
  %748 = vmatpush1.bf16.msra.mxu0 0
  %749 = vmatprep.subr.bf16.mxu0 0
  %750 = vmatpush1.bf16.msra.mxu0 0
  %751 = vmatprep.subr.bf16.mxu0 0
  %752 = vmatpush1.bf16.msra.mxu0 0
  %753 = vmatprep.subr.bf16.mxu0 0
  %754 = vmatpush1.bf16.msra.mxu0 0
  %755 = vmatprep.subr.bf16.mxu0 0
  %756 = vmatpush1.bf16.msra.mxu0 0
  %757 = vmatprep.subr.bf16.mxu0 0
  %758 = vmatpush1.bf16.msra.mxu0 0
  %759 = vmatprep.subr.bf16.mxu0 0
  %760 = vmatpush1.bf16.msra.mxu0 0
  %761 = vmatprep.subr.bf16.mxu0 0
  %762 = vmatpush1.bf16.msra.mxu0 0
  %763 = vmatprep.mubr.bf16.mxu0 0
  %764 = vmatmul.mubr.bf16.gmra.mrb[0].mxu0 %v657
  %v765 = vpop.f32.mrb[0].mxu0
  %v766 = vadd.f32 0.0, %v765
  %v767 = vpop.f32.mrb[0].mxu0
  %v768 = vadd.f32 0.0, %v767
  %v769 = vpop.f32.mrb[0].mxu0
  %v770 = vpop.f32.mrb[0].mxu0
  %771 = vdwg.mxu0
  %v772 = vadd.f32 %v653, %v725
  %v773 = vadd.f32 %v654, %v727
  %v774 = vadd.f32 %v655, %v766
  %v775 = vadd.f32 %v656, %v768
  %v776 = vxor.u32 %v772, 2147483648
  %v777 = vmul.f32 %v776, 1.442695
  %v778 = vpow.pop %v777
  %v779 = vadd.f32 %v778, 1.0
  %v780 = vrcp.pop %v779
  %v781 = vmul.f32 1.0, %v780
  %v782 = vxor.u32 %v773, 2147483648
  %v783 = vmul.f32 %v782, 1.442695
  %v784 = vpow.pop %v783
  %v785 = vadd.f32 %v784, 1.0
  %v786 = vrcp.pop %v785
  %v787 = vmul.f32 1.0, %v786
  %v788 = vtanh.pop %v774
  %v789 = vxor.u32 %v775, 2147483648
  %v790 = vmul.f32 %v789, 1.442695
  %v791 = vpow.pop %v790
  %v792 = vadd.f32 %v791, 1.0
  %v793 = vrcp.pop %v792
  %v794 = vmul.f32 1.0, %v793
  %v795 = vmul.f32 %v787, %v652
  %v796 = vmul.f32 %v781, %v788
  %v797 = vadd.f32 %v795, %v796
  %v798 = vtanh.pop %v797
  %v799 = vmul.f32 %v794, %v798
  %v800 = vpack.c.bf16 %v799, %v799
  %801 = vst [vmem:[%s4] sm:$0xf] %v800
  %s802 = scalar_lea.vmem [#allocation4], 32
  %v803 = vld [vmem:[%s802] sm:$0xff]
  %v804 = vld [vmem:[%s802 + $0x8] sm:$0xff]
  %v805 = vld [vmem:[%s802 + $0x10] sm:$0xff]
  %v806 = vld [vmem:[%s802 + $0x18] sm:$0xff]
  %v807 = vld [vmem:[#allocation6] sm:$0xff]
  %v808 = vld [vmem:[#allocation6 + $0x8] sm:$0xff]
  %v809 = vld [vmem:[#allocation6 + $0x10] sm:$0xff]
  %v810 = vld [vmem:[#allocation6 + $0x18] sm:$0xff]
  %v811 = vld [vmem:[#allocation6 + $0x20] sm:$0xff]
  %v812 = vld [vmem:[#allocation6 + $0x28] sm:$0xff]
  %v813 = vld [vmem:[#allocation6 + $0x30] sm:$0xff]
  %v814 = vld [vmem:[#allocation6 + $0x38] sm:$0xff]
  %v815 = vld [vmem:[#allocation6 + $0x40] sm:$0xff]
  %v816 = vld [vmem:[#allocation6 + $0x48] sm:$0xff]
  %v817 = vld [vmem:[#allocation6 + $0x50] sm:$0xff]
  %v818 = vld [vmem:[#allocation6 + $0x58] sm:$0xff]
  %v819 = vld [vmem:[#allocation6 + $0x60] sm:$0xff]
  %v820 = vld [vmem:[#allocation6 + $0x68] sm:$0xff]
  %v821 = vld [vmem:[#allocation6 + $0x70] sm:$0xff]
  %v822 = vld [vmem:[#allocation6 + $0x78] sm:$0xff]
  %v823 = vld [vmem:[#allocation6 + $0x80] sm:$0xff]
  %v824 = vld [vmem:[#allocation6 + $0x88] sm:$0xff]
  %v825 = vld [vmem:[#allocation6 + $0x90] sm:$0xff]
  %v826 = vld [vmem:[#allocation6 + $0x98] sm:$0xff]
  %v827 = vld [vmem:[#allocation6 + $0xa0] sm:$0xff]
  %v828 = vld [vmem:[#allocation6 + $0xa8] sm:$0xff]
  %v829 = vld [vmem:[#allocation6 + $0xb0] sm:$0xff]
  %v830 = vld [vmem:[#allocation6 + $0xb8] sm:$0xff]
  %v831 = vld [vmem:[#allocation6 + $0xc0] sm:$0xff]
  %v832 = vld [vmem:[#allocation6 + $0xc8] sm:$0xff]
  %v833 = vld [vmem:[#allocation6 + $0xd0] sm:$0xff]
  %v834 = vld [vmem:[#allocation6 + $0xd8] sm:$0xff]
  %v835 = vld [vmem:[#allocation6 + $0xe0] sm:$0xff]
  %v836 = vld [vmem:[#allocation6 + $0xe8] sm:$0xff]
  %v837 = vld [vmem:[#allocation6 + $0xf0] sm:$0xff]
  %v838 = vld [vmem:[#allocation6 + $0xf8] sm:$0xff]
  %839 = vmatprep.subr.bf16.mxu0 %v808
  %840 = vmatpush1.bf16.msra.mxu0 %v807
  %841 = vmatprep.subr.bf16.mxu0 %v812
  %842 = vmatpush1.bf16.msra.mxu0 %v811
  %843 = vmatprep.subr.bf16.mxu0 %v816
  %844 = vmatpush1.bf16.msra.mxu0 %v815
  %845 = vmatprep.subr.bf16.mxu0 %v820
  %846 = vmatpush1.bf16.msra.mxu0 %v819
  %847 = vmatprep.subr.bf16.mxu0 %v824
  %848 = vmatpush1.bf16.msra.mxu0 %v823
  %849 = vmatprep.subr.bf16.mxu0 %v828
  %850 = vmatpush1.bf16.msra.mxu0 %v827
  %851 = vmatprep.subr.bf16.mxu0 %v832
  %852 = vmatpush1.bf16.msra.mxu0 %v831
  %853 = vmatprep.subr.bf16.mxu0 %v836
  %854 = vmatpush1.bf16.msra.mxu0 %v835
  %855 = vmatprep.subr.bf16.mxu0 0
  %856 = vmatpush1.bf16.msra.mxu0 0
  %857 = vmatprep.subr.bf16.mxu0 0
  %858 = vmatpush1.bf16.msra.mxu0 0
  %859 = vmatprep.subr.bf16.mxu0 0
  %860 = vmatpush1.bf16.msra.mxu0 0
  %861 = vmatprep.subr.bf16.mxu0 0
  %862 = vmatpush1.bf16.msra.mxu0 0
  %863 = vmatprep.subr.bf16.mxu0 0
  %864 = vmatpush1.bf16.msra.mxu0 0
  %865 = vmatprep.subr.bf16.mxu0 0
  %866 = vmatpush1.bf16.msra.mxu0 0
  %867 = vmatprep.subr.bf16.mxu0 0
  %868 = vmatpush1.bf16.msra.mxu0 0
  %869 = vmatprep.subr.bf16.mxu0 0
  %870 = vmatpush1.bf16.msra.mxu0 0
  %871 = vmatprep.mubr.bf16.mxu0 0
  %872 = vmatmul.mubr.bf16.gmra.mrb[0].mxu0 %v800
  %v873 = vpop.f32.mrb[0].mxu0
  %v874 = vadd.f32 0.0, %v873
  %v875 = vpop.f32.mrb[0].mxu0
  %v876 = vadd.f32 0.0, %v875
  %v877 = vpop.f32.mrb[0].mxu0
  %v878 = vpop.f32.mrb[0].mxu0
  %879 = vdwg.mxu0
  %880 = vmatprep.subr.bf16.mxu0 %v810
  %881 = vmatpush1.bf16.msra.mxu0 %v809
  %882 = vmatprep.subr.bf16.mxu0 %v814
  %883 = vmatpush1.bf16.msra.mxu0 %v813
  %884 = vmatprep.subr.bf16.mxu0 %v818
  %885 = vmatpush1.bf16.msra.mxu0 %v817
  %886 = vmatprep.subr.bf16.mxu0 %v822
  %887 = vmatpush1.bf16.msra.mxu0 %v821
  %888 = vmatprep.subr.bf16.mxu0 %v826
  %889 = vmatpush1.bf16.msra.mxu0 %v825
  %890 = vmatprep.subr.bf16.mxu0 %v830
  %891 = vmatpush1.bf16.msra.mxu0 %v829
  %892 = vmatprep.subr.bf16.mxu0 %v834
  %893 = vmatpush1.bf16.msra.mxu0 %v833
  %894 = vmatprep.subr.bf16.mxu0 %v838
  %895 = vmatpush1.bf16.msra.mxu0 %v837
  %896 = vmatprep.subr.bf16.mxu0 0
  %897 = vmatpush1.bf16.msra.mxu0 0
  %898 = vmatprep.subr.bf16.mxu0 0
  %899 = vmatpush1.bf16.msra.mxu0 0
  %900 = vmatprep.subr.bf16.mxu0 0
  %901 = vmatpush1.bf16.msra.mxu0 0
  %902 = vmatprep.subr.bf16.mxu0 0
  %903 = vmatpush1.bf16.msra.mxu0 0
  %904 = vmatprep.subr.bf16.mxu0 0
  %905 = vmatpush1.bf16.msra.mxu0 0
  %906 = vmatprep.subr.bf16.mxu0 0
  %907 = vmatpush1.bf16.msra.mxu0 0
  %908 = vmatprep.subr.bf16.mxu0 0
  %909 = vmatpush1.bf16.msra.mxu0 0
  %910 = vmatprep.subr.bf16.mxu0 0
  %911 = vmatpush1.bf16.msra.mxu0 0
  %912 = vmatprep.mubr.bf16.mxu0 0
  %913 = vmatmul.mubr.bf16.gmra.mrb[0].mxu0 %v800
  %v914 = vpop.f32.mrb[0].mxu0
  %v915 = vadd.f32 0.0, %v914
  %v916 = vpop.f32.mrb[0].mxu0
  %v917 = vadd.f32 0.0, %v916
  %v918 = vpop.f32.mrb[0].mxu0
  %v919 = vpop.f32.mrb[0].mxu0
  %920 = vdwg.mxu0
  %v921 = vadd.f32 %v803, %v874
  %v922 = vadd.f32 %v804, %v876
  %v923 = vadd.f32 %v805, %v915
  %v924 = vadd.f32 %v806, %v917
  %v925 = vxor.u32 %v921, 2147483648
  %v926 = vmul.f32 %v925, 1.442695
  %v927 = vpow.pop %v926
  %v928 = vadd.f32 %v927, 1.0
  %v929 = vrcp.pop %v928
  %v930 = vmul.f32 1.0, %v929
  %v931 = vxor.u32 %v922, 2147483648
  %v932 = vmul.f32 %v931, 1.442695
  %v933 = vpow.pop %v932
  %v934 = vadd.f32 %v933, 1.0
  %v935 = vrcp.pop %v934
  %v936 = vmul.f32 1.0, %v935
  %v937 = vtanh.pop %v923
  %v938 = vxor.u32 %v924, 2147483648
  %v939 = vmul.f32 %v938, 1.442695
  %v940 = vpow.pop %v939
  %v941 = vadd.f32 %v940, 1.0
  %v942 = vrcp.pop %v941
  %v943 = vmul.f32 1.0, %v942
  %v944 = vmul.f32 %v936, %v797
  %v945 = vmul.f32 %v930, %v937
  %v946 = vadd.f32 %v944, %v945
  %v947 = vtanh.pop %v946
  %v948 = vmul.f32 %v943, %v947
  %v949 = vpack.c.bf16 %v948, %v948
  %s950 = scalar_lea.vmem %s4, 4
  %951 = vst [vmem:[%s950] sm:$0xf] %v949
  %s952 = scalar_lea.vmem [#allocation4], 64
  %v953 = vld [vmem:[%s952] sm:$0xff]
  %v954 = vld [vmem:[%s952 + $0x8] sm:$0xff]
  %v955 = vld [vmem:[%s952 + $0x10] sm:$0xff]
  %v956 = vld [vmem:[%s952 + $0x18] sm:$0xff]
  %v957 = vld [vmem:[#allocation6] sm:$0xff]
  %v958 = vld [vmem:[#allocation6 + $0x8] sm:$0xff]
  %v959 = vld [vmem:[#allocation6 + $0x10] sm:$0xff]
  %v960 = vld [vmem:[#allocation6 + $0x18] sm:$0xff]
  %v961 = vld [vmem:[#allocation6 + $0x20] sm:$0xff]
  %v962 = vld [vmem:[#allocation6 + $0x28] sm:$0xff]
  %v963 = vld [vmem:[#allocation6 + $0x30] sm:$0xff]
  %v964 = vld [vmem:[#allocation6 + $0x38] sm:$0xff]
  %v965 = vld [vmem:[#allocation6 + $0x40] sm:$0xff]
  %v966 = vld [vmem:[#allocation6 + $0x48] sm:$0xff]
  %v967 = vld [vmem:[#allocation6 + $0x50] sm:$0xff]
  %v968 = vld [vmem:[#allocation6 + $0x58] sm:$0xff]
  %v969 = vld [vmem:[#allocation6 + $0x60] sm:$0xff]
  %v970 = vld [vmem:[#allocation6 + $0x68] sm:$0xff]
  %v971 = vld [vmem:[#allocation6 + $0x70] sm:$0xff]
  %v972 = vld [vmem:[#allocation6 + $0x78] sm:$0xff]
  %v973 = vld [vmem:[#allocation6 + $0x80] sm:$0xff]
  %v974 = vld [vmem:[#allocation6 + $0x88] sm:$0xff]
  %v975 = vld [vmem:[#allocation6 + $0x90] sm:$0xff]
  %v976 = vld [vmem:[#allocation6 + $0x98] sm:$0xff]
  %v977 = vld [vmem:[#allocation6 + $0xa0] sm:$0xff]
  %v978 = vld [vmem:[#allocation6 + $0xa8] sm:$0xff]
  %v979 = vld [vmem:[#allocation6 + $0xb0] sm:$0xff]
  %v980 = vld [vmem:[#allocation6 + $0xb8] sm:$0xff]
  %v981 = vld [vmem:[#allocation6 + $0xc0] sm:$0xff]
  %v982 = vld [vmem:[#allocation6 + $0xc8] sm:$0xff]
  %v983 = vld [vmem:[#allocation6 + $0xd0] sm:$0xff]
  %v984 = vld [vmem:[#allocation6 + $0xd8] sm:$0xff]
  %v985 = vld [vmem:[#allocation6 + $0xe0] sm:$0xff]
  %v986 = vld [vmem:[#allocation6 + $0xe8] sm:$0xff]
  %v987 = vld [vmem:[#allocation6 + $0xf0] sm:$0xff]
  %v988 = vld [vmem:[#allocation6 + $0xf8] sm:$0xff]
  %989 = vmatprep.subr.bf16.mxu0 %v958
  %990 = vmatpush1.bf16.msra.mxu0 %v957
  %991 = vmatprep.subr.bf16.mxu0 %v962
  %992 = vmatpush1.bf16.msra.mxu0 %v961
  %993 = vmatprep.subr.bf16.mxu0 %v966
  %994 = vmatpush1.bf16.msra.mxu0 %v965
  %995 = vmatprep.subr.bf16.mxu0 %v970
  %996 = vmatpush1.bf16.msra.mxu0 %v969
  %997 = vmatprep.subr.bf16.mxu0 %v974
  %998 = vmatpush1.bf16.msra.mxu0 %v973
  %999 = vmatprep.subr.bf16.mxu0 %v978
  %1000 = vmatpush1.bf16.msra.mxu0 %v977
  %1001 = vmatprep.subr.bf16.mxu0 %v982
  %1002 = vmatpush1.bf16.msra.mxu0 %v981
  %1003 = vmatprep.subr.bf16.mxu0 %v986
  %1004 = vmatpush1.bf16.msra.mxu0 %v985
  %1005 = vmatprep.subr.bf16.mxu0 0
  %1006 = vmatpush1.bf16.msra.mxu0 0
  %1007 = vmatprep.subr.bf16.mxu0 0
  %1008 = vmatpush1.bf16.msra.mxu0 0
  %1009 = vmatprep.subr.bf16.mxu0 0
  %1010 = vmatpush1.bf16.msra.mxu0 0
  %1011 = vmatprep.subr.bf16.mxu0 0
  %1012 = vmatpush1.bf16.msra.mxu0 0
  %1013 = vmatprep.subr.bf16.mxu0 0
  %1014 = vmatpush1.bf16.msra.mxu0 0
  %1015 = vmatprep.subr.bf16.mxu0 0
  %1016 = vmatpush1.bf16.msra.mxu0 0
  %1017 = vmatprep.subr.bf16.mxu0 0
  %1018 = vmatpush1.bf16.msra.mxu0 0
  %1019 = vmatprep.subr.bf16.mxu0 0
  %1020 = vmatpush1.bf16.msra.mxu0 0
  %1021 = vmatprep.mubr.bf16.mxu0 0
  %1022 = vmatmul.mubr.bf16.gmra.mrb[0].mxu0 %v949
  %v1023 = vpop.f32.mrb[0].mxu0
  %v1024 = vadd.f32 0.0, %v1023
  %v1025 = vpop.f32.mrb[0].mxu0
  %v1026 = vadd.f32 0.0, %v1025
  %v1027 = vpop.f32.mrb[0].mxu0
  %v1028 = vpop.f32.mrb[0].mxu0
  %1029 = vdwg.mxu0
  %1030 = vmatprep.subr.bf16.mxu0 %v960
  %1031 = vmatpush1.bf16.msra.mxu0 %v959
  %1032 = vmatprep.subr.bf16.mxu0 %v964
  %1033 = vmatpush1.bf16.msra.mxu0 %v963
  %1034 = vmatprep.subr.bf16.mxu0 %v968
  %1035 = vmatpush1.bf16.msra.mxu0 %v967
  %1036 = vmatprep.subr.bf16.mxu0 %v972
  %1037 = vmatpush1.bf16.msra.mxu0 %v971
  %1038 = vmatprep.subr.bf16.mxu0 %v976
  %1039 = vmatpush1.bf16.msra.mxu0 %v975
  %1040 = vmatprep.subr.bf16.mxu0 %v980
  %1041 = vmatpush1.bf16.msra.mxu0 %v979
  %1042 = vmatprep.subr.bf16.mxu0 %v984
  %1043 = vmatpush1.bf16.msra.mxu0 %v983
  %1044 = vmatprep.subr.bf16.mxu0 %v988
  %1045 = vmatpush1.bf16.msra.mxu0 %v987
  %1046 = vmatprep.subr.bf16.mxu0 0
  %1047 = vmatpush1.bf16.msra.mxu0 0
  %1048 = vmatprep.subr.bf16.mxu0 0
  %1049 = vmatpush1.bf16.msra.mxu0 0
  %1050 = vmatprep.subr.bf16.mxu0 0
  %1051 = vmatpush1.bf16.msra.mxu0 0
  %1052 = vmatprep.subr.bf16.mxu0 0
  %1053 = vmatpush1.bf16.msra.mxu0 0
  %1054 = vmatprep.subr.bf16.mxu0 0
  %1055 = vmatpush1.bf16.msra.mxu0 0
  %1056 = vmatprep.subr.bf16.mxu0 0
  %1057 = vmatpush1.bf16.msra.mxu0 0
  %1058 = vmatprep.subr.bf16.mxu0 0
  %1059 = vmatpush1.bf16.msra.mxu0 0
  %1060 = vmatprep.subr.bf16.mxu0 0
  %1061 = vmatpush1.bf16.msra.mxu0 0
  %1062 = vmatprep.mubr.bf16.mxu0 0
  %1063 = vmatmul.mubr.bf16.gmra.mrb[0].mxu0 %v949
  %v1064 = vpop.f32.mrb[0].mxu0
  %v1065 = vadd.f32 0.0, %v1064
  %v1066 = vpop.f32.mrb[0].mxu0
  %v1067 = vadd.f32 0.0, %v1066
  %v1068 = vpop.f32.mrb[0].mxu0
  %v1069 = vpop.f32.mrb[0].mxu0
  %1070 = vdwg.mxu0
  %v1071 = vadd.f32 %v953, %v1024
  %v1072 = vadd.f32 %v954, %v1026
  %v1073 = vadd.f32 %v955, %v1065
  %v1074 = vadd.f32 %v956, %v1067
  %v1075 = vxor.u32 %v1071, 2147483648
  %v1076 = vmul.f32 %v1075, 1.442695
  %v1077 = vpow.pop %v1076
  %v1078 = vadd.f32 %v1077, 1.0
  %v1079 = vrcp.pop %v1078
  %v1080 = vmul.f32 1.0, %v1079
  %v1081 = vxor.u32 %v1072, 2147483648
  %v1082 = vmul.f32 %v1081, 1.442695
  %v1083 = vpow.pop %v1082
  %v1084 = vadd.f32 %v1083, 1.0
  %v1085 = vrcp.pop %v1084
  %v1086 = vmul.f32 1.0, %v1085
  %v1087 = vtanh.pop %v1073
  %v1088 = vxor.u32 %v1074, 2147483648
  %v1089 = vmul.f32 %v1088, 1.442695
  %v1090 = vpow.pop %v1089
  %v1091 = vadd.f32 %v1090, 1.0
  %v1092 = vrcp.pop %v1091
  %v1093 = vmul.f32 1.0, %v1092
  %v1094 = vmul.f32 %v1086, %v946
  %v1095 = vmul.f32 %v1080, %v1087
  %v1096 = vadd.f32 %v1094, %v1095
  %v1097 = vtanh.pop %v1096
  %v1098 = vmul.f32 %v1093, %v1097
  %v1099 = vpack.c.bf16 %v1098, %v1098
  %s1100 = scalar_lea.vmem %s4, 8
  %1101 = vst [vmem:[%s1100] sm:$0xf] %v1099
  %s1102 = scalar_lea.vmem [#allocation4], 96
  %v1103 = vld [vmem:[%s1102] sm:$0xff]
  %v1104 = vld [vmem:[%s1102 + $0x8] sm:$0xff]
  %v1105 = vld [vmem:[%s1102 + $0x10] sm:$0xff]
  %v1106 = vld [vmem:[%s1102 + $0x18] sm:$0xff]
  %v1107 = vld [vmem:[#allocation6] sm:$0xff]
  %v1108 = vld [vmem:[#allocation6 + $0x8] sm:$0xff]
  %v1109 = vld [vmem:[#allocation6 + $0x10] sm:$0xff]
  %v1110 = vld [vmem:[#allocation6 + $0x18] sm:$0xff]
  %v1111 = vld [vmem:[#allocation6 + $0x20] sm:$0xff]
  %v1112 = vld [vmem:[#allocation6 + $0x28] sm:$0xff]
  %v1113 = vld [vmem:[#allocation6 + $0x30] sm:$0xff]
  %v1114 = vld [vmem:[#allocation6 + $0x38] sm:$0xff]
  %v1115 = vld [vmem:[#allocation6 + $0x40] sm:$0xff]
  %v1116 = vld [vmem:[#allocation6 + $0x48] sm:$0xff]
  %v1117 = vld [vmem:[#allocation6 + $0x50] sm:$0xff]
  %v1118 = vld [vmem:[#allocation6 + $0x58] sm:$0xff]
  %v1119 = vld [vmem:[#allocation6 + $0x60] sm:$0xff]
  %v1120 = vld [vmem:[#allocation6 + $0x68] sm:$0xff]
  %v1121 = vld [vmem:[#allocation6 + $0x70] sm:$0xff]
  %v1122 = vld [vmem:[#allocation6 + $0x78] sm:$0xff]
  %v1123 = vld [vmem:[#allocation6 + $0x80] sm:$0xff]
  %v1124 = vld [vmem:[#allocation6 + $0x88] sm:$0xff]
  %v1125 = vld [vmem:[#allocation6 + $0x90] sm:$0xff]
  %v1126 = vld [vmem:[#allocation6 + $0x98] sm:$0xff]
  %v1127 = vld [vmem:[#allocation6 + $0xa0] sm:$0xff]
  %v1128 = vld [vmem:[#allocation6 + $0xa8] sm:$0xff]
  %v1129 = vld [vmem:[#allocation6 + $0xb0] sm:$0xff]
  %v1130 = vld [vmem:[#allocation6 + $0xb8] sm:$0xff]
  %v1131 = vld [vmem:[#allocation6 + $0xc0] sm:$0xff]
  %v1132 = vld [vmem:[#allocation6 + $0xc8] sm:$0xff]
  %v1133 = vld [vmem:[#allocation6 + $0xd0] sm:$0xff]
  %v1134 = vld [vmem:[#allocation6 + $0xd8] sm:$0xff]
  %v1135 = vld [vmem:[#allocation6 + $0xe0] sm:$0xff]
  %v1136 = vld [vmem:[#allocation6 + $0xe8] sm:$0xff]
  %v1137 = vld [vmem:[#allocation6 + $0xf0] sm:$0xff]
  %v1138 = vld [vmem:[#allocation6 + $0xf8] sm:$0xff]
  %1139 = vmatprep.subr.bf16.mxu0 %v1108
  %1140 = vmatpush1.bf16.msra.mxu0 %v1107
  %1141 = vmatprep.subr.bf16.mxu0 %v1112
  %1142 = vmatpush1.bf16.msra.mxu0 %v1111
  %1143 = vmatprep.subr.bf16.mxu0 %v1116
  %1144 = vmatpush1.bf16.msra.mxu0 %v1115
  %1145 = vmatprep.subr.bf16.mxu0 %v1120
  %1146 = vmatpush1.bf16.msra.mxu0 %v1119
  %1147 = vmatprep.subr.bf16.mxu0 %v1124
  %1148 = vmatpush1.bf16.msra.mxu0 %v1123
  %1149 = vmatprep.subr.bf16.mxu0 %v1128
  %1150 = vmatpush1.bf16.msra.mxu0 %v1127
  %1151 = vmatprep.subr.bf16.mxu0 %v1132
  %1152 = vmatpush1.bf16.msra.mxu0 %v1131
  %1153 = vmatprep.subr.bf16.mxu0 %v1136
  %1154 = vmatpush1.bf16.msra.mxu0 %v1135
  %1155 = vmatprep.subr.bf16.mxu0 0
  %1156 = vmatpush1.bf16.msra.mxu0 0
  %1157 = vmatprep.subr.bf16.mxu0 0
  %1158 = vmatpush1.bf16.msra.mxu0 0
  %1159 = vmatprep.subr.bf16.mxu0 0
  %1160 = vmatpush1.bf16.msra.mxu0 0
  %1161 = vmatprep.subr.bf16.mxu0 0
  %1162 = vmatpush1.bf16.msra.mxu0 0
  %1163 = vmatprep.subr.bf16.mxu0 0
  %1164 = vmatpush1.bf16.msra.mxu0 0
  %1165 = vmatprep.subr.bf16.mxu0 0
  %1166 = vmatpush1.bf16.msra.mxu0 0
  %1167 = vmatprep.subr.bf16.mxu0 0
  %1168 = vmatpush1.bf16.msra.mxu0 0
  %1169 = vmatprep.subr.bf16.mxu0 0
  %1170 = vmatpush1.bf16.msra.mxu0 0
  %1171 = vmatprep.mubr.bf16.mxu0 0
  %1172 = vmatmul.mubr.bf16.gmra.mrb[0].mxu0 %v1099
  %v1173 = vpop.f32.mrb[0].mxu0
  %v1174 = vadd.f32 0.0, %v1173
  %v1175 = vpop.f32.mrb[0].mxu0
  %v1176 = vadd.f32 0.0, %v1175
  %v1177 = vpop.f32.mrb[0].mxu0
  %v1178 = vpop.f32.mrb[0].mxu0
  %1179 = vdwg.mxu0
  %1180 = vmatprep.subr.bf16.mxu0 %v1110
  %1181 = vmatpush1.bf16.msra.mxu0 %v1109
  %1182 = vmatprep.subr.bf16.mxu0 %v1114
  %1183 = vmatpush1.bf16.msra.mxu0 %v1113
  %1184 = vmatprep.subr.bf16.mxu0 %v1118
  %1185 = vmatpush1.bf16.msra.mxu0 %v1117
  %1186 = vmatprep.subr.bf16.mxu0 %v1122
  %1187 = vmatpush1.bf16.msra.mxu0 %v1121
  %1188 = vmatprep.subr.bf16.mxu0 %v1126
  %1189 = vmatpush1.bf16.msra.mxu0 %v1125
  %1190 = vmatprep.subr.bf16.mxu0 %v1130
  %1191 = vmatpush1.bf16.msra.mxu0 %v1129
  %1192 = vmatprep.subr.bf16.mxu0 %v1134
  %1193 = vmatpush1.bf16.msra.mxu0 %v1133
  %1194 = vmatprep.subr.bf16.mxu0 %v1138
  %1195 = vmatpush1.bf16.msra.mxu0 %v1137
  %1196 = vmatprep.subr.bf16.mxu0 0
  %1197 = vmatpush1.bf16.msra.mxu0 0
  %1198 = vmatprep.subr.bf16.mxu0 0
  %1199 = vmatpush1.bf16.msra.mxu0 0
  %1200 = vmatprep.subr.bf16.mxu0 0
  %1201 = vmatpush1.bf16.msra.mxu0 0
  %1202 = vmatprep.subr.bf16.mxu0 0
  %1203 = vmatpush1.bf16.msra.mxu0 0
  %1204 = vmatprep.subr.bf16.mxu0 0
  %1205 = vmatpush1.bf16.msra.mxu0 0
  %1206 = vmatprep.subr.bf16.mxu0 0
  %1207 = vmatpush1.bf16.msra.mxu0 0
  %1208 = vmatprep.subr.bf16.mxu0 0
  %1209 = vmatpush1.bf16.msra.mxu0 0
  %1210 = vmatprep.subr.bf16.mxu0 0
  %1211 = vmatpush1.bf16.msra.mxu0 0
  %1212 = vmatprep.mubr.bf16.mxu0 0
  %1213 = vmatmul.mubr.bf16.gmra.mrb[0].mxu0 %v1099
  %v1214 = vpop.f32.mrb[0].mxu0
  %v1215 = vadd.f32 0.0, %v1214
  %v1216 = vpop.f32.mrb[0].mxu0
  %v1217 = vadd.f32 0.0, %v1216
  %v1218 = vpop.f32.mrb[0].mxu0
  %v1219 = vpop.f32.mrb[0].mxu0
  %1220 = vdwg.mxu0
  %v1221 = vadd.f32 %v1103, %v1174
  %v1222 = vadd.f32 %v1104, %v1176
  %v1223 = vadd.f32 %v1105, %v1215
  %v1224 = vadd.f32 %v1106, %v1217
  %v1225 = vxor.u32 %v1221, 2147483648
  %v1226 = vmul.f32 %v1225, 1.442695
  %v1227 = vpow.pop %v1226
  %v1228 = vadd.f32 %v1227, 1.0
  %v1229 = vrcp.pop %v1228
  %v1230 = vmul.f32 1.0, %v1229
  %v1231 = vxor.u32 %v1222, 2147483648
  %v1232 = vmul.f32 %v1231, 1.442695
  %v1233 = vpow.pop %v1232
  %v1234 = vadd.f32 %v1233, 1.0
  %v1235 = vrcp.pop %v1234
  %v1236 = vmul.f32 1.0, %v1235
  %v1237 = vtanh.pop %v1223
  %v1238 = vxor.u32 %v1224, 2147483648
  %v1239 = vmul.f32 %v1238, 1.442695
  %v1240 = vpow.pop %v1239
  %v1241 = vadd.f32 %v1240, 1.0
  %v1242 = vrcp.pop %v1241
  %v1243 = vmul.f32 1.0, %v1242
  %v1244 = vmul.f32 %v1236, %v1096
  %v1245 = vmul.f32 %v1230, %v1237
  %v1246 = vadd.f32 %v1244, %v1245
  %v1247 = vtanh.pop %v1246
  %v1248 = vmul.f32 %v1243, %v1247
  %v1249 = vpack.c.bf16 %v1248, %v1248
  %s1250 = scalar_lea.vmem %s4, 12
  %1251 = vst [vmem:[%s1250] sm:$0xf] %v1249
  %s1252 = scalar_lea.vmem [#allocation4], 128
  %v1253 = vld [vmem:[%s1252] sm:$0xff]
  %v1254 = vld [vmem:[%s1252 + $0x8] sm:$0xff]
  %v1255 = vld [vmem:[%s1252 + $0x10] sm:$0xff]
  %v1256 = vld [vmem:[%s1252 + $0x18] sm:$0xff]
  %v1257 = vld [vmem:[#allocation6] sm:$0xff]
  %v1258 = vld [vmem:[#allocation6 + $0x8] sm:$0xff]
  %v1259 = vld [vmem:[#allocation6 + $0x10] sm:$0xff]
  %v1260 = vld [vmem:[#allocation6 + $0x18] sm:$0xff]
  %v1261 = vld [vmem:[#allocation6 + $0x20] sm:$0xff]
  %v1262 = vld [vmem:[#allocation6 + $0x28] sm:$0xff]
  %v1263 = vld [vmem:[#allocation6 + $0x30] sm:$0xff]
  %v1264 = vld [vmem:[#allocation6 + $0x38] sm:$0xff]
  %v1265 = vld [vmem:[#allocation6 + $0x40] sm:$0xff]
  %v1266 = vld [vmem:[#allocation6 + $0x48] sm:$0xff]
  %v1267 = vld [vmem:[#allocation6 + $0x50] sm:$0xff]
  %v1268 = vld [vmem:[#allocation6 + $0x58] sm:$0xff]
  %v1269 = vld [vmem:[#allocation6 + $0x60] sm:$0xff]
  %v1270 = vld [vmem:[#allocation6 + $0x68] sm:$0xff]
  %v1271 = vld [vmem:[#allocation6 + $0x70] sm:$0xff]
  %v1272 = vld [vmem:[#allocation6 + $0x78] sm:$0xff]
  %v1273 = vld [vmem:[#allocation6 + $0x80] sm:$0xff]
  %v1274 = vld [vmem:[#allocation6 + $0x88] sm:$0xff]
  %v1275 = vld [vmem:[#allocation6 + $0x90] sm:$0xff]
  %v1276 = vld [vmem:[#allocation6 + $0x98] sm:$0xff]
  %v1277 = vld [vmem:[#allocation6 + $0xa0] sm:$0xff]
  %v1278 = vld [vmem:[#allocation6 + $0xa8] sm:$0xff]
  %v1279 = vld [vmem:[#allocation6 + $0xb0] sm:$0xff]
  %v1280 = vld [vmem:[#allocation6 + $0xb8] sm:$0xff]
  %v1281 = vld [vmem:[#allocation6 + $0xc0] sm:$0xff]
  %v1282 = vld [vmem:[#allocation6 + $0xc8] sm:$0xff]
  %v1283 = vld [vmem:[#allocation6 + $0xd0] sm:$0xff]
  %v1284 = vld [vmem:[#allocation6 + $0xd8] sm:$0xff]
  %v1285 = vld [vmem:[#allocation6 + $0xe0] sm:$0xff]
  %v1286 = vld [vmem:[#allocation6 + $0xe8] sm:$0xff]
  %v1287 = vld [vmem:[#allocation6 + $0xf0] sm:$0xff]
  %v1288 = vld [vmem:[#allocation6 + $0xf8] sm:$0xff]
  %1289 = vmatprep.subr.bf16.mxu0 %v1258
  %1290 = vmatpush1.bf16.msra.mxu0 %v1257
  %1291 = vmatprep.subr.bf16.mxu0 %v1262
  %1292 = vmatpush1.bf16.msra.mxu0 %v1261
  %1293 = vmatprep.subr.bf16.mxu0 %v1266
  %1294 = vmatpush1.bf16.msra.mxu0 %v1265
  %1295 = vmatprep.subr.bf16.mxu0 %v1270
  %1296 = vmatpush1.bf16.msra.mxu0 %v1269
  %1297 = vmatprep.subr.bf16.mxu0 %v1274
  %1298 = vmatpush1.bf16.msra.mxu0 %v1273
  %1299 = vmatprep.subr.bf16.mxu0 %v1278
  %1300 = vmatpush1.bf16.msra.mxu0 %v1277
  %1301 = vmatprep.subr.bf16.mxu0 %v1282
  %1302 = vmatpush1.bf16.msra.mxu0 %v1281
  %1303 = vmatprep.subr.bf16.mxu0 %v1286
  %1304 = vmatpush1.bf16.msra.mxu0 %v1285
  %1305 = vmatprep.subr.bf16.mxu0 0
  %1306 = vmatpush1.bf16.msra.mxu0 0
  %1307 = vmatprep.subr.bf16.mxu0 0
  %1308 = vmatpush1.bf16.msra.mxu0 0
  %1309 = vmatprep.subr.bf16.mxu0 0
  %1310 = vmatpush1.bf16.msra.mxu0 0
  %1311 = vmatprep.subr.bf16.mxu0 0
  %1312 = vmatpush1.bf16.msra.mxu0 0
  %1313 = vmatprep.subr.bf16.mxu0 0
  %1314 = vmatpush1.bf16.msra.mxu0 0
  %1315 = vmatprep.subr.bf16.mxu0 0
  %1316 = vmatpush1.bf16.msra.mxu0 0
  %1317 = vmatprep.subr.bf16.mxu0 0
  %1318 = vmatpush1.bf16.msra.mxu0 0
  %1319 = vmatprep.subr.bf16.mxu0 0
  %1320 = vmatpush1.bf16.msra.mxu0 0
  %1321 = vmatprep.mubr.bf16.mxu0 0
  %1322 = vmatmul.mubr.bf16.gmra.mrb[0].mxu0 %v1249
  %v1323 = vpop.f32.mrb[0].mxu0
  %v1324 = vadd.f32 0.0, %v1323
  %v1325 = vpop.f32.mrb[0].mxu0
  %v1326 = vadd.f32 0.0, %v1325
  %v1327 = vpop.f32.mrb[0].mxu0
  %v1328 = vpop.f32.mrb[0].mxu0
  %1329 = vdwg.mxu0
  %1330 = vmatprep.subr.bf16.mxu0 %v1260
  %1331 = vmatpush1.bf16.msra.mxu0 %v1259
  %1332 = vmatprep.subr.bf16.mxu0 %v1264
  %1333 = vmatpush1.bf16.msra.mxu0 %v1263
  %1334 = vmatprep.subr.bf16.mxu0 %v1268
  %1335 = vmatpush1.bf16.msra.mxu0 %v1267
  %1336 = vmatprep.subr.bf16.mxu0 %v1272
  %1337 = vmatpush1.bf16.msra.mxu0 %v1271
  %1338 = vmatprep.subr.bf16.mxu0 %v1276
  %1339 = vmatpush1.bf16.msra.mxu0 %v1275
  %1340 = vmatprep.subr.bf16.mxu0 %v1280
  %1341 = vmatpush1.bf16.msra.mxu0 %v1279
  %1342 = vmatprep.subr.bf16.mxu0 %v1284
  %1343 = vmatpush1.bf16.msra.mxu0 %v1283
  %1344 = vmatprep.subr.bf16.mxu0 %v1288
  %1345 = vmatpush1.bf16.msra.mxu0 %v1287
  %1346 = vmatprep.subr.bf16.mxu0 0
  %1347 = vmatpush1.bf16.msra.mxu0 0
  %1348 = vmatprep.subr.bf16.mxu0 0
  %1349 = vmatpush1.bf16.msra.mxu0 0
  %1350 = vmatprep.subr.bf16.mxu0 0
  %1351 = vmatpush1.bf16.msra.mxu0 0
  %1352 = vmatprep.subr.bf16.mxu0 0
  %1353 = vmatpush1.bf16.msra.mxu0 0
  %1354 = vmatprep.subr.bf16.mxu0 0
  %1355 = vmatpush1.bf16.msra.mxu0 0
  %1356 = vmatprep.subr.bf16.mxu0 0
  %1357 = vmatpush1.bf16.msra.mxu0 0
  %1358 = vmatprep.subr.bf16.mxu0 0
  %1359 = vmatpush1.bf16.msra.mxu0 0
  %1360 = vmatprep.subr.bf16.mxu0 0
  %1361 = vmatpush1.bf16.msra.mxu0 0
  %1362 = vmatprep.mubr.bf16.mxu0 0
  %1363 = vmatmul.mubr.bf16.gmra.mrb[0].mxu0 %v1249
  %v1364 = vpop.f32.mrb[0].mxu0
  %v1365 = vadd.f32 0.0, %v1364
  %v1366 = vpop.f32.mrb[0].mxu0
  %v1367 = vadd.f32 0.0, %v1366
  %v1368 = vpop.f32.mrb[0].mxu0
  %v1369 = vpop.f32.mrb[0].mxu0
  %1370 = vdwg.mxu0
  %v1371 = vadd.f32 %v1253, %v1324
  %v1372 = vadd.f32 %v1254, %v1326
  %v1373 = vadd.f32 %v1255, %v1365
  %v1374 = vadd.f32 %v1256, %v1367
  %v1375 = vxor.u32 %v1371, 2147483648
  %v1376 = vmul.f32 %v1375, 1.442695
  %v1377 = vpow.pop %v1376
  %v1378 = vadd.f32 %v1377, 1.0
  %v1379 = vrcp.pop %v1378
  %v1380 = vmul.f32 1.0, %v1379
  %v1381 = vxor.u32 %v1372, 2147483648
  %v1382 = vmul.f32 %v1381, 1.442695
  %v1383 = vpow.pop %v1382
  %v1384 = vadd.f32 %v1383, 1.0
  %v1385 = vrcp.pop %v1384
  %v1386 = vmul.f32 1.0, %v1385
  %v1387 = vtanh.pop %v1373
  %v1388 = vxor.u32 %v1374, 2147483648
  %v1389 = vmul.f32 %v1388, 1.442695
  %v1390 = vpow.pop %v1389
  %v1391 = vadd.f32 %v1390, 1.0
  %v1392 = vrcp.pop %v1391
  %v1393 = vmul.f32 1.0, %v1392
  %v1394 = vmul.f32 %v1386, %v1246
  %v1395 = vmul.f32 %v1380, %v1387
  %v1396 = vadd.f32 %v1394, %v1395
  %v1397 = vtanh.pop %v1396
  %v1398 = vmul.f32 %v1393, %v1397
  %v1399 = vpack.c.bf16 %v1398, %v1398
  %s1400 = scalar_lea.vmem %s4, 16
  %1401 = vst [vmem:[%s1400] sm:$0xf] %v1399
  %s1402 = scalar_lea.vmem [#allocation4], 160
  %v1403 = vld [vmem:[%s1402] sm:$0xff]
  %v1404 = vld [vmem:[%s1402 + $0x8] sm:$0xff]
  %v1405 = vld [vmem:[%s1402 + $0x10] sm:$0xff]
  %v1406 = vld [vmem:[%s1402 + $0x18] sm:$0xff]
  %v1407 = vld [vmem:[#allocation6] sm:$0xff]
  %v1408 = vld [vmem:[#allocation6 + $0x8] sm:$0xff]
  %v1409 = vld [vmem:[#allocation6 + $0x10] sm:$0xff]
  %v1410 = vld [vmem:[#allocation6 + $0x18] sm:$0xff]
  %v1411 = vld [vmem:[#allocation6 + $0x20] sm:$0xff]
  %v1412 = vld [vmem:[#allocation6 + $0x28] sm:$0xff]
  %v1413 = vld [vmem:[#allocation6 + $0x30] sm:$0xff]
  %v1414 = vld [vmem:[#allocation6 + $0x38] sm:$0xff]
  %v1415 = vld [vmem:[#allocation6 + $0x40] sm:$0xff]
  %v1416 = vld [vmem:[#allocation6 + $0x48] sm:$0xff]
  %v1417 = vld [vmem:[#allocation6 + $0x50] sm:$0xff]
  %v1418 = vld [vmem:[#allocation6 + $0x58] sm:$0xff]
  %v1419 = vld [vmem:[#allocation6 + $0x60] sm:$0xff]
  %v1420 = vld [vmem:[#allocation6 + $0x68] sm:$0xff]
  %v1421 = vld [vmem:[#allocation6 + $0x70] sm:$0xff]
  %v1422 = vld [vmem:[#allocation6 + $0x78] sm:$0xff]
  %v1423 = vld [vmem:[#allocation6 + $0x80] sm:$0xff]
  %v1424 = vld [vmem:[#allocation6 + $0x88] sm:$0xff]
  %v1425 = vld [vmem:[#allocation6 + $0x90] sm:$0xff]
  %v1426 = vld [vmem:[#allocation6 + $0x98] sm:$0xff]
  %v1427 = vld [vmem:[#allocation6 + $0xa0] sm:$0xff]
  %v1428 = vld [vmem:[#allocation6 + $0xa8] sm:$0xff]
  %v1429 = vld [vmem:[#allocation6 + $0xb0] sm:$0xff]
  %v1430 = vld [vmem:[#allocation6 + $0xb8] sm:$0xff]
  %v1431 = vld [vmem:[#allocation6 + $0xc0] sm:$0xff]
  %v1432 = vld [vmem:[#allocation6 + $0xc8] sm:$0xff]
  %v1433 = vld [vmem:[#allocation6 + $0xd0] sm:$0xff]
  %v1434 = vld [vmem:[#allocation6 + $0xd8] sm:$0xff]
  %v1435 = vld [vmem:[#allocation6 + $0xe0] sm:$0xff]
  %v1436 = vld [vmem:[#allocation6 + $0xe8] sm:$0xff]
  %v1437 = vld [vmem:[#allocation6 + $0xf0] sm:$0xff]
  %v1438 = vld [vmem:[#allocation6 + $0xf8] sm:$0xff]
  %1439 = vmatprep.subr.bf16.mxu0 %v1408
  %1440 = vmatpush1.bf16.msra.mxu0 %v1407
  %1441 = vmatprep.subr.bf16.mxu0 %v1412
  %1442 = vmatpush1.bf16.msra.mxu0 %v1411
  %1443 = vmatprep.subr.bf16.mxu0 %v1416
  %1444 = vmatpush1.bf16.msra.mxu0 %v1415
  %1445 = vmatprep.subr.bf16.mxu0 %v1420
  %1446 = vmatpush1.bf16.msra.mxu0 %v1419
  %1447 = vmatprep.subr.bf16.mxu0 %v1424
  %1448 = vmatpush1.bf16.msra.mxu0 %v1423
  %1449 = vmatprep.subr.bf16.mxu0 %v1428
  %1450 = vmatpush1.bf16.msra.mxu0 %v1427
  %1451 = vmatprep.subr.bf16.mxu0 %v1432
  %1452 = vmatpush1.bf16.msra.mxu0 %v1431
  %1453 = vmatprep.subr.bf16.mxu0 %v1436
  %1454 = vmatpush1.bf16.msra.mxu0 %v1435
  %1455 = vmatprep.subr.bf16.mxu0 0
  %1456 = vmatpush1.bf16.msra.mxu0 0
  %1457 = vmatprep.subr.bf16.mxu0 0
  %1458 = vmatpush1.bf16.msra.mxu0 0
  %1459 = vmatprep.subr.bf16.mxu0 0
  %1460 = vmatpush1.bf16.msra.mxu0 0
  %1461 = vmatprep.subr.bf16.mxu0 0
  %1462 = vmatpush1.bf16.msra.mxu0 0
  %1463 = vmatprep.subr.bf16.mxu0 0
  %1464 = vmatpush1.bf16.msra.mxu0 0
  %1465 = vmatprep.subr.bf16.mxu0 0
  %1466 = vmatpush1.bf16.msra.mxu0 0
  %1467 = vmatprep.subr.bf16.mxu0 0
  %1468 = vmatpush1.bf16.msra.mxu0 0
  %1469 = vmatprep.subr.bf16.mxu0 0
  %1470 = vmatpush1.bf16.msra.mxu0 0
  %1471 = vmatprep.mubr.bf16.mxu0 0
  %1472 = vmatmul.mubr.bf16.gmra.mrb[0].mxu0 %v1399
  %v1473 = vpop.f32.mrb[0].mxu0
  %v1474 = vadd.f32 0.0, %v1473
  %v1475 = vpop.f32.mrb[0].mxu0
  %v1476 = vadd.f32 0.0, %v1475
  %v1477 = vpop.f32.mrb[0].mxu0
  %v1478 = vpop.f32.mrb[0].mxu0
  %1479 = vdwg.mxu0
  %1480 = vmatprep.subr.bf16.mxu0 %v1410
  %1481 = vmatpush1.bf16.msra.mxu0 %v1409
  %1482 = vmatprep.subr.bf16.mxu0 %v1414
  %1483 = vmatpush1.bf16.msra.mxu0 %v1413
  %1484 = vmatprep.subr.bf16.mxu0 %v1418
  %1485 = vmatpush1.bf16.msra.mxu0 %v1417
  %1486 = vmatprep.subr.bf16.mxu0 %v1422
  %1487 = vmatpush1.bf16.msra.mxu0 %v1421
  %1488 = vmatprep.subr.bf16.mxu0 %v1426
  %1489 = vmatpush1.bf16.msra.mxu0 %v1425
  %1490 = vmatprep.subr.bf16.mxu0 %v1430
  %1491 = vmatpush1.bf16.msra.mxu0 %v1429
  %1492 = vmatprep.subr.bf16.mxu0 %v1434
  %1493 = vmatpush1.bf16.msra.mxu0 %v1433
  %1494 = vmatprep.subr.bf16.mxu0 %v1438
  %1495 = vmatpush1.bf16.msra.mxu0 %v1437
  %1496 = vmatprep.subr.bf16.mxu0 0
  %1497 = vmatpush1.bf16.msra.mxu0 0
  %1498 = vmatprep.subr.bf16.mxu0 0
  %1499 = vmatpush1.bf16.msra.mxu0 0
  %1500 = vmatprep.subr.bf16.mxu0 0
  %1501 = vmatpush1.bf16.msra.mxu0 0
  %1502 = vmatprep.subr.bf16.mxu0 0
  %1503 = vmatpush1.bf16.msra.mxu0 0
  %1504 = vmatprep.subr.bf16.mxu0 0
  %1505 = vmatpush1.bf16.msra.mxu0 0
  %1506 = vmatprep.subr.bf16.mxu0 0
  %1507 = vmatpush1.bf16.msra.mxu0 0
  %1508 = vmatprep.subr.bf16.mxu0 0
  %1509 = vmatpush1.bf16.msra.mxu0 0
  %1510 = vmatprep.subr.bf16.mxu0 0
  %1511 = vmatpush1.bf16.msra.mxu0 0
  %1512 = vmatprep.mubr.bf16.mxu0 0
  %1513 = vmatmul.mubr.bf16.gmra.mrb[0].mxu0 %v1399
  %v1514 = vpop.f32.mrb[0].mxu0
  %v1515 = vadd.f32 0.0, %v1514
  %v1516 = vpop.f32.mrb[0].mxu0
  %v1517 = vadd.f32 0.0, %v1516
  %v1518 = vpop.f32.mrb[0].mxu0
  %v1519 = vpop.f32.mrb[0].mxu0
  %1520 = vdwg.mxu0
  %v1521 = vadd.f32 %v1403, %v1474
  %v1522 = vadd.f32 %v1404, %v1476
  %v1523 = vadd.f32 %v1405, %v1515
  %v1524 = vadd.f32 %v1406, %v1517
  %v1525 = vxor.u32 %v1521, 2147483648
  %v1526 = vmul.f32 %v1525, 1.442695
  %v1527 = vpow.pop %v1526
  %v1528 = vadd.f32 %v1527, 1.0
  %v1529 = vrcp.pop %v1528
  %v1530 = vmul.f32 1.0, %v1529
  %v1531 = vxor.u32 %v1522, 2147483648
  %v1532 = vmul.f32 %v1531, 1.442695
  %v1533 = vpow.pop %v1532
  %v1534 = vadd.f32 %v1533, 1.0
  %v1535 = vrcp.pop %v1534
  %v1536 = vmul.f32 1.0, %v1535
  %v1537 = vtanh.pop %v1523
  %v1538 = vxor.u32 %v1524, 2147483648
  %v1539 = vmul.f32 %v1538, 1.442695
  %v1540 = vpow.pop %v1539
  %v1541 = vadd.f32 %v1540, 1.0
  %v1542 = vrcp.pop %v1541
  %v1543 = vmul.f32 1.0, %v1542
  %v1544 = vmul.f32 %v1536, %v1396
  %v1545 = vmul.f32 %v1530, %v1537
  %v1546 = vadd.f32 %v1544, %v1545
  %v1547 = vtanh.pop %v1546
  %v1548 = vmul.f32 %v1543, %v1547
  %v1549 = vpack.c.bf16 %v1548, %v1548
  %s1550 = scalar_lea.vmem %s4, 20
  %1551 = vst [vmem:[%s1550] sm:$0xf] %v1549
  %s1552 = scalar_lea.vmem [#allocation4], 192
  %v1553 = vld [vmem:[%s1552] sm:$0xff]
  %v1554 = vld [vmem:[%s1552 + $0x8] sm:$0xff]
  %v1555 = vld [vmem:[%s1552 + $0x10] sm:$0xff]
  %v1556 = vld [vmem:[%s1552 + $0x18] sm:$0xff]
  %v1557 = vld [vmem:[#allocation6] sm:$0xff]
  %v1558 = vld [vmem:[#allocation6 + $0x8] sm:$0xff]
  %v1559 = vld [vmem:[#allocation6 + $0x10] sm:$0xff]
  %v1560 = vld [vmem:[#allocation6 + $0x18] sm:$0xff]
  %v1561 = vld [vmem:[#allocation6 + $0x20] sm:$0xff]
  %v1562 = vld [vmem:[#allocation6 + $0x28] sm:$0xff]
  %v1563 = vld [vmem:[#allocation6 + $0x30] sm:$0xff]
  %v1564 = vld [vmem:[#allocation6 + $0x38] sm:$0xff]
  %v1565 = vld [vmem:[#allocation6 + $0x40] sm:$0xff]
  %v1566 = vld [vmem:[#allocation6 + $0x48] sm:$0xff]
  %v1567 = vld [vmem:[#allocation6 + $0x50] sm:$0xff]
  %v1568 = vld [vmem:[#allocation6 + $0x58] sm:$0xff]
  %v1569 = vld [vmem:[#allocation6 + $0x60] sm:$0xff]
  %v1570 = vld [vmem:[#allocation6 + $0x68] sm:$0xff]
  %v1571 = vld [vmem:[#allocation6 + $0x70] sm:$0xff]
  %v1572 = vld [vmem:[#allocation6 + $0x78] sm:$0xff]
  %v1573 = vld [vmem:[#allocation6 + $0x80] sm:$0xff]
  %v1574 = vld [vmem:[#allocation6 + $0x88] sm:$0xff]
  %v1575 = vld [vmem:[#allocation6 + $0x90] sm:$0xff]
  %v1576 = vld [vmem:[#allocation6 + $0x98] sm:$0xff]
  %v1577 = vld [vmem:[#allocation6 + $0xa0] sm:$0xff]
  %v1578 = vld [vmem:[#allocation6 + $0xa8] sm:$0xff]
  %v1579 = vld [vmem:[#allocation6 + $0xb0] sm:$0xff]
  %v1580 = vld [vmem:[#allocation6 + $0xb8] sm:$0xff]
  %v1581 = vld [vmem:[#allocation6 + $0xc0] sm:$0xff]
  %v1582 = vld [vmem:[#allocation6 + $0xc8] sm:$0xff]
  %v1583 = vld [vmem:[#allocation6 + $0xd0] sm:$0xff]
  %v1584 = vld [vmem:[#allocation6 + $0xd8] sm:$0xff]
  %v1585 = vld [vmem:[#allocation6 + $0xe0] sm:$0xff]
  %v1586 = vld [vmem:[#allocation6 + $0xe8] sm:$0xff]
  %v1587 = vld [vmem:[#allocation6 + $0xf0] sm:$0xff]
  %v1588 = vld [vmem:[#allocation6 + $0xf8] sm:$0xff]
  %1589 = vmatprep.subr.bf16.mxu0 %v1558
  %1590 = vmatpush1.bf16.msra.mxu0 %v1557
  %1591 = vmatprep.subr.bf16.mxu0 %v1562
  %1592 = vmatpush1.bf16.msra.mxu0 %v1561
  %1593 = vmatprep.subr.bf16.mxu0 %v1566
  %1594 = vmatpush1.bf16.msra.mxu0 %v1565
  %1595 = vmatprep.subr.bf16.mxu0 %v1570
  %1596 = vmatpush1.bf16.msra.mxu0 %v1569
  %1597 = vmatprep.subr.bf16.mxu0 %v1574
  %1598 = vmatpush1.bf16.msra.mxu0 %v1573
  %1599 = vmatprep.subr.bf16.mxu0 %v1578
  %1600 = vmatpush1.bf16.msra.mxu0 %v1577
  %1601 = vmatprep.subr.bf16.mxu0 %v1582
  %1602 = vmatpush1.bf16.msra.mxu0 %v1581
  %1603 = vmatprep.subr.bf16.mxu0 %v1586
  %1604 = vmatpush1.bf16.msra.mxu0 %v1585
  %1605 = vmatprep.subr.bf16.mxu0 0
  %1606 = vmatpush1.bf16.msra.mxu0 0
  %1607 = vmatprep.subr.bf16.mxu0 0
  %1608 = vmatpush1.bf16.msra.mxu0 0
  %1609 = vmatprep.subr.bf16.mxu0 0
  %1610 = vmatpush1.bf16.msra.mxu0 0
  %1611 = vmatprep.subr.bf16.mxu0 0
  %1612 = vmatpush1.bf16.msra.mxu0 0
  %1613 = vmatprep.subr.bf16.mxu0 0
  %1614 = vmatpush1.bf16.msra.mxu0 0
  %1615 = vmatprep.subr.bf16.mxu0 0
  %1616 = vmatpush1.bf16.msra.mxu0 0
  %1617 = vmatprep.subr.bf16.mxu0 0
  %1618 = vmatpush1.bf16.msra.mxu0 0
  %1619 = vmatprep.subr.bf16.mxu0 0
  %1620 = vmatpush1.bf16.msra.mxu0 0
  %1621 = vmatprep.mubr.bf16.mxu0 0
  %1622 = vmatmul.mubr.bf16.gmra.mrb[0].mxu0 %v1549
  %v1623 = vpop.f32.mrb[0].mxu0
  %v1624 = vadd.f32 0.0, %v1623
  %v1625 = vpop.f32.mrb[0].mxu0
  %v1626 = vadd.f32 0.0, %v1625
  %v1627 = vpop.f32.mrb[0].mxu0
  %v1628 = vpop.f32.mrb[0].mxu0
  %1629 = vdwg.mxu0
  %1630 = vmatprep.subr.bf16.mxu0 %v1560
  %1631 = vmatpush1.bf16.msra.mxu0 %v1559
  %1632 = vmatprep.subr.bf16.mxu0 %v1564
  %1633 = vmatpush1.bf16.msra.mxu0 %v1563
  %1634 = vmatprep.subr.bf16.mxu0 %v1568
  %1635 = vmatpush1.bf16.msra.mxu0 %v1567
  %1636 = vmatprep.subr.bf16.mxu0 %v1572
  %1637 = vmatpush1.bf16.msra.mxu0 %v1571
  %1638 = vmatprep.subr.bf16.mxu0 %v1576
  %1639 = vmatpush1.bf16.msra.mxu0 %v1575
  %1640 = vmatprep.subr.bf16.mxu0 %v1580
  %1641 = vmatpush1.bf16.msra.mxu0 %v1579
  %1642 = vmatprep.subr.bf16.mxu0 %v1584
  %1643 = vmatpush1.bf16.msra.mxu0 %v1583
  %1644 = vmatprep.subr.bf16.mxu0 %v1588
  %1645 = vmatpush1.bf16.msra.mxu0 %v1587
  %1646 = vmatprep.subr.bf16.mxu0 0
  %1647 = vmatpush1.bf16.msra.mxu0 0
  %1648 = vmatprep.subr.bf16.mxu0 0
  %1649 = vmatpush1.bf16.msra.mxu0 0
  %1650 = vmatprep.subr.bf16.mxu0 0
  %1651 = vmatpush1.bf16.msra.mxu0 0
  %1652 = vmatprep.subr.bf16.mxu0 0
  %1653 = vmatpush1.bf16.msra.mxu0 0
  %1654 = vmatprep.subr.bf16.mxu0 0
  %1655 = vmatpush1.bf16.msra.mxu0 0
  %1656 = vmatprep.subr.bf16.mxu0 0
  %1657 = vmatpush1.bf16.msra.mxu0 0
  %1658 = vmatprep.subr.bf16.mxu0 0
  %1659 = vmatpush1.bf16.msra.mxu0 0
  %1660 = vmatprep.subr.bf16.mxu0 0
  %1661 = vmatpush1.bf16.msra.mxu0 0
  %1662 = vmatprep.mubr.bf16.mxu0 0
  %1663 = vmatmul.mubr.bf16.gmra.mrb[0].mxu0 %v1549
  %v1664 = vpop.f32.mrb[0].mxu0
  %v1665 = vadd.f32 0.0, %v1664
  %v1666 = vpop.f32.mrb[0].mxu0
  %v1667 = vadd.f32 0.0, %v1666
  %v1668 = vpop.f32.mrb[0].mxu0
  %v1669 = vpop.f32.mrb[0].mxu0
  %1670 = vdwg.mxu0
  %v1671 = vadd.f32 %v1553, %v1624
  %v1672 = vadd.f32 %v1554, %v1626
  %v1673 = vadd.f32 %v1555, %v1665
  %v1674 = vadd.f32 %v1556, %v1667
  %v1675 = vxor.u32 %v1671, 2147483648
  %v1676 = vmul.f32 %v1675, 1.442695
  %v1677 = vpow.pop %v1676
  %v1678 = vadd.f32 %v1677, 1.0
  %v1679 = vrcp.pop %v1678
  %v1680 = vmul.f32 1.0, %v1679
  %v1681 = vxor.u32 %v1672, 2147483648
  %v1682 = vmul.f32 %v1681, 1.442695
  %v1683 = vpow.pop %v1682
  %v1684 = vadd.f32 %v1683, 1.0
  %v1685 = vrcp.pop %v1684
  %v1686 = vmul.f32 1.0, %v1685
  %v1687 = vtanh.pop %v1673
  %v1688 = vxor.u32 %v1674, 2147483648
  %v1689 = vmul.f32 %v1688, 1.442695
  %v1690 = vpow.pop %v1689
  %v1691 = vadd.f32 %v1690, 1.0
  %v1692 = vrcp.pop %v1691
  %v1693 = vmul.f32 1.0, %v1692
  %v1694 = vmul.f32 %v1686, %v1546
  %v1695 = vmul.f32 %v1680, %v1687
  %v1696 = vadd.f32 %v1694, %v1695
  %v1697 = vtanh.pop %v1696
  %v1698 = vmul.f32 %v1693, %v1697
  %v1699 = vpack.c.bf16 %v1698, %v1698
  %s1700 = scalar_lea.vmem %s4, 24
  %1701 = vst [vmem:[%s1700] sm:$0xf] %v1699
  %s1702 = scalar_lea.vmem [#allocation4], 224
  %v1703 = vld [vmem:[%s1702] sm:$0xff]
  %v1704 = vld [vmem:[%s1702 + $0x8] sm:$0xff]
  %v1705 = vld [vmem:[%s1702 + $0x10] sm:$0xff]
  %v1706 = vld [vmem:[%s1702 + $0x18] sm:$0xff]
  %v1707 = vld [vmem:[#allocation6] sm:$0xff]
  %v1708 = vld [vmem:[#allocation6 + $0x8] sm:$0xff]
  %v1709 = vld [vmem:[#allocation6 + $0x10] sm:$0xff]
  %v1710 = vld [vmem:[#allocation6 + $0x18] sm:$0xff]
  %v1711 = vld [vmem:[#allocation6 + $0x20] sm:$0xff]
  %v1712 = vld [vmem:[#allocation6 + $0x28] sm:$0xff]
  %v1713 = vld [vmem:[#allocation6 + $0x30] sm:$0xff]
  %v1714 = vld [vmem:[#allocation6 + $0x38] sm:$0xff]
  %v1715 = vld [vmem:[#allocation6 + $0x40] sm:$0xff]
  %v1716 = vld [vmem:[#allocation6 + $0x48] sm:$0xff]
  %v1717 = vld [vmem:[#allocation6 + $0x50] sm:$0xff]
  %v1718 = vld [vmem:[#allocation6 + $0x58] sm:$0xff]
  %v1719 = vld [vmem:[#allocation6 + $0x60] sm:$0xff]
  %v1720 = vld [vmem:[#allocation6 + $0x68] sm:$0xff]
  %v1721 = vld [vmem:[#allocation6 + $0x70] sm:$0xff]
  %v1722 = vld [vmem:[#allocation6 + $0x78] sm:$0xff]
  %v1723 = vld [vmem:[#allocation6 + $0x80] sm:$0xff]
  %v1724 = vld [vmem:[#allocation6 + $0x88] sm:$0xff]
  %v1725 = vld [vmem:[#allocation6 + $0x90] sm:$0xff]
  %v1726 = vld [vmem:[#allocation6 + $0x98] sm:$0xff]
  %v1727 = vld [vmem:[#allocation6 + $0xa0] sm:$0xff]
  %v1728 = vld [vmem:[#allocation6 + $0xa8] sm:$0xff]
  %v1729 = vld [vmem:[#allocation6 + $0xb0] sm:$0xff]
  %v1730 = vld [vmem:[#allocation6 + $0xb8] sm:$0xff]
  %v1731 = vld [vmem:[#allocation6 + $0xc0] sm:$0xff]
  %v1732 = vld [vmem:[#allocation6 + $0xc8] sm:$0xff]
  %v1733 = vld [vmem:[#allocation6 + $0xd0] sm:$0xff]
  %v1734 = vld [vmem:[#allocation6 + $0xd8] sm:$0xff]
  %v1735 = vld [vmem:[#allocation6 + $0xe0] sm:$0xff]
  %v1736 = vld [vmem:[#allocation6 + $0xe8] sm:$0xff]
  %v1737 = vld [vmem:[#allocation6 + $0xf0] sm:$0xff]
  %v1738 = vld [vmem:[#allocation6 + $0xf8] sm:$0xff]
  %1739 = vmatprep.subr.bf16.mxu0 %v1708
  %1740 = vmatpush1.bf16.msra.mxu0 %v1707
  %1741 = vmatprep.subr.bf16.mxu0 %v1712
  %1742 = vmatpush1.bf16.msra.mxu0 %v1711
  %1743 = vmatprep.subr.bf16.mxu0 %v1716
  %1744 = vmatpush1.bf16.msra.mxu0 %v1715
  %1745 = vmatprep.subr.bf16.mxu0 %v1720
  %1746 = vmatpush1.bf16.msra.mxu0 %v1719
  %1747 = vmatprep.subr.bf16.mxu0 %v1724
  %1748 = vmatpush1.bf16.msra.mxu0 %v1723
  %1749 = vmatprep.subr.bf16.mxu0 %v1728
  %1750 = vmatpush1.bf16.msra.mxu0 %v1727
  %1751 = vmatprep.subr.bf16.mxu0 %v1732
  %1752 = vmatpush1.bf16.msra.mxu0 %v1731
  %1753 = vmatprep.subr.bf16.mxu0 %v1736
  %1754 = vmatpush1.bf16.msra.mxu0 %v1735
  %1755 = vmatprep.subr.bf16.mxu0 0
  %1756 = vmatpush1.bf16.msra.mxu0 0
  %1757 = vmatprep.subr.bf16.mxu0 0
  %1758 = vmatpush1.bf16.msra.mxu0 0
  %1759 = vmatprep.subr.bf16.mxu0 0
  %1760 = vmatpush1.bf16.msra.mxu0 0
  %1761 = vmatprep.subr.bf16.mxu0 0
  %1762 = vmatpush1.bf16.msra.mxu0 0
  %1763 = vmatprep.subr.bf16.mxu0 0
  %1764 = vmatpush1.bf16.msra.mxu0 0
  %1765 = vmatprep.subr.bf16.mxu0 0
  %1766 = vmatpush1.bf16.msra.mxu0 0
  %1767 = vmatprep.subr.bf16.mxu0 0
  %1768 = vmatpush1.bf16.msra.mxu0 0
  %1769 = vmatprep.subr.bf16.mxu0 0
  %1770 = vmatpush1.bf16.msra.mxu0 0
  %1771 = vmatprep.mubr.bf16.mxu0 0
  %1772 = vmatmul.mubr.bf16.gmra.mrb[0].mxu0 %v1699
  %v1773 = vpop.f32.mrb[0].mxu0
  %v1774 = vadd.f32 0.0, %v1773
  %v1775 = vpop.f32.mrb[0].mxu0
  %v1776 = vadd.f32 0.0, %v1775
  %v1777 = vpop.f32.mrb[0].mxu0
  %v1778 = vpop.f32.mrb[0].mxu0
  %1779 = vdwg.mxu0
  %1780 = vmatprep.subr.bf16.mxu0 %v1710
  %1781 = vmatpush1.bf16.msra.mxu0 %v1709
  %1782 = vmatprep.subr.bf16.mxu0 %v1714
  %1783 = vmatpush1.bf16.msra.mxu0 %v1713
  %1784 = vmatprep.subr.bf16.mxu0 %v1718
  %1785 = vmatpush1.bf16.msra.mxu0 %v1717
  %1786 = vmatprep.subr.bf16.mxu0 %v1722
  %1787 = vmatpush1.bf16.msra.mxu0 %v1721
  %1788 = vmatprep.subr.bf16.mxu0 %v1726
  %1789 = vmatpush1.bf16.msra.mxu0 %v1725
  %1790 = vmatprep.subr.bf16.mxu0 %v1730
  %1791 = vmatpush1.bf16.msra.mxu0 %v1729
  %1792 = vmatprep.subr.bf16.mxu0 %v1734
  %1793 = vmatpush1.bf16.msra.mxu0 %v1733
  %1794 = vmatprep.subr.bf16.mxu0 %v1738
  %1795 = vmatpush1.bf16.msra.mxu0 %v1737
  %1796 = vmatprep.subr.bf16.mxu0 0
  %1797 = vmatpush1.bf16.msra.mxu0 0
  %1798 = vmatprep.subr.bf16.mxu0 0
  %1799 = vmatpush1.bf16.msra.mxu0 0
  %1800 = vmatprep.subr.bf16.mxu0 0
  %1801 = vmatpush1.bf16.msra.mxu0 0
  %1802 = vmatprep.subr.bf16.mxu0 0
  %1803 = vmatpush1.bf16.msra.mxu0 0
  %1804 = vmatprep.subr.bf16.mxu0 0
  %1805 = vmatpush1.bf16.msra.mxu0 0
  %1806 = vmatprep.subr.bf16.mxu0 0
  %1807 = vmatpush1.bf16.msra.mxu0 0
  %1808 = vmatprep.subr.bf16.mxu0 0
  %1809 = vmatpush1.bf16.msra.mxu0 0
  %1810 = vmatprep.subr.bf16.mxu0 0
  %1811 = vmatpush1.bf16.msra.mxu0 0
  %1812 = vmatprep.mubr.bf16.mxu0 0
  %1813 = vmatmul.mubr.bf16.gmra.mrb[0].mxu0 %v1699
  %v1814 = vpop.f32.mrb[0].mxu0
  %v1815 = vadd.f32 0.0, %v1814
  %v1816 = vpop.f32.mrb[0].mxu0
  %v1817 = vadd.f32 0.0, %v1816
  %v1818 = vpop.f32.mrb[0].mxu0
  %v1819 = vpop.f32.mrb[0].mxu0
  %1820 = vdwg.mxu0
  %v1821 = vadd.f32 %v1703, %v1774
  %v1822 = vadd.f32 %v1704, %v1776
  %v1823 = vadd.f32 %v1705, %v1815
  %v1824 = vadd.f32 %v1706, %v1817
  %v1825 = vxor.u32 %v1821, 2147483648
  %v1826 = vmul.f32 %v1825, 1.442695
  %v1827 = vpow.pop %v1826
  %v1828 = vadd.f32 %v1827, 1.0
  %v1829 = vrcp.pop %v1828
  %v1830 = vmul.f32 1.0, %v1829
  %v1831 = vxor.u32 %v1822, 2147483648
  %v1832 = vmul.f32 %v1831, 1.442695
  %v1833 = vpow.pop %v1832
  %v1834 = vadd.f32 %v1833, 1.0
  %v1835 = vrcp.pop %v1834
  %v1836 = vmul.f32 1.0, %v1835
  %v1837 = vtanh.pop %v1823
  %v1838 = vxor.u32 %v1824, 2147483648
  %v1839 = vmul.f32 %v1838, 1.442695
  %v1840 = vpow.pop %v1839
  %v1841 = vadd.f32 %v1840, 1.0
  %v1842 = vrcp.pop %v1841
  %v1843 = vmul.f32 1.0, %v1842
  %v1844 = vmul.f32 %v1836, %v1696
  %v1845 = vmul.f32 %v1830, %v1837
  %v1846 = vadd.f32 %v1844, %v1845
  %v1847 = vtanh.pop %v1846
  %v1848 = vmul.f32 %v1843, %v1847
  %v1849 = vpack.c.bf16 %v1848, %v1848
  %s1850 = scalar_lea.vmem %s4, 28
  %1851 = vst [vmem:[%s1850] sm:$0xf] %v1849
  %1852 = vst [vmem:[#allocation2] sm:$0xff] %v1848
  %1853 = vst [vmem:[#allocation3] sm:$0xff] %v1846
  // Predicated region
  $region85: #{encoder_forward.2} parent=0 // pred_check
    %p1854 = pneg %p17
  $region86: #{encoder_forward.2} parent=0 // pred_check_branch
    %1856 = sbr.rel (%p1854) target = $region88
  $region87: #{encoder_forward.2} parent=0 // pred_region
    %1857 = vst [vmem:[%s5] sm:$0xff] %v1848
    %1858 = vst [vmem:[%s6] sm:$0xff] %v1846
  $region88: #{encoder_forward.2} parent=0 // pred_fallthru
    _
  // Predicated region
  $region89: #{encoder_forward.2} parent=0 // pred_check
    _
  $region90: #{encoder_forward.2} parent=0 // pred_check_branch
    %1860 = sbr.rel (0) target = $region92
  $region91: #{encoder_forward.2} parent=0 // pred_region
    _
  $region92: #{encoder_forward.2} parent=0 // pred_fallthru
    _
  // Predicated region
  $region93: #{encoder_forward.2} parent=0 // pred_check
    _
  $region94: #{encoder_forward.2} parent=0 // pred_check_branch
    %1862 = sbr.rel (0) target = $region96
  $region95: #{encoder_forward.2} parent=0 // pred_region
    _
  $region96: #{encoder_forward.2} parent=0 // pred_fallthru
    _
  // Predicated region
  $region97: #{encoder_forward.2} parent=0 // pred_check
    _
  $region98: #{encoder_forward.2} parent=0 // pred_check_branch
    %1864 = sbr.rel (0) target = $region100
  $region99: #{encoder_forward.2} parent=0 // pred_region
    _
  $region100: #{encoder_forward.2} parent=0 // pred_fallthru
    _
  // Predicated region
  $region101: #{encoder_forward.2} parent=0 // pred_check
    _
  $region102: #{encoder_forward.2} parent=0 // pred_check_branch
    %1866 = sbr.rel (0) target = $region104
  $region103: #{encoder_forward.2} parent=0 // pred_region
    _
  $region104: #{encoder_forward.2} parent=0 // pred_fallthru
    _
  // Predicated region
  $region105: #{encoder_forward.2} parent=0 // pred_check
    _
  $region106: #{encoder_forward.2} parent=0 // pred_check_branch
    %1868 = sbr.rel (0) target = $region108
  $region107: #{encoder_forward.2} parent=0 // pred_region
    _
  $region108: #{encoder_forward.2} parent=0 // pred_fallthru
    _
  // Predicated region
  $region109: #{encoder_forward.2} parent=0 // pred_check
    _
  $region110: #{encoder_forward.2} parent=0 // pred_check_branch
    %1870 = sbr.rel (0) target = $region112
  $region111: #{encoder_forward.2} parent=0 // pred_region
    _
  $region112: #{encoder_forward.2} parent=0 // pred_fallthru
    _
  %1871 = vsyncmov [#allocation7]
  %s1872 = vpop.sfrf %1871
  %p1873 = scmp.eq.s32.totalorder %s1872, 0
  %p1874 = pneg %p1873
  %1876 = shalt.err (%p1874)
  %s1877 = scalar_lea.sflag [#allocation7], 1
  %1878 = vsyncmov %s1877
  %s1879 = vpop.sfrf %1878
  %p1880 = scmp.eq.s32.totalorder %s1879, 0
  %p1881 = pneg %p1880
  %1883 = shalt.err (%p1881)

// kernel: encoder_forward.3
$region0: #{encoder_forward.3}
  #allocation0 [shape = 'u32[]', space=smem, size = 0x4, offset = 0x4, fixed_abs, tag = 'smem constant byte address 0x4 - core index']
  #allocation1 [shape = 'u32[144,128]{1,0:T(1,128)}', space=vmem, size = 0x12000, scoped, tag = 'internal scratch']
  #allocation2 [shape = 'f32[8,128]{1,0:T(8,128)}', space=vmem, size = 0x1000, scoped, tag = 'scratch operand']
  #allocation3 [shape = 'f32[8,128]{1,0:T(8,128)}', space=vmem, size = 0x1000, scoped, tag = 'scratch operand']
  #allocation4 [shape = 'f32[8,8,512]{2,1,0:T(8,128)}', space=vmem, size = 0x20000, scoped, tag = 'scratch operand']
  #allocation5 [shape = 'bf16[128,512]{1,0:T(16,128)(2,1)}', space=vmem, size = 0x20000, scoped, tag = 'scratch operand']
  #allocation6 [shape = 'bf16[128,512]{1,0:T(16,128)(2,1)}', space=vmem, size = 0x20000, scoped, tag = 'scratch operand']
  #allocation7 [shape = 's32[2]{0}', space=sflag, size = 0x8, scoped, tag = 'scratch operand']
  #allocation10 [shape = 's32[]', space=sflag, size = 0x4, offset = 0, fixed_abs, tag = 'sflag constant byte address 0x0 - dummy sync flag']
  #allocation11 [shape = 's32[]', space=sflag, size = 0x4, offset = 0, fixed_abs, tag = 'sflag constant byte address 0x0 - dummy sync flag']
  %s0 = inlined_call_operand.vmem [shape: bf16[8,8,128], index: 0, kind: input, shape index: {}]
  %s1 = inlined_call_operand.vmem [shape: bf16[128,512], index: 1, kind: input, shape index: {}]
  %s2 = inlined_call_operand.vmem [shape: bf16[128,512], index: 2, kind: input, shape index: {}]
  %s3 = inlined_call_operand.vmem [shape: f32[1,512], index: 3, kind: input, shape index: {}]
  %s4 = inlined_call_operand.hbm [shape: bf16[8,8,128], index: 4, kind: output, shape index: {0}]
  %s5 = inlined_call_operand.vmem [shape: f32[8,128], index: 5, kind: output, shape index: {1}]
  %s6 = inlined_call_operand.vmem [shape: f32[8,128], index: 6, kind: output, shape index: {2}]
  %7 = xla_tuple %s4, %s5, %s6
  %s8 = sld [smem:[#allocation0]]
  $region116: #{encoder_forward.3} parent=0
    _
  %s10 = ssub.s32 1, %s8
  %s11 = scalar_select 0, %s10, %s8
  $region1: #{encoder_forward.3} parent=0
    #allocation8 [shape = 'u8[16384]{0}', space=vmem, size = 0x4000, scoped, tag = 'output window, operand 0, single buffered']
    #allocation9 [shape = 's32[1]{0}', space=sflag, size = 0x4, scoped, tag = 'scoped memory for encoder_forward.3']
    %12 = vsyncpa [#allocation9], 0
    // Predicated region
    $region2: #{encoder_forward.3} parent=1 // pred_check
      _
    $region3: #{encoder_forward.3} parent=1 // pred_check_branch
      %14 = sbr.rel (0) target = $region5
    $region4: #{encoder_forward.3} parent=1 // pred_region
      _
    $region5: #{encoder_forward.3} parent=1 // pred_fallthru
      _
    // Predicated region
    $region6: #{encoder_forward.3} parent=1 // pred_check
      _
    $region7: #{encoder_forward.3} parent=1 // pred_check_branch
      %16 = sbr.rel (0) target = $region9
    $region8: #{encoder_forward.3} parent=1 // pred_region
      _
    $region9: #{encoder_forward.3} parent=1 // pred_fallthru
      _
    %p18 = scmp.eq.s32.totalorder 0, 0
    // Predicated region
    $region10: #{encoder_forward.3} parent=1 // pred_check
      %p19 = pneg %p18
    $region11: #{encoder_forward.3} parent=1 // pred_check_branch
      %21 = sbr.rel (%p19) target = $region13
    $region12: #{encoder_forward.3} parent=1 // pred_region
      %p23 = scmp.lt.u32.totalorder 4, 8
      %p24 = pneg %p23
      // Predicated region
      $region14: #{encoder_forward.3} parent=12 // pred_check
        _
      $region15: #{encoder_forward.3} parent=12 // pred_check_branch
        %26 = sbr.rel (%p23) target = $region17
      $region16: #{encoder_forward.3} parent=12 // pred_region
        %s167 = sand.u32 4, 7
        %p168 = scmp.eq.s32.totalorder %s167, 0
        %p169 = pneg %p168
        // Predicated region
        $region29: #{encoder_forward.3} parent=16 // pred_check
          _
        $region30: #{encoder_forward.3} parent=16 // pred_check_branch
          %171 = sbr.rel (%p168) target = $region32
        $region31: #{encoder_forward.3} parent=16 // pred_region
          %s172 = sand.u32 4, 7
          %s173 = ssub.s32 4, %s172
          %s174 = scalar_lea.vmem %s1, %s173
          %s175 = ssub.s32 4, %s172
          %s176 = scalar_lea.vmem [#allocation5], %s175
          loop: start=0, step=1, limit=1
          $region33: #{encoder_forward.3} parent=31 // loop_pre_header
            _
          $region34: #{encoder_forward.3} parent=31 // loop_header
            %s178 = sphi 0, %s182
            %p179 = scmp.ge.s32.totalorder %s178, 1
            %s183 = sphi %s1, %s1
            %s184 = sphi [#allocation5], [#allocation5]
          $region35: #{encoder_forward.3} parent=31 // loop_header_branch
            %181 = sbr.rel (%p179) target = $region39
          $region36: #{encoder_forward.3} parent=31 // loop_body
            _
          $region37: #{encoder_forward.3} parent=31 // loop_footer
            %s182 = sadd.s32 1, %s178
          $region38: #{encoder_forward.3} parent=31 // loop_footer_branch
            %177 = sbr.rel target = $region34
          $region39: #{encoder_forward.3} parent=31 // loop_exit
            _
          %s185 = sshllo.u32 0, %s172
          loop: start=0, step=1, limit=1
          $region40: #{encoder_forward.3} parent=31 // loop_pre_header
            _
          $region41: #{encoder_forward.3} parent=31 // loop_header
            %s187 = sphi 0, %s191
            %p188 = scmp.ge.s32.totalorder %s187, 1
            %s192 = sphi %s174, %s174
            %s193 = sphi %s176, %s176
          $region42: #{encoder_forward.3} parent=31 // loop_header_branch
            %190 = sbr.rel (%p188) target = $region46
          $region43: #{encoder_forward.3} parent=31 // loop_body
            %v194 = vld [vmem:[%s192] sm:%s185]
            %195 = vst [vmem:[%s193] sm:%s185] %v194
            %v196 = vld [vmem:[%s192 + $0x10] sm:%s185]
            %197 = vst [vmem:[%s193 + $0x4] sm:%s185] %v196
            %v198 = vld [vmem:[%s192 + $0x4] sm:%s185]
            %199 = vst [vmem:[%s193 + $0x8] sm:%s185] %v198
            %v200 = vld [vmem:[%s192 + $0x14] sm:%s185]
            %201 = vst [vmem:[%s193 + $0xc] sm:%s185] %v200
            %v202 = vld [vmem:[%s192 + $0x8] sm:%s185]
            %203 = vst [vmem:[%s193 + $0x10] sm:%s185] %v202
            %v204 = vld [vmem:[%s192 + $0x18] sm:%s185]
            %205 = vst [vmem:[%s193 + $0x14] sm:%s185] %v204
            %v206 = vld [vmem:[%s192 + $0xc] sm:%s185]
            %207 = vst [vmem:[%s193 + $0x18] sm:%s185] %v206
            %v208 = vld [vmem:[%s192 + $0x1c] sm:%s185]
            %209 = vst [vmem:[%s193 + $0x1c] sm:%s185] %v208
            %v210 = vld [vmem:[%s192 + $0x20] sm:%s185]
            %211 = vst [vmem:[%s193 + $0x20] sm:%s185] %v210
            %v212 = vld [vmem:[%s192 + $0x30] sm:%s185]
            %213 = vst [vmem:[%s193 + $0x24] sm:%s185] %v212
            %v214 = vld [vmem:[%s192 + $0x24] sm:%s185]
            %215 = vst [vmem:[%s193 + $0x28] sm:%s185] %v214
            %v216 = vld [vmem:[%s192 + $0x34] sm:%s185]
            %217 = vst [vmem:[%s193 + $0x2c] sm:%s185] %v216
            %v218 = vld [vmem:[%s192 + $0x28] sm:%s185]
            %219 = vst [vmem:[%s193 + $0x30] sm:%s185] %v218
            %v220 = vld [vmem:[%s192 + $0x38] sm:%s185]
            %221 = vst [vmem:[%s193 + $0x34] sm:%s185] %v220
            %v222 = vld [vmem:[%s192 + $0x2c] sm:%s185]
            %223 = vst [vmem:[%s193 + $0x38] sm:%s185] %v222
            %v224 = vld [vmem:[%s192 + $0x3c] sm:%s185]
            %225 = vst [vmem:[%s193 + $0x3c] sm:%s185] %v224
            %v226 = vld [vmem:[%s192 + $0x40] sm:%s185]
            %227 = vst [vmem:[%s193 + $0x40] sm:%s185] %v226
            %v228 = vld [vmem:[%s192 + $0x50] sm:%s185]
            %229 = vst [vmem:[%s193 + $0x44] sm:%s185] %v228
            %v230 = vld [vmem:[%s192 + $0x44] sm:%s185]
            %231 = vst [vmem:[%s193 + $0x48] sm:%s185] %v230
            %v232 = vld [vmem:[%s192 + $0x54] sm:%s185]
            %233 = vst [vmem:[%s193 + $0x4c] sm:%s185] %v232
            %v234 = vld [vmem:[%s192 + $0x48] sm:%s185]
            %235 = vst [vmem:[%s193 + $0x50] sm:%s185] %v234
            %v236 = vld [vmem:[%s192 + $0x58] sm:%s185]
            %237 = vst [vmem:[%s193 + $0x54] sm:%s185] %v236
            %v238 = vld [vmem:[%s192 + $0x4c] sm:%s185]
            %239 = vst [vmem:[%s193 + $0x58] sm:%s185] %v238
            %v240 = vld [vmem:[%s192 + $0x5c] sm:%s185]
            %241 = vst [vmem:[%s193 + $0x5c] sm:%s185] %v240
            %v242 = vld [vmem:[%s192 + $0x60] sm:%s185]
            %243 = vst [vmem:[%s193 + $0x60] sm:%s185] %v242
            %v244 = vld [vmem:[%s192 + $0x70] sm:%s185]
            %245 = vst [vmem:[%s193 + $0x64] sm:%s185] %v244
            %v246 = vld [vmem:[%s192 + $0x64] sm:%s185]
            %247 = vst [vmem:[%s193 + $0x68] sm:%s185] %v246
            %v248 = vld [vmem:[%s192 + $0x74] sm:%s185]
            %249 = vst [vmem:[%s193 + $0x6c] sm:%s185] %v248
            %v250 = vld [vmem:[%s192 + $0x68] sm:%s185]
            %251 = vst [vmem:[%s193 + $0x70] sm:%s185] %v250
            %v252 = vld [vmem:[%s192 + $0x78] sm:%s185]
            %253 = vst [vmem:[%s193 + $0x74] sm:%s185] %v252
            %v254 = vld [vmem:[%s192 + $0x6c] sm:%s185]
            %255 = vst [vmem:[%s193 + $0x78] sm:%s185] %v254
            %v256 = vld [vmem:[%s192 + $0x7c] sm:%s185]
            %257 = vst [vmem:[%s193 + $0x7c] sm:%s185] %v256
            %v258 = vld [vmem:[%s192 + $0x80] sm:%s185]
            %259 = vst [vmem:[%s193 + $0x80] sm:%s185] %v258
            %v260 = vld [vmem:[%s192 + $0x90] sm:%s185]
            %261 = vst [vmem:[%s193 + $0x84] sm:%s185] %v260
            %v262 = vld [vmem:[%s192 + $0x84] sm:%s185]
            %263 = vst [vmem:[%s193 + $0x88] sm:%s185] %v262
            %v264 = vld [vmem:[%s192 + $0x94] sm:%s185]
            %265 = vst [vmem:[%s193 + $0x8c] sm:%s185] %v264
            %v266 = vld [vmem:[%s192 + $0x88] sm:%s185]
            %267 = vst [vmem:[%s193 + $0x90] sm:%s185] %v266
            %v268 = vld [vmem:[%s192 + $0x98] sm:%s185]
            %269 = vst [vmem:[%s193 + $0x94] sm:%s185] %v268
            %v270 = vld [vmem:[%s192 + $0x8c] sm:%s185]
            %271 = vst [vmem:[%s193 + $0x98] sm:%s185] %v270
            %v272 = vld [vmem:[%s192 + $0x9c] sm:%s185]
            %273 = vst [vmem:[%s193 + $0x9c] sm:%s185] %v272
            %v274 = vld [vmem:[%s192 + $0xa0] sm:%s185]
            %275 = vst [vmem:[%s193 + $0xa0] sm:%s185] %v274
            %v276 = vld [vmem:[%s192 + $0xb0] sm:%s185]
            %277 = vst [vmem:[%s193 + $0xa4] sm:%s185] %v276
            %v278 = vld [vmem:[%s192 + $0xa4] sm:%s185]
            %279 = vst [vmem:[%s193 + $0xa8] sm:%s185] %v278
            %v280 = vld [vmem:[%s192 + $0xb4] sm:%s185]
            %281 = vst [vmem:[%s193 + $0xac] sm:%s185] %v280
            %v282 = vld [vmem:[%s192 + $0xa8] sm:%s185]
            %283 = vst [vmem:[%s193 + $0xb0] sm:%s185] %v282
            %v284 = vld [vmem:[%s192 + $0xb8] sm:%s185]
            %285 = vst [vmem:[%s193 + $0xb4] sm:%s185] %v284
            %v286 = vld [vmem:[%s192 + $0xac] sm:%s185]
            %287 = vst [vmem:[%s193 + $0xb8] sm:%s185] %v286
            %v288 = vld [vmem:[%s192 + $0xbc] sm:%s185]
            %289 = vst [vmem:[%s193 + $0xbc] sm:%s185] %v288
            %v290 = vld [vmem:[%s192 + $0xc0] sm:%s185]
            %291 = vst [vmem:[%s193 + $0xc0] sm:%s185] %v290
            %v292 = vld [vmem:[%s192 + $0xd0] sm:%s185]
            %293 = vst [vmem:[%s193 + $0xc4] sm:%s185] %v292
            %v294 = vld [vmem:[%s192 + $0xc4] sm:%s185]
            %295 = vst [vmem:[%s193 + $0xc8] sm:%s185] %v294
            %v296 = vld [vmem:[%s192 + $0xd4] sm:%s185]
            %297 = vst [vmem:[%s193 + $0xcc] sm:%s185] %v296
            %v298 = vld [vmem:[%s192 + $0xc8] sm:%s185]
            %299 = vst [vmem:[%s193 + $0xd0] sm:%s185] %v298
            %v300 = vld [vmem:[%s192 + $0xd8] sm:%s185]
            %301 = vst [vmem:[%s193 + $0xd4] sm:%s185] %v300
            %v302 = vld [vmem:[%s192 + $0xcc] sm:%s185]
            %303 = vst [vmem:[%s193 + $0xd8] sm:%s185] %v302
            %v304 = vld [vmem:[%s192 + $0xdc] sm:%s185]
            %305 = vst [vmem:[%s193 + $0xdc] sm:%s185] %v304
            %v306 = vld [vmem:[%s192 + $0xe0] sm:%s185]
            %307 = vst [vmem:[%s193 + $0xe0] sm:%s185] %v306
            %v308 = vld [vmem:[%s192 + $0xf0] sm:%s185]
            %309 = vst [vmem:[%s193 + $0xe4] sm:%s185] %v308
            %v310 = vld [vmem:[%s192 + $0xe4] sm:%s185]
            %311 = vst [vmem:[%s193 + $0xe8] sm:%s185] %v310
            %v312 = vld [vmem:[%s192 + $0xf4] sm:%s185]
            %313 = vst [vmem:[%s193 + $0xec] sm:%s185] %v312
            %v314 = vld [vmem:[%s192 + $0xe8] sm:%s185]
            %315 = vst [vmem:[%s193 + $0xf0] sm:%s185] %v314
            %v316 = vld [vmem:[%s192 + $0xf8] sm:%s185]
            %317 = vst [vmem:[%s193 + $0xf4] sm:%s185] %v316
            %v318 = vld [vmem:[%s192 + $0xec] sm:%s185]
            %319 = vst [vmem:[%s193 + $0xf8] sm:%s185] %v318
            %v320 = vld [vmem:[%s192 + $0xfc] sm:%s185]
            %321 = vst [vmem:[%s193 + $0xfc] sm:%s185] %v320
          $region44: #{encoder_forward.3} parent=31 // loop_footer
            %s191 = sadd.s32 1, %s187
          $region45: #{encoder_forward.3} parent=31 // loop_footer_branch
            %186 = sbr.rel target = $region41
          $region46: #{encoder_forward.3} parent=31 // loop_exit
            _
        $region32: #{encoder_forward.3} parent=16 // pred_fallthru
          _
      $region17: #{encoder_forward.3} parent=12 // pred_fallthru
        _
      // Predicated region
      $region18: #{encoder_forward.3} parent=12 // pred_check
        %p27 = pneg %p23
      $region19: #{encoder_forward.3} parent=12 // pred_check_branch
        %29 = sbr.rel (%p27) target = $region21
      $region20: #{encoder_forward.3} parent=12 // pred_region
        %s30 = sshllo.u32 0, 4
        loop: start=0, step=1, limit=1
        $region22: #{encoder_forward.3} parent=20 // loop_pre_header
          _
        $region23: #{encoder_forward.3} parent=20 // loop_header
          %s32 = sphi 0, %s36
          %p33 = scmp.ge.s32.totalorder %s32, 1
          %s37 = sphi %s1, %s1
          %s38 = sphi [#allocation5], [#allocation5]
        $region24: #{encoder_forward.3} parent=20 // loop_header_branch
          %35 = sbr.rel (%p33) target = $region28
        $region25: #{encoder_forward.3} parent=20 // loop_body
          %v39 = vld [vmem:[%s37] sm:%s30]
          %40 = vst [vmem:[%s38] sm:%s30] %v39
          %v41 = vld [vmem:[%s37 + $0x10] sm:%s30]
          %42 = vst [vmem:[%s38 + $0x4] sm:%s30] %v41
          %v43 = vld [vmem:[%s37 + $0x4] sm:%s30]
          %44 = vst [vmem:[%s38 + $0x8] sm:%s30] %v43
          %v45 = vld [vmem:[%s37 + $0x14] sm:%s30]
          %46 = vst [vmem:[%s38 + $0xc] sm:%s30] %v45
          %v47 = vld [vmem:[%s37 + $0x8] sm:%s30]
          %48 = vst [vmem:[%s38 + $0x10] sm:%s30] %v47
          %v49 = vld [vmem:[%s37 + $0x18] sm:%s30]
          %50 = vst [vmem:[%s38 + $0x14] sm:%s30] %v49
          %v51 = vld [vmem:[%s37 + $0xc] sm:%s30]
          %52 = vst [vmem:[%s38 + $0x18] sm:%s30] %v51
          %v53 = vld [vmem:[%s37 + $0x1c] sm:%s30]
          %54 = vst [vmem:[%s38 + $0x1c] sm:%s30] %v53
          %v55 = vld [vmem:[%s37 + $0x20] sm:%s30]
          %56 = vst [vmem:[%s38 + $0x20] sm:%s30] %v55
          %v57 = vld [vmem:[%s37 + $0x30] sm:%s30]
          %58 = vst [vmem:[%s38 + $0x24] sm:%s30] %v57
          %v59 = vld [vmem:[%s37 + $0x24] sm:%s30]
          %60 = vst [vmem:[%s38 + $0x28] sm:%s30] %v59
          %v61 = vld [vmem:[%s37 + $0x34] sm:%s30]
          %62 = vst [vmem:[%s38 + $0x2c] sm:%s30] %v61
          %v63 = vld [vmem:[%s37 + $0x28] sm:%s30]
          %64 = vst [vmem:[%s38 + $0x30] sm:%s30] %v63
          %v65 = vld [vmem:[%s37 + $0x38] sm:%s30]
          %66 = vst [vmem:[%s38 + $0x34] sm:%s30] %v65
          %v67 = vld [vmem:[%s37 + $0x2c] sm:%s30]
          %68 = vst [vmem:[%s38 + $0x38] sm:%s30] %v67
          %v69 = vld [vmem:[%s37 + $0x3c] sm:%s30]
          %70 = vst [vmem:[%s38 + $0x3c] sm:%s30] %v69
          %v71 = vld [vmem:[%s37 + $0x40] sm:%s30]
          %72 = vst [vmem:[%s38 + $0x40] sm:%s30] %v71
          %v73 = vld [vmem:[%s37 + $0x50] sm:%s30]
          %74 = vst [vmem:[%s38 + $0x44] sm:%s30] %v73
          %v75 = vld [vmem:[%s37 + $0x44] sm:%s30]
          %76 = vst [vmem:[%s38 + $0x48] sm:%s30] %v75
          %v77 = vld [vmem:[%s37 + $0x54] sm:%s30]
          %78 = vst [vmem:[%s38 + $0x4c] sm:%s30] %v77
          %v79 = vld [vmem:[%s37 + $0x48] sm:%s30]
          %80 = vst [vmem:[%s38 + $0x50] sm:%s30] %v79
          %v81 = vld [vmem:[%s37 + $0x58] sm:%s30]
          %82 = vst [vmem:[%s38 + $0x54] sm:%s30] %v81
          %v83 = vld [vmem:[%s37 + $0x4c] sm:%s30]
          %84 = vst [vmem:[%s38 + $0x58] sm:%s30] %v83
          %v85 = vld [vmem:[%s37 + $0x5c] sm:%s30]
          %86 = vst [vmem:[%s38 + $0x5c] sm:%s30] %v85
          %v87 = vld [vmem:[%s37 + $0x60] sm:%s30]
          %88 = vst [vmem:[%s38 + $0x60] sm:%s30] %v87
          %v89 = vld [vmem:[%s37 + $0x70] sm:%s30]
          %90 = vst [vmem:[%s38 + $0x64] sm:%s30] %v89
          %v91 = vld [vmem:[%s37 + $0x64] sm:%s30]
          %92 = vst [vmem:[%s38 + $0x68] sm:%s30] %v91
          %v93 = vld [vmem:[%s37 + $0x74] sm:%s30]
          %94 = vst [vmem:[%s38 + $0x6c] sm:%s30] %v93
          %v95 = vld [vmem:[%s37 + $0x68] sm:%s30]
          %96 = vst [vmem:[%s38 + $0x70] sm:%s30] %v95
          %v97 = vld [vmem:[%s37 + $0x78] sm:%s30]
          %98 = vst [vmem:[%s38 + $0x74] sm:%s30] %v97
          %v99 = vld [vmem:[%s37 + $0x6c] sm:%s30]
          %100 = vst [vmem:[%s38 + $0x78] sm:%s30] %v99
          %v101 = vld [vmem:[%s37 + $0x7c] sm:%s30]
          %102 = vst [vmem:[%s38 + $0x7c] sm:%s30] %v101
          %v103 = vld [vmem:[%s37 + $0x80] sm:%s30]
          %104 = vst [vmem:[%s38 + $0x80] sm:%s30] %v103
          %v105 = vld [vmem:[%s37 + $0x90] sm:%s30]
          %106 = vst [vmem:[%s38 + $0x84] sm:%s30] %v105
          %v107 = vld [vmem:[%s37 + $0x84] sm:%s30]
          %108 = vst [vmem:[%s38 + $0x88] sm:%s30] %v107
          %v109 = vld [vmem:[%s37 + $0x94] sm:%s30]
          %110 = vst [vmem:[%s38 + $0x8c] sm:%s30] %v109
          %v111 = vld [vmem:[%s37 + $0x88] sm:%s30]
          %112 = vst [vmem:[%s38 + $0x90] sm:%s30] %v111
          %v113 = vld [vmem:[%s37 + $0x98] sm:%s30]
          %114 = vst [vmem:[%s38 + $0x94] sm:%s30] %v113
          %v115 = vld [vmem:[%s37 + $0x8c] sm:%s30]
          %116 = vst [vmem:[%s38 + $0x98] sm:%s30] %v115
          %v117 = vld [vmem:[%s37 + $0x9c] sm:%s30]
          %118 = vst [vmem:[%s38 + $0x9c] sm:%s30] %v117
          %v119 = vld [vmem:[%s37 + $0xa0] sm:%s30]
          %120 = vst [vmem:[%s38 + $0xa0] sm:%s30] %v119
          %v121 = vld [vmem:[%s37 + $0xb0] sm:%s30]
          %122 = vst [vmem:[%s38 + $0xa4] sm:%s30] %v121
          %v123 = vld [vmem:[%s37 + $0xa4] sm:%s30]
          %124 = vst [vmem:[%s38 + $0xa8] sm:%s30] %v123
          %v125 = vld [vmem:[%s37 + $0xb4] sm:%s30]
          %126 = vst [vmem:[%s38 + $0xac] sm:%s30] %v125
          %v127 = vld [vmem:[%s37 + $0xa8] sm:%s30]
          %128 = vst [vmem:[%s38 + $0xb0] sm:%s30] %v127
          %v129 = vld [vmem:[%s37 + $0xb8] sm:%s30]
          %130 = vst [vmem:[%s38 + $0xb4] sm:%s30] %v129
          %v131 = vld [vmem:[%s37 + $0xac] sm:%s30]
          %132 = vst [vmem:[%s38 + $0xb8] sm:%s30] %v131
          %v133 = vld [vmem:[%s37 + $0xbc] sm:%s30]
          %134 = vst [vmem:[%s38 + $0xbc] sm:%s30] %v133
          %v135 = vld [vmem:[%s37 + $0xc0] sm:%s30]
          %136 = vst [vmem:[%s38 + $0xc0] sm:%s30] %v135
          %v137 = vld [vmem:[%s37 + $0xd0] sm:%s30]
          %138 = vst [vmem:[%s38 + $0xc4] sm:%s30] %v137
          %v139 = vld [vmem:[%s37 + $0xc4] sm:%s30]
          %140 = vst [vmem:[%s38 + $0xc8] sm:%s30] %v139
          %v141 = vld [vmem:[%s37 + $0xd4] sm:%s30]
          %142 = vst [vmem:[%s38 + $0xcc] sm:%s30] %v141
          %v143 = vld [vmem:[%s37 + $0xc8] sm:%s30]
          %144 = vst [vmem:[%s38 + $0xd0] sm:%s30] %v143
          %v145 = vld [vmem:[%s37 + $0xd8] sm:%s30]
          %146 = vst [vmem:[%s38 + $0xd4] sm:%s30] %v145
          %v147 = vld [vmem:[%s37 + $0xcc] sm:%s30]
          %148 = vst [vmem:[%s38 + $0xd8] sm:%s30] %v147
          %v149 = vld [vmem:[%s37 + $0xdc] sm:%s30]
          %150 = vst [vmem:[%s38 + $0xdc] sm:%s30] %v149
          %v151 = vld [vmem:[%s37 + $0xe0] sm:%s30]
          %152 = vst [vmem:[%s38 + $0xe0] sm:%s30] %v151
          %v153 = vld [vmem:[%s37 + $0xf0] sm:%s30]
          %154 = vst [vmem:[%s38 + $0xe4] sm:%s30] %v153
          %v155 = vld [vmem:[%s37 + $0xe4] sm:%s30]
          %156 = vst [vmem:[%s38 + $0xe8] sm:%s30] %v155
          %v157 = vld [vmem:[%s37 + $0xf4] sm:%s30]
          %158 = vst [vmem:[%s38 + $0xec] sm:%s30] %v157
          %v159 = vld [vmem:[%s37 + $0xe8] sm:%s30]
          %160 = vst [vmem:[%s38 + $0xf0] sm:%s30] %v159
          %v161 = vld [vmem:[%s37 + $0xf8] sm:%s30]
          %162 = vst [vmem:[%s38 + $0xf4] sm:%s30] %v161
          %v163 = vld [vmem:[%s37 + $0xec] sm:%s30]
          %164 = vst [vmem:[%s38 + $0xf8] sm:%s30] %v163
          %v165 = vld [vmem:[%s37 + $0xfc] sm:%s30]
          %166 = vst [vmem:[%s38 + $0xfc] sm:%s30] %v165
        $region26: #{encoder_forward.3} parent=20 // loop_footer
          %s36 = sadd.s32 1, %s32
        $region27: #{encoder_forward.3} parent=20 // loop_footer_branch
          %31 = sbr.rel target = $region23
        $region28: #{encoder_forward.3} parent=20 // loop_exit
          _
      $region21: #{encoder_forward.3} parent=12 // pred_fallthru
        _
      // Predicated region
      $region47: #{encoder_forward.3} parent=12 // pred_check
        _
      $region48: #{encoder_forward.3} parent=12 // pred_check_branch
        %324 = sbr.rel (0) target = $region50
      $region49: #{encoder_forward.3} parent=12 // pred_region
        %325 = vsyncadd [#allocation7], 4096
      $region50: #{encoder_forward.3} parent=12 // pred_fallthru
        _
      %s326 = scalar_lea.sflag [#allocation7], 1
      %p328 = scmp.lt.u32.totalorder 4, 8
      %p329 = pneg %p328
      // Predicated region
      $region51: #{encoder_forward.3} parent=12 // pred_check
        _
      $region52: #{encoder_forward.3} parent=12 // pred_check_branch
        %331 = sbr.rel (%p328) target = $region54
      $region53: #{encoder_forward.3} parent=12 // pred_region
        %s472 = sand.u32 4, 7
        %p473 = scmp.eq.s32.totalorder %s472, 0
        %p474 = pneg %p473
        // Predicated region
        $region66: #{encoder_forward.3} parent=53 // pred_check
          _
        $region67: #{encoder_forward.3} parent=53 // pred_check_branch
          %476 = sbr.rel (%p473) target = $region69
        $region68: #{encoder_forward.3} parent=53 // pred_region
          %s477 = sand.u32 4, 7
          %s478 = ssub.s32 4, %s477
          %s479 = scalar_lea.vmem %s2, %s478
          %s480 = ssub.s32 4, %s477
          %s481 = scalar_lea.vmem [#allocation6], %s480
          loop: start=0, step=1, limit=1
          $region70: #{encoder_forward.3} parent=68 // loop_pre_header
            _
          $region71: #{encoder_forward.3} parent=68 // loop_header
            %s483 = sphi 0, %s487
            %p484 = scmp.ge.s32.totalorder %s483, 1
            %s488 = sphi %s2, %s2
            %s489 = sphi [#allocation6], [#allocation6]
          $region72: #{encoder_forward.3} parent=68 // loop_header_branch
            %486 = sbr.rel (%p484) target = $region76
          $region73: #{encoder_forward.3} parent=68 // loop_body
            _
          $region74: #{encoder_forward.3} parent=68 // loop_footer
            %s487 = sadd.s32 1, %s483
          $region75: #{encoder_forward.3} parent=68 // loop_footer_branch
            %482 = sbr.rel target = $region71
          $region76: #{encoder_forward.3} parent=68 // loop_exit
            _
          %s490 = sshllo.u32 0, %s477
          loop: start=0, step=1, limit=1
          $region77: #{encoder_forward.3} parent=68 // loop_pre_header
            _
          $region78: #{encoder_forward.3} parent=68 // loop_header
            %s492 = sphi 0, %s496
            %p493 = scmp.ge.s32.totalorder %s492, 1
            %s497 = sphi %s479, %s479
            %s498 = sphi %s481, %s481
          $region79: #{encoder_forward.3} parent=68 // loop_header_branch
            %495 = sbr.rel (%p493) target = $region83
          $region80: #{encoder_forward.3} parent=68 // loop_body
            %v499 = vld [vmem:[%s497] sm:%s490]
            %500 = vst [vmem:[%s498] sm:%s490] %v499
            %v501 = vld [vmem:[%s497 + $0x10] sm:%s490]
            %502 = vst [vmem:[%s498 + $0x4] sm:%s490] %v501
            %v503 = vld [vmem:[%s497 + $0x4] sm:%s490]
            %504 = vst [vmem:[%s498 + $0x8] sm:%s490] %v503
            %v505 = vld [vmem:[%s497 + $0x14] sm:%s490]
            %506 = vst [vmem:[%s498 + $0xc] sm:%s490] %v505
            %v507 = vld [vmem:[%s497 + $0x8] sm:%s490]
            %508 = vst [vmem:[%s498 + $0x10] sm:%s490] %v507
            %v509 = vld [vmem:[%s497 + $0x18] sm:%s490]
            %510 = vst [vmem:[%s498 + $0x14] sm:%s490] %v509
            %v511 = vld [vmem:[%s497 + $0xc] sm:%s490]
            %512 = vst [vmem:[%s498 + $0x18] sm:%s490] %v511
            %v513 = vld [vmem:[%s497 + $0x1c] sm:%s490]
            %514 = vst [vmem:[%s498 + $0x1c] sm:%s490] %v513
            %v515 = vld [vmem:[%s497 + $0x20] sm:%s490]
            %516 = vst [vmem:[%s498 + $0x20] sm:%s490] %v515
            %v517 = vld [vmem:[%s497 + $0x30] sm:%s490]
            %518 = vst [vmem:[%s498 + $0x24] sm:%s490] %v517
            %v519 = vld [vmem:[%s497 + $0x24] sm:%s490]
            %520 = vst [vmem:[%s498 + $0x28] sm:%s490] %v519
            %v521 = vld [vmem:[%s497 + $0x34] sm:%s490]
            %522 = vst [vmem:[%s498 + $0x2c] sm:%s490] %v521
            %v523 = vld [vmem:[%s497 + $0x28] sm:%s490]
            %524 = vst [vmem:[%s498 + $0x30] sm:%s490] %v523
            %v525 = vld [vmem:[%s497 + $0x38] sm:%s490]
            %526 = vst [vmem:[%s498 + $0x34] sm:%s490] %v525
            %v527 = vld [vmem:[%s497 + $0x2c] sm:%s490]
            %528 = vst [vmem:[%s498 + $0x38] sm:%s490] %v527
            %v529 = vld [vmem:[%s497 + $0x3c] sm:%s490]
            %530 = vst [vmem:[%s498 + $0x3c] sm:%s490] %v529
            %v531 = vld [vmem:[%s497 + $0x40] sm:%s490]
            %532 = vst [vmem:[%s498 + $0x40] sm:%s490] %v531
            %v533 = vld [vmem:[%s497 + $0x50] sm:%s490]
            %534 = vst [vmem:[%s498 + $0x44] sm:%s490] %v533
            %v535 = vld [vmem:[%s497 + $0x44] sm:%s490]
            %536 = vst [vmem:[%s498 + $0x48] sm:%s490] %v535
            %v537 = vld [vmem:[%s497 + $0x54] sm:%s490]
            %538 = vst [vmem:[%s498 + $0x4c] sm:%s490] %v537
            %v539 = vld [vmem:[%s497 + $0x48] sm:%s490]
            %540 = vst [vmem:[%s498 + $0x50] sm:%s490] %v539
            %v541 = vld [vmem:[%s497 + $0x58] sm:%s490]
            %542 = vst [vmem:[%s498 + $0x54] sm:%s490] %v541
            %v543 = vld [vmem:[%s497 + $0x4c] sm:%s490]
            %544 = vst [vmem:[%s498 + $0x58] sm:%s490] %v543
            %v545 = vld [vmem:[%s497 + $0x5c] sm:%s490]
            %546 = vst [vmem:[%s498 + $0x5c] sm:%s490] %v545
            %v547 = vld [vmem:[%s497 + $0x60] sm:%s490]
            %548 = vst [vmem:[%s498 + $0x60] sm:%s490] %v547
            %v549 = vld [vmem:[%s497 + $0x70] sm:%s490]
            %550 = vst [vmem:[%s498 + $0x64] sm:%s490] %v549
            %v551 = vld [vmem:[%s497 + $0x64] sm:%s490]
            %552 = vst [vmem:[%s498 + $0x68] sm:%s490] %v551
            %v553 = vld [vmem:[%s497 + $0x74] sm:%s490]
            %554 = vst [vmem:[%s498 + $0x6c] sm:%s490] %v553
            %v555 = vld [vmem:[%s497 + $0x68] sm:%s490]
            %556 = vst [vmem:[%s498 + $0x70] sm:%s490] %v555
            %v557 = vld [vmem:[%s497 + $0x78] sm:%s490]
            %558 = vst [vmem:[%s498 + $0x74] sm:%s490] %v557
            %v559 = vld [vmem:[%s497 + $0x6c] sm:%s490]
            %560 = vst [vmem:[%s498 + $0x78] sm:%s490] %v559
            %v561 = vld [vmem:[%s497 + $0x7c] sm:%s490]
            %562 = vst [vmem:[%s498 + $0x7c] sm:%s490] %v561
            %v563 = vld [vmem:[%s497 + $0x80] sm:%s490]
            %564 = vst [vmem:[%s498 + $0x80] sm:%s490] %v563
            %v565 = vld [vmem:[%s497 + $0x90] sm:%s490]
            %566 = vst [vmem:[%s498 + $0x84] sm:%s490] %v565
            %v567 = vld [vmem:[%s497 + $0x84] sm:%s490]
            %568 = vst [vmem:[%s498 + $0x88] sm:%s490] %v567
            %v569 = vld [vmem:[%s497 + $0x94] sm:%s490]
            %570 = vst [vmem:[%s498 + $0x8c] sm:%s490] %v569
            %v571 = vld [vmem:[%s497 + $0x88] sm:%s490]
            %572 = vst [vmem:[%s498 + $0x90] sm:%s490] %v571
            %v573 = vld [vmem:[%s497 + $0x98] sm:%s490]
            %574 = vst [vmem:[%s498 + $0x94] sm:%s490] %v573
            %v575 = vld [vmem:[%s497 + $0x8c] sm:%s490]
            %576 = vst [vmem:[%s498 + $0x98] sm:%s490] %v575
            %v577 = vld [vmem:[%s497 + $0x9c] sm:%s490]
            %578 = vst [vmem:[%s498 + $0x9c] sm:%s490] %v577
            %v579 = vld [vmem:[%s497 + $0xa0] sm:%s490]
            %580 = vst [vmem:[%s498 + $0xa0] sm:%s490] %v579
            %v581 = vld [vmem:[%s497 + $0xb0] sm:%s490]
            %582 = vst [vmem:[%s498 + $0xa4] sm:%s490] %v581
            %v583 = vld [vmem:[%s497 + $0xa4] sm:%s490]
            %584 = vst [vmem:[%s498 + $0xa8] sm:%s490] %v583
            %v585 = vld [vmem:[%s497 + $0xb4] sm:%s490]
            %586 = vst [vmem:[%s498 + $0xac] sm:%s490] %v585
            %v587 = vld [vmem:[%s497 + $0xa8] sm:%s490]
            %588 = vst [vmem:[%s498 + $0xb0] sm:%s490] %v587
            %v589 = vld [vmem:[%s497 + $0xb8] sm:%s490]
            %590 = vst [vmem:[%s498 + $0xb4] sm:%s490] %v589
            %v591 = vld [vmem:[%s497 + $0xac] sm:%s490]
            %592 = vst [vmem:[%s498 + $0xb8] sm:%s490] %v591
            %v593 = vld [vmem:[%s497 + $0xbc] sm:%s490]
            %594 = vst [vmem:[%s498 + $0xbc] sm:%s490] %v593
            %v595 = vld [vmem:[%s497 + $0xc0] sm:%s490]
            %596 = vst [vmem:[%s498 + $0xc0] sm:%s490] %v595
            %v597 = vld [vmem:[%s497 + $0xd0] sm:%s490]
            %598 = vst [vmem:[%s498 + $0xc4] sm:%s490] %v597
            %v599 = vld [vmem:[%s497 + $0xc4] sm:%s490]
            %600 = vst [vmem:[%s498 + $0xc8] sm:%s490] %v599
            %v601 = vld [vmem:[%s497 + $0xd4] sm:%s490]
            %602 = vst [vmem:[%s498 + $0xcc] sm:%s490] %v601
            %v603 = vld [vmem:[%s497 + $0xc8] sm:%s490]
            %604 = vst [vmem:[%s498 + $0xd0] sm:%s490] %v603
            %v605 = vld [vmem:[%s497 + $0xd8] sm:%s490]
            %606 = vst [vmem:[%s498 + $0xd4] sm:%s490] %v605
            %v607 = vld [vmem:[%s497 + $0xcc] sm:%s490]
            %608 = vst [vmem:[%s498 + $0xd8] sm:%s490] %v607
            %v609 = vld [vmem:[%s497 + $0xdc] sm:%s490]
            %610 = vst [vmem:[%s498 + $0xdc] sm:%s490] %v609
            %v611 = vld [vmem:[%s497 + $0xe0] sm:%s490]
            %612 = vst [vmem:[%s498 + $0xe0] sm:%s490] %v611
            %v613 = vld [vmem:[%s497 + $0xf0] sm:%s490]
            %614 = vst [vmem:[%s498 + $0xe4] sm:%s490] %v613
            %v615 = vld [vmem:[%s497 + $0xe4] sm:%s490]
            %616 = vst [vmem:[%s498 + $0xe8] sm:%s490] %v615
            %v617 = vld [vmem:[%s497 + $0xf4] sm:%s490]
            %618 = vst [vmem:[%s498 + $0xec] sm:%s490] %v617
            %v619 = vld [vmem:[%s497 + $0xe8] sm:%s490]
            %620 = vst [vmem:[%s498 + $0xf0] sm:%s490] %v619
            %v621 = vld [vmem:[%s497 + $0xf8] sm:%s490]
            %622 = vst [vmem:[%s498 + $0xf4] sm:%s490] %v621
            %v623 = vld [vmem:[%s497 + $0xec] sm:%s490]
            %624 = vst [vmem:[%s498 + $0xf8] sm:%s490] %v623
            %v625 = vld [vmem:[%s497 + $0xfc] sm:%s490]
            %626 = vst [vmem:[%s498 + $0xfc] sm:%s490] %v625
          $region81: #{encoder_forward.3} parent=68 // loop_footer
            %s496 = sadd.s32 1, %s492
          $region82: #{encoder_forward.3} parent=68 // loop_footer_branch
            %491 = sbr.rel target = $region78
          $region83: #{encoder_forward.3} parent=68 // loop_exit
            _
        $region69: #{encoder_forward.3} parent=53 // pred_fallthru
          _
      $region54: #{encoder_forward.3} parent=12 // pred_fallthru
        _
      // Predicated region
      $region55: #{encoder_forward.3} parent=12 // pred_check
        %p332 = pneg %p328
      $region56: #{encoder_forward.3} parent=12 // pred_check_branch
        %334 = sbr.rel (%p332) target = $region58
      $region57: #{encoder_forward.3} parent=12 // pred_region
        %s335 = sshllo.u32 0, 4
        loop: start=0, step=1, limit=1
        $region59: #{encoder_forward.3} parent=57 // loop_pre_header
          _
        $region60: #{encoder_forward.3} parent=57 // loop_header
          %s337 = sphi 0, %s341
          %p338 = scmp.ge.s32.totalorder %s337, 1
          %s342 = sphi %s2, %s2
          %s343 = sphi [#allocation6], [#allocation6]
        $region61: #{encoder_forward.3} parent=57 // loop_header_branch
          %340 = sbr.rel (%p338) target = $region65
        $region62: #{encoder_forward.3} parent=57 // loop_body
          %v344 = vld [vmem:[%s342] sm:%s335]
          %345 = vst [vmem:[%s343] sm:%s335] %v344
          %v346 = vld [vmem:[%s342 + $0x10] sm:%s335]
          %347 = vst [vmem:[%s343 + $0x4] sm:%s335] %v346
          %v348 = vld [vmem:[%s342 + $0x4] sm:%s335]
          %349 = vst [vmem:[%s343 + $0x8] sm:%s335] %v348
          %v350 = vld [vmem:[%s342 + $0x14] sm:%s335]
          %351 = vst [vmem:[%s343 + $0xc] sm:%s335] %v350
          %v352 = vld [vmem:[%s342 + $0x8] sm:%s335]
          %353 = vst [vmem:[%s343 + $0x10] sm:%s335] %v352
          %v354 = vld [vmem:[%s342 + $0x18] sm:%s335]
          %355 = vst [vmem:[%s343 + $0x14] sm:%s335] %v354
          %v356 = vld [vmem:[%s342 + $0xc] sm:%s335]
          %357 = vst [vmem:[%s343 + $0x18] sm:%s335] %v356
          %v358 = vld [vmem:[%s342 + $0x1c] sm:%s335]
          %359 = vst [vmem:[%s343 + $0x1c] sm:%s335] %v358
          %v360 = vld [vmem:[%s342 + $0x20] sm:%s335]
          %361 = vst [vmem:[%s343 + $0x20] sm:%s335] %v360
          %v362 = vld [vmem:[%s342 + $0x30] sm:%s335]
          %363 = vst [vmem:[%s343 + $0x24] sm:%s335] %v362
          %v364 = vld [vmem:[%s342 + $0x24] sm:%s335]
          %365 = vst [vmem:[%s343 + $0x28] sm:%s335] %v364
          %v366 = vld [vmem:[%s342 + $0x34] sm:%s335]
          %367 = vst [vmem:[%s343 + $0x2c] sm:%s335] %v366
          %v368 = vld [vmem:[%s342 + $0x28] sm:%s335]
          %369 = vst [vmem:[%s343 + $0x30] sm:%s335] %v368
          %v370 = vld [vmem:[%s342 + $0x38] sm:%s335]
          %371 = vst [vmem:[%s343 + $0x34] sm:%s335] %v370
          %v372 = vld [vmem:[%s342 + $0x2c] sm:%s335]
          %373 = vst [vmem:[%s343 + $0x38] sm:%s335] %v372
          %v374 = vld [vmem:[%s342 + $0x3c] sm:%s335]
          %375 = vst [vmem:[%s343 + $0x3c] sm:%s335] %v374
          %v376 = vld [vmem:[%s342 + $0x40] sm:%s335]
          %377 = vst [vmem:[%s343 + $0x40] sm:%s335] %v376
          %v378 = vld [vmem:[%s342 + $0x50] sm:%s335]
          %379 = vst [vmem:[%s343 + $0x44] sm:%s335] %v378
          %v380 = vld [vmem:[%s342 + $0x44] sm:%s335]
          %381 = vst [vmem:[%s343 + $0x48] sm:%s335] %v380
          %v382 = vld [vmem:[%s342 + $0x54] sm:%s335]
          %383 = vst [vmem:[%s343 + $0x4c] sm:%s335] %v382
          %v384 = vld [vmem:[%s342 + $0x48] sm:%s335]
          %385 = vst [vmem:[%s343 + $0x50] sm:%s335] %v384
          %v386 = vld [vmem:[%s342 + $0x58] sm:%s335]
          %387 = vst [vmem:[%s343 + $0x54] sm:%s335] %v386
          %v388 = vld [vmem:[%s342 + $0x4c] sm:%s335]
          %389 = vst [vmem:[%s343 + $0x58] sm:%s335] %v388
          %v390 = vld [vmem:[%s342 + $0x5c] sm:%s335]
          %391 = vst [vmem:[%s343 + $0x5c] sm:%s335] %v390
          %v392 = vld [vmem:[%s342 + $0x60] sm:%s335]
          %393 = vst [vmem:[%s343 + $0x60] sm:%s335] %v392
          %v394 = vld [vmem:[%s342 + $0x70] sm:%s335]
          %395 = vst [vmem:[%s343 + $0x64] sm:%s335] %v394
          %v396 = vld [vmem:[%s342 + $0x64] sm:%s335]
          %397 = vst [vmem:[%s343 + $0x68] sm:%s335] %v396
          %v398 = vld [vmem:[%s342 + $0x74] sm:%s335]
          %399 = vst [vmem:[%s343 + $0x6c] sm:%s335] %v398
          %v400 = vld [vmem:[%s342 + $0x68] sm:%s335]
          %401 = vst [vmem:[%s343 + $0x70] sm:%s335] %v400
          %v402 = vld [vmem:[%s342 + $0x78] sm:%s335]
          %403 = vst [vmem:[%s343 + $0x74] sm:%s335] %v402
          %v404 = vld [vmem:[%s342 + $0x6c] sm:%s335]
          %405 = vst [vmem:[%s343 + $0x78] sm:%s335] %v404
          %v406 = vld [vmem:[%s342 + $0x7c] sm:%s335]
          %407 = vst [vmem:[%s343 + $0x7c] sm:%s335] %v406
          %v408 = vld [vmem:[%s342 + $0x80] sm:%s335]
          %409 = vst [vmem:[%s343 + $0x80] sm:%s335] %v408
          %v410 = vld [vmem:[%s342 + $0x90] sm:%s335]
          %411 = vst [vmem:[%s343 + $0x84] sm:%s335] %v410
          %v412 = vld [vmem:[%s342 + $0x84] sm:%s335]
          %413 = vst [vmem:[%s343 + $0x88] sm:%s335] %v412
          %v414 = vld [vmem:[%s342 + $0x94] sm:%s335]
          %415 = vst [vmem:[%s343 + $0x8c] sm:%s335] %v414
          %v416 = vld [vmem:[%s342 + $0x88] sm:%s335]
          %417 = vst [vmem:[%s343 + $0x90] sm:%s335] %v416
          %v418 = vld [vmem:[%s342 + $0x98] sm:%s335]
          %419 = vst [vmem:[%s343 + $0x94] sm:%s335] %v418
          %v420 = vld [vmem:[%s342 + $0x8c] sm:%s335]
          %421 = vst [vmem:[%s343 + $0x98] sm:%s335] %v420
          %v422 = vld [vmem:[%s342 + $0x9c] sm:%s335]
          %423 = vst [vmem:[%s343 + $0x9c] sm:%s335] %v422
          %v424 = vld [vmem:[%s342 + $0xa0] sm:%s335]
          %425 = vst [vmem:[%s343 + $0xa0] sm:%s335] %v424
          %v426 = vld [vmem:[%s342 + $0xb0] sm:%s335]
          %427 = vst [vmem:[%s343 + $0xa4] sm:%s335] %v426
          %v428 = vld [vmem:[%s342 + $0xa4] sm:%s335]
          %429 = vst [vmem:[%s343 + $0xa8] sm:%s335] %v428
          %v430 = vld [vmem:[%s342 + $0xb4] sm:%s335]
          %431 = vst [vmem:[%s343 + $0xac] sm:%s335] %v430
          %v432 = vld [vmem:[%s342 + $0xa8] sm:%s335]
          %433 = vst [vmem:[%s343 + $0xb0] sm:%s335] %v432
          %v434 = vld [vmem:[%s342 + $0xb8] sm:%s335]
          %435 = vst [vmem:[%s343 + $0xb4] sm:%s335] %v434
          %v436 = vld [vmem:[%s342 + $0xac] sm:%s335]
          %437 = vst [vmem:[%s343 + $0xb8] sm:%s335] %v436
          %v438 = vld [vmem:[%s342 + $0xbc] sm:%s335]
          %439 = vst [vmem:[%s343 + $0xbc] sm:%s335] %v438
          %v440 = vld [vmem:[%s342 + $0xc0] sm:%s335]
          %441 = vst [vmem:[%s343 + $0xc0] sm:%s335] %v440
          %v442 = vld [vmem:[%s342 + $0xd0] sm:%s335]
          %443 = vst [vmem:[%s343 + $0xc4] sm:%s335] %v442
          %v444 = vld [vmem:[%s342 + $0xc4] sm:%s335]
          %445 = vst [vmem:[%s343 + $0xc8] sm:%s335] %v444
          %v446 = vld [vmem:[%s342 + $0xd4] sm:%s335]
          %447 = vst [vmem:[%s343 + $0xcc] sm:%s335] %v446
          %v448 = vld [vmem:[%s342 + $0xc8] sm:%s335]
          %449 = vst [vmem:[%s343 + $0xd0] sm:%s335] %v448
          %v450 = vld [vmem:[%s342 + $0xd8] sm:%s335]
          %451 = vst [vmem:[%s343 + $0xd4] sm:%s335] %v450
          %v452 = vld [vmem:[%s342 + $0xcc] sm:%s335]
          %453 = vst [vmem:[%s343 + $0xd8] sm:%s335] %v452
          %v454 = vld [vmem:[%s342 + $0xdc] sm:%s335]
          %455 = vst [vmem:[%s343 + $0xdc] sm:%s335] %v454
          %v456 = vld [vmem:[%s342 + $0xe0] sm:%s335]
          %457 = vst [vmem:[%s343 + $0xe0] sm:%s335] %v456
          %v458 = vld [vmem:[%s342 + $0xf0] sm:%s335]
          %459 = vst [vmem:[%s343 + $0xe4] sm:%s335] %v458
          %v460 = vld [vmem:[%s342 + $0xe4] sm:%s335]
          %461 = vst [vmem:[%s343 + $0xe8] sm:%s335] %v460
          %v462 = vld [vmem:[%s342 + $0xf4] sm:%s335]
          %463 = vst [vmem:[%s343 + $0xec] sm:%s335] %v462
          %v464 = vld [vmem:[%s342 + $0xe8] sm:%s335]
          %465 = vst [vmem:[%s343 + $0xf0] sm:%s335] %v464
          %v466 = vld [vmem:[%s342 + $0xf8] sm:%s335]
          %467 = vst [vmem:[%s343 + $0xf4] sm:%s335] %v466
          %v468 = vld [vmem:[%s342 + $0xec] sm:%s335]
          %469 = vst [vmem:[%s343 + $0xf8] sm:%s335] %v468
          %v470 = vld [vmem:[%s342 + $0xfc] sm:%s335]
          %471 = vst [vmem:[%s343 + $0xfc] sm:%s335] %v470
        $region63: #{encoder_forward.3} parent=57 // loop_footer
          %s341 = sadd.s32 1, %s337
        $region64: #{encoder_forward.3} parent=57 // loop_footer_branch
          %336 = sbr.rel target = $region60
        $region65: #{encoder_forward.3} parent=57 // loop_exit
          _
      $region58: #{encoder_forward.3} parent=12 // pred_fallthru
        _
      // Predicated region
      $region84: #{encoder_forward.3} parent=12 // pred_check
        _
      $region85: #{encoder_forward.3} parent=12 // pred_check_branch
        %629 = sbr.rel (0) target = $region87
      $region86: #{encoder_forward.3} parent=12 // pred_region
        %630 = vsyncadd %s326, 4096
      $region87: #{encoder_forward.3} parent=12 // pred_fallthru
        _
      %631 = vst [vmem:[#allocation2] sm:$0xff] 0.0
      %632 = vst [vmem:[#allocation3] sm:$0xff] 0.0
      %s633 = smul.u32 4, 16
      %s634 = smul.u32 %s633, 4
      %s635 = sshll.u32 %s634, 4
      %636 = dma.done [#allocation7], %s635
      %s637 = sshll.u32 %s634, 4
      %638 = dma.done %s326, %s637
    $region13: #{encoder_forward.3} parent=1 // pred_fallthru
      _
    %v639 = vld [vmem:[%s0] sm:$0xf]
    %v640 = vld [vmem:[%s0 + $0x4] sm:$0xf]
    %v641 = vld [vmem:[%s0 + $0x8] sm:$0xf]
    %v642 = vld [vmem:[%s0 + $0xc] sm:$0xf]
    %v643 = vld [vmem:[%s0 + $0x10] sm:$0xf]
    %v644 = vld [vmem:[%s0 + $0x14] sm:$0xf]
    %v645 = vld [vmem:[%s0 + $0x18] sm:$0xf]
    %v646 = vld [vmem:[%s0 + $0x1c] sm:$0xf]
    %v647 = vld [vmem:[#allocation5] sm:$0xff]
    %v648 = vld [vmem:[#allocation5 + $0x8] sm:$0xff]
    %v649 = vld [vmem:[#allocation5 + $0x10] sm:$0xff]
    %v650 = vld [vmem:[#allocation5 + $0x18] sm:$0xff]
    %v651 = vld [vmem:[#allocation5 + $0x20] sm:$0xff]
    %v652 = vld [vmem:[#allocation5 + $0x28] sm:$0xff]
    %v653 = vld [vmem:[#allocation5 + $0x30] sm:$0xff]
    %v654 = vld [vmem:[#allocation5 + $0x38] sm:$0xff]
    %v655 = vld [vmem:[#allocation5 + $0x40] sm:$0xff]
    %v656 = vld [vmem:[#allocation5 + $0x48] sm:$0xff]
    %v657 = vld [vmem:[#allocation5 + $0x50] sm:$0xff]
    %v658 = vld [vmem:[#allocation5 + $0x58] sm:$0xff]
    %v659 = vld [vmem:[#allocation5 + $0x60] sm:$0xff]
    %v660 = vld [vmem:[#allocation5 + $0x68] sm:$0xff]
    %v661 = vld [vmem:[#allocation5 + $0x70] sm:$0xff]
    %v662 = vld [vmem:[#allocation5 + $0x78] sm:$0xff]
    %v663 = vld [vmem:[#allocation5 + $0x80] sm:$0xff]
    %v664 = vld [vmem:[#allocation5 + $0x88] sm:$0xff]
    %v665 = vld [vmem:[#allocation5 + $0x90] sm:$0xff]
    %v666 = vld [vmem:[#allocation5 + $0x98] sm:$0xff]
    %v667 = vld [vmem:[#allocation5 + $0xa0] sm:$0xff]
    %v668 = vld [vmem:[#allocation5 + $0xa8] sm:$0xff]
    %v669 = vld [vmem:[#allocation5 + $0xb0] sm:$0xff]
    %v670 = vld [vmem:[#allocation5 + $0xb8] sm:$0xff]
    %v671 = vld [vmem:[#allocation5 + $0xc0] sm:$0xff]
    %v672 = vld [vmem:[#allocation5 + $0xc8] sm:$0xff]
    %v673 = vld [vmem:[#allocation5 + $0xd0] sm:$0xff]
    %v674 = vld [vmem:[#allocation5 + $0xd8] sm:$0xff]
    %v675 = vld [vmem:[#allocation5 + $0xe0] sm:$0xff]
    %v676 = vld [vmem:[#allocation5 + $0xe8] sm:$0xff]
    %v677 = vld [vmem:[#allocation5 + $0xf0] sm:$0xff]
    %v678 = vld [vmem:[#allocation5 + $0xf8] sm:$0xff]
    %v679 = vld [vmem:[%s3] sm:$0xf]
    %v681 = vlaneseq
    %v682 = vshrl.u32 %v681, 7
    %v683 = vsub.s32 0, %v682
    %v684 = vrot.slane %v679, %v683
    %v685 = vlaneseq
    %v686 = vshrl.u32 %v685, 7
    %v687 = vsub.s32 1, %v686
    %v688 = vrot.slane %v679, %v687
    %v689 = vlaneseq
    %v690 = vshrl.u32 %v689, 7
    %v691 = vsub.s32 2, %v690
    %v692 = vrot.slane %v679, %v691
    %v693 = vlaneseq
    %v694 = vshrl.u32 %v693, 7
    %v695 = vsub.s32 3, %v694
    %v696 = vrot.slane %v679, %v695
    %v709 = vunpack.c.l.b16 %v639
    %v710 = vunpack.c.l.b16 %v640
    %v711 = vunpack.c.l.b16 %v641
    %v712 = vunpack.c.l.b16 %v642
    %v713 = vunpack.c.l.b16 %v643
    %v714 = vunpack.c.l.b16 %v644
    %v715 = vunpack.c.l.b16 %v645
    %v716 = vunpack.c.l.b16 %v646
    %v717 = vpack.c.b16 %v710, %v709
    %v718 = vpack.c.b16 %v712, %v711
    %v719 = vpack.c.b16 %v714, %v713
    %v720 = vpack.c.b16 %v716, %v715
    %725 = vmatprep.subr.bf16.mxu0 %v648
    %726 = vmatpush1.bf16.msra.mxu0 %v647
    %727 = vmatprep.subr.bf16.mxu0 %v652
    %728 = vmatpush1.bf16.msra.mxu0 %v651
    %729 = vmatprep.subr.bf16.mxu0 %v656
    %730 = vmatpush1.bf16.msra.mxu0 %v655
    %731 = vmatprep.subr.bf16.mxu0 %v660
    %732 = vmatpush1.bf16.msra.mxu0 %v659
    %733 = vmatprep.subr.bf16.mxu0 %v664
    %734 = vmatpush1.bf16.msra.mxu0 %v663
    %735 = vmatprep.subr.bf16.mxu0 %v668
    %736 = vmatpush1.bf16.msra.mxu0 %v667
    %737 = vmatprep.subr.bf16.mxu0 %v672
    %738 = vmatpush1.bf16.msra.mxu0 %v671
    %739 = vmatprep.subr.bf16.mxu0 %v676
    %740 = vmatpush1.bf16.msra.mxu0 %v675
    %741 = vmatprep.subr.bf16.mxu0 0
    %742 = vmatpush1.bf16.msra.mxu0 0
    %743 = vmatprep.subr.bf16.mxu0 0
    %744 = vmatpush1.bf16.msra.mxu0 0
    %745 = vmatprep.subr.bf16.mxu0 0
    %746 = vmatpush1.bf16.msra.mxu0 0
    %747 = vmatprep.subr.bf16.mxu0 0
    %748 = vmatpush1.bf16.msra.mxu0 0
    %749 = vmatprep.subr.bf16.mxu0 0
    %750 = vmatpush1.bf16.msra.mxu0 0
    %751 = vmatprep.subr.bf16.mxu0 0
    %752 = vmatpush1.bf16.msra.mxu0 0
    %753 = vmatprep.subr.bf16.mxu0 0
    %754 = vmatpush1.bf16.msra.mxu0 0
    %755 = vmatprep.subr.bf16.mxu0 0
    %756 = vmatpush1.bf16.msra.mxu0 0
    %757 = vmatprep.mubr.bf16.mxu0 0
    %758 = vmatmul.mubr.bf16.gmra.mrb[0].mxu0 %v717
    %v759 = vpop.f32.mrb[0].mxu0
    %v760 = vadd.f32 %v684, %v759
    %v761 = vpop.f32.mrb[0].mxu0
    %v762 = vadd.f32 %v688, %v761
    %v763 = vpop.f32.mrb[0].mxu0
    %v764 = vadd.f32 %v684, %v763
    %v765 = vpop.f32.mrb[0].mxu0
    %v766 = vadd.f32 %v688, %v765
    %767 = vmatprep.mubr.bf16.mxu0 0
    %768 = vmatmul.mubr.bf16.gmra.mrb[0].mxu0 %v718
    %v769 = vpop.f32.mrb[0].mxu0
    %v770 = vadd.f32 %v684, %v769
    %v771 = vpop.f32.mrb[0].mxu0
    %v772 = vadd.f32 %v688, %v771
    %v773 = vpop.f32.mrb[0].mxu0
    %v774 = vadd.f32 %v684, %v773
    %v775 = vpop.f32.mrb[0].mxu0
    %v776 = vadd.f32 %v688, %v775
    %777 = vmatprep.mubr.bf16.mxu0 0
    %778 = vmatmul.mubr.bf16.gmra.mrb[0].mxu0 %v719
    %v779 = vpop.f32.mrb[0].mxu0
    %v780 = vadd.f32 %v684, %v779
    %v781 = vpop.f32.mrb[0].mxu0
    %v782 = vadd.f32 %v688, %v781
    %v783 = vpop.f32.mrb[0].mxu0
    %v784 = vadd.f32 %v684, %v783
    %v785 = vpop.f32.mrb[0].mxu0
    %v786 = vadd.f32 %v688, %v785
    %787 = vmatprep.mubr.bf16.mxu0 0
    %788 = vmatmul.mubr.bf16.gmra.mrb[0].mxu0 %v720
    %v789 = vpop.f32.mrb[0].mxu0
    %v790 = vadd.f32 %v684, %v789
    %v791 = vpop.f32.mrb[0].mxu0
    %v792 = vadd.f32 %v688, %v791
    %v793 = vpop.f32.mrb[0].mxu0
    %v794 = vadd.f32 %v684, %v793
    %v795 = vpop.f32.mrb[0].mxu0
    %v796 = vadd.f32 %v688, %v795
    %797 = vdwg.mxu0
    %798 = vmatprep.subr.bf16.mxu0 %v650
    %799 = vmatpush1.bf16.msra.mxu0 %v649
    %800 = vmatprep.subr.bf16.mxu0 %v654
    %801 = vmatpush1.bf16.msra.mxu0 %v653
    %802 = vmatprep.subr.bf16.mxu0 %v658
    %803 = vmatpush1.bf16.msra.mxu0 %v657
    %804 = vmatprep.subr.bf16.mxu0 %v662
    %805 = vmatpush1.bf16.msra.mxu0 %v661
    %806 = vmatprep.subr.bf16.mxu0 %v666
    %807 = vmatpush1.bf16.msra.mxu0 %v665
    %808 = vmatprep.subr.bf16.mxu0 %v670
    %809 = vmatpush1.bf16.msra.mxu0 %v669
    %810 = vmatprep.subr.bf16.mxu0 %v674
    %811 = vmatpush1.bf16.msra.mxu0 %v673
    %812 = vmatprep.subr.bf16.mxu0 %v678
    %813 = vmatpush1.bf16.msra.mxu0 %v677
    %814 = vmatprep.subr.bf16.mxu0 0
    %815 = vmatpush1.bf16.msra.mxu0 0
    %816 = vmatprep.subr.bf16.mxu0 0
    %817 = vmatpush1.bf16.msra.mxu0 0
    %818 = vmatprep.subr.bf16.mxu0 0
    %819 = vmatpush1.bf16.msra.mxu0 0
    %820 = vmatprep.subr.bf16.mxu0 0
    %821 = vmatpush1.bf16.msra.mxu0 0
    %822 = vmatprep.subr.bf16.mxu0 0
    %823 = vmatpush1.bf16.msra.mxu0 0
    %824 = vmatprep.subr.bf16.mxu0 0
    %825 = vmatpush1.bf16.msra.mxu0 0
    %826 = vmatprep.subr.bf16.mxu0 0
    %827 = vmatpush1.bf16.msra.mxu0 0
    %828 = vmatprep.subr.bf16.mxu0 0
    %829 = vmatpush1.bf16.msra.mxu0 0
    %830 = vmatprep.mubr.bf16.mxu0 0
    %831 = vmatmul.mubr.bf16.gmra.mrb[0].mxu0 %v717
    %v832 = vpop.f32.mrb[0].mxu0
    %v833 = vadd.f32 %v692, %v832
    %v834 = vpop.f32.mrb[0].mxu0
    %v835 = vadd.f32 %v696, %v834
    %v836 = vpop.f32.mrb[0].mxu0
    %v837 = vadd.f32 %v692, %v836
    %v838 = vpop.f32.mrb[0].mxu0
    %v839 = vadd.f32 %v696, %v838
    %840 = vmatprep.mubr.bf16.mxu0 0
    %841 = vmatmul.mubr.bf16.gmra.mrb[0].mxu0 %v718
    %v842 = vpop.f32.mrb[0].mxu0
    %v843 = vadd.f32 %v692, %v842
    %v844 = vpop.f32.mrb[0].mxu0
    %v845 = vadd.f32 %v696, %v844
    %v846 = vpop.f32.mrb[0].mxu0
    %v847 = vadd.f32 %v692, %v846
    %v848 = vpop.f32.mrb[0].mxu0
    %v849 = vadd.f32 %v696, %v848
    %850 = vmatprep.mubr.bf16.mxu0 0
    %851 = vmatmul.mubr.bf16.gmra.mrb[0].mxu0 %v719
    %v852 = vpop.f32.mrb[0].mxu0
    %v853 = vadd.f32 %v692, %v852
    %v854 = vpop.f32.mrb[0].mxu0
    %v855 = vadd.f32 %v696, %v854
    %v856 = vpop.f32.mrb[0].mxu0
    %v857 = vadd.f32 %v692, %v856
    %v858 = vpop.f32.mrb[0].mxu0
    %v859 = vadd.f32 %v696, %v858
    %860 = vmatprep.mubr.bf16.mxu0 0
    %861 = vmatmul.mubr.bf16.gmra.mrb[0].mxu0 %v720
    %v862 = vpop.f32.mrb[0].mxu0
    %v863 = vadd.f32 %v692, %v862
    %v864 = vpop.f32.mrb[0].mxu0
    %v865 = vadd.f32 %v696, %v864
    %v866 = vpop.f32.mrb[0].mxu0
    %v867 = vadd.f32 %v692, %v866
    %v868 = vpop.f32.mrb[0].mxu0
    %v869 = vadd.f32 %v696, %v868
    %870 = vdwg.mxu0
    %871 = vst [vmem:[#allocation4] sm:$0xff] %v760
    %872 = vst [vmem:[#allocation4 + $0x8] sm:$0xff] %v762
    %873 = vst [vmem:[#allocation4 + $0x10] sm:$0xff] %v833
    %874 = vst [vmem:[#allocation4 + $0x18] sm:$0xff] %v835
    %875 = vst [vmem:[#allocation4 + $0x20] sm:$0xff] %v764
    %876 = vst [vmem:[#allocation4 + $0x28] sm:$0xff] %v766
    %877 = vst [vmem:[#allocation4 + $0x30] sm:$0xff] %v837
    %878 = vst [vmem:[#allocation4 + $0x38] sm:$0xff] %v839
    %879 = vst [vmem:[#allocation4 + $0x40] sm:$0xff] %v770
    %880 = vst [vmem:[#allocation4 + $0x48] sm:$0xff] %v772
    %881 = vst [vmem:[#allocation4 + $0x50] sm:$0xff] %v843
    %882 = vst [vmem:[#allocation4 + $0x58] sm:$0xff] %v845
    %883 = vst [vmem:[#allocation4 + $0x60] sm:$0xff] %v774
    %884 = vst [vmem:[#allocation4 + $0x68] sm:$0xff] %v776
    %885 = vst [vmem:[#allocation4 + $0x70] sm:$0xff] %v847
    %886 = vst [vmem:[#allocation4 + $0x78] sm:$0xff] %v849
    %887 = vst [vmem:[#allocation4 + $0x80] sm:$0xff] %v780
    %888 = vst [vmem:[#allocation4 + $0x88] sm:$0xff] %v782
    %889 = vst [vmem:[#allocation4 + $0x90] sm:$0xff] %v853
    %890 = vst [vmem:[#allocation4 + $0x98] sm:$0xff] %v855
    %891 = vst [vmem:[#allocation4 + $0xa0] sm:$0xff] %v784
    %892 = vst [vmem:[#allocation4 + $0xa8] sm:$0xff] %v786
    %893 = vst [vmem:[#allocation4 + $0xb0] sm:$0xff] %v857
    %894 = vst [vmem:[#allocation4 + $0xb8] sm:$0xff] %v859
    %895 = vst [vmem:[#allocation4 + $0xc0] sm:$0xff] %v790
    %896 = vst [vmem:[#allocation4 + $0xc8] sm:$0xff] %v792
    %897 = vst [vmem:[#allocation4 + $0xd0] sm:$0xff] %v863
    %898 = vst [vmem:[#allocation4 + $0xd8] sm:$0xff] %v865
    %899 = vst [vmem:[#allocation4 + $0xe0] sm:$0xff] %v794
    %900 = vst [vmem:[#allocation4 + $0xe8] sm:$0xff] %v796
    %901 = vst [vmem:[#allocation4 + $0xf0] sm:$0xff] %v867
    %902 = vst [vmem:[#allocation4 + $0xf8] sm:$0xff] %v869
    %v903 = vld [vmem:[#allocation2] sm:$0xff]
    %v904 = vld [vmem:[#allocation3] sm:$0xff]
    %v905 = vld [vmem:[#allocation4] sm:$0xff]
    %v906 = vld [vmem:[#allocation4 + $0x8] sm:$0xff]
    %v907 = vld [vmem:[#allocation4 + $0x10] sm:$0xff]
    %v908 = vld [vmem:[#allocation4 + $0x18] sm:$0xff]
    %v909 = vpack.c.bf16 %v903, %v903
    %v910 = vld [vmem:[#allocation6] sm:$0xff]
    %v911 = vld [vmem:[#allocation6 + $0x8] sm:$0xff]
    %v912 = vld [vmem:[#allocation6 + $0x10] sm:$0xff]
    %v913 = vld [vmem:[#allocation6 + $0x18] sm:$0xff]
    %v914 = vld [vmem:[#allocation6 + $0x20] sm:$0xff]
    %v915 = vld [vmem:[#allocation6 + $0x28] sm:$0xff]
    %v916 = vld [vmem:[#allocation6 + $0x30] sm:$0xff]
    %v917 = vld [vmem:[#allocation6 + $0x38] sm:$0xff]
    %v918 = vld [vmem:[#allocation6 + $0x40] sm:$0xff]
    %v919 = vld [vmem:[#allocation6 + $0x48] sm:$0xff]
    %v920 = vld [vmem:[#allocation6 + $0x50] sm:$0xff]
    %v921 = vld [vmem:[#allocation6 + $0x58] sm:$0xff]
    %v922 = vld [vmem:[#allocation6 + $0x60] sm:$0xff]
    %v923 = vld [vmem:[#allocation6 + $0x68] sm:$0xff]
    %v924 = vld [vmem:[#allocation6 + $0x70] sm:$0xff]
    %v925 = vld [vmem:[#allocation6 + $0x78] sm:$0xff]
    %v926 = vld [vmem:[#allocation6 + $0x80] sm:$0xff]
    %v927 = vld [vmem:[#allocation6 + $0x88] sm:$0xff]
    %v928 = vld [vmem:[#allocation6 + $0x90] sm:$0xff]
    %v929 = vld [vmem:[#allocation6 + $0x98] sm:$0xff]
    %v930 = vld [vmem:[#allocation6 + $0xa0] sm:$0xff]
    %v931 = vld [vmem:[#allocation6 + $0xa8] sm:$0xff]
    %v932 = vld [vmem:[#allocation6 + $0xb0] sm:$0xff]
    %v933 = vld [vmem:[#allocation6 + $0xb8] sm:$0xff]
    %v934 = vld [vmem:[#allocation6 + $0xc0] sm:$0xff]
    %v935 = vld [vmem:[#allocation6 + $0xc8] sm:$0xff]
    %v936 = vld [vmem:[#allocation6 + $0xd0] sm:$0xff]
    %v937 = vld [vmem:[#allocation6 + $0xd8] sm:$0xff]
    %v938 = vld [vmem:[#allocation6 + $0xe0] sm:$0xff]
    %v939 = vld [vmem:[#allocation6 + $0xe8] sm:$0xff]
    %v940 = vld [vmem:[#allocation6 + $0xf0] sm:$0xff]
    %v941 = vld [vmem:[#allocation6 + $0xf8] sm:$0xff]
    %942 = vmatprep.subr.bf16.mxu0 %v911
    %943 = vmatpush1.bf16.msra.mxu0 %v910
    %944 = vmatprep.subr.bf16.mxu0 %v915
    %945 = vmatpush1.bf16.msra.mxu0 %v914
    %946 = vmatprep.subr.bf16.mxu0 %v919
    %947 = vmatpush1.bf16.msra.mxu0 %v918
    %948 = vmatprep.subr.bf16.mxu0 %v923
    %949 = vmatpush1.bf16.msra.mxu0 %v922
    %950 = vmatprep.subr.bf16.mxu0 %v927
    %951 = vmatpush1.bf16.msra.mxu0 %v926
    %952 = vmatprep.subr.bf16.mxu0 %v931
    %953 = vmatpush1.bf16.msra.mxu0 %v930
    %954 = vmatprep.subr.bf16.mxu0 %v935
    %955 = vmatpush1.bf16.msra.mxu0 %v934
    %956 = vmatprep.subr.bf16.mxu0 %v939
    %957 = vmatpush1.bf16.msra.mxu0 %v938
    %958 = vmatprep.subr.bf16.mxu0 0
    %959 = vmatpush1.bf16.msra.mxu0 0
    %960 = vmatprep.subr.bf16.mxu0 0
    %961 = vmatpush1.bf16.msra.mxu0 0
    %962 = vmatprep.subr.bf16.mxu0 0
    %963 = vmatpush1.bf16.msra.mxu0 0
    %964 = vmatprep.subr.bf16.mxu0 0
    %965 = vmatpush1.bf16.msra.mxu0 0
    %966 = vmatprep.subr.bf16.mxu0 0
    %967 = vmatpush1.bf16.msra.mxu0 0
    %968 = vmatprep.subr.bf16.mxu0 0
    %969 = vmatpush1.bf16.msra.mxu0 0
    %970 = vmatprep.subr.bf16.mxu0 0
    %971 = vmatpush1.bf16.msra.mxu0 0
    %972 = vmatprep.subr.bf16.mxu0 0
    %973 = vmatpush1.bf16.msra.mxu0 0
    %974 = vmatprep.mubr.bf16.mxu0 0
    %975 = vmatmul.mubr.bf16.gmra.mrb[0].mxu0 %v909
    %v976 = vpop.f32.mrb[0].mxu0
    %v977 = vadd.f32 0.0, %v976
    %v978 = vpop.f32.mrb[0].mxu0
    %v979 = vadd.f32 0.0, %v978
    %v980 = vpop.f32.mrb[0].mxu0
    %v981 = vpop.f32.mrb[0].mxu0
    %982 = vdwg.mxu0
    %983 = vmatprep.subr.bf16.mxu0 %v913
    %984 = vmatpush1.bf16.msra.mxu0 %v912
    %985 = vmatprep.subr.bf16.mxu0 %v917
    %986 = vmatpush1.bf16.msra.mxu0 %v916
    %987 = vmatprep.subr.bf16.mxu0 %v921
    %988 = vmatpush1.bf16.msra.mxu0 %v920
    %989 = vmatprep.subr.bf16.mxu0 %v925
    %990 = vmatpush1.bf16.msra.mxu0 %v924
    %991 = vmatprep.subr.bf16.mxu0 %v929
    %992 = vmatpush1.bf16.msra.mxu0 %v928
    %993 = vmatprep.subr.bf16.mxu0 %v933
    %994 = vmatpush1.bf16.msra.mxu0 %v932
    %995 = vmatprep.subr.bf16.mxu0 %v937
    %996 = vmatpush1.bf16.msra.mxu0 %v936
    %997 = vmatprep.subr.bf16.mxu0 %v941
    %998 = vmatpush1.bf16.msra.mxu0 %v940
    %999 = vmatprep.subr.bf16.mxu0 0
    %1000 = vmatpush1.bf16.msra.mxu0 0
    %1001 = vmatprep.subr.bf16.mxu0 0
    %1002 = vmatpush1.bf16.msra.mxu0 0
    %1003 = vmatprep.subr.bf16.mxu0 0
    %1004 = vmatpush1.bf16.msra.mxu0 0
    %1005 = vmatprep.subr.bf16.mxu0 0
    %1006 = vmatpush1.bf16.msra.mxu0 0
    %1007 = vmatprep.subr.bf16.mxu0 0
    %1008 = vmatpush1.bf16.msra.mxu0 0
    %1009 = vmatprep.subr.bf16.mxu0 0
    %1010 = vmatpush1.bf16.msra.mxu0 0
    %1011 = vmatprep.subr.bf16.mxu0 0
    %1012 = vmatpush1.bf16.msra.mxu0 0
    %1013 = vmatprep.subr.bf16.mxu0 0
    %1014 = vmatpush1.bf16.msra.mxu0 0
    %1015 = vmatprep.mubr.bf16.mxu0 0
    %1016 = vmatmul.mubr.bf16.gmra.mrb[0].mxu0 %v909
    %v1017 = vpop.f32.mrb[0].mxu0
    %v1018 = vadd.f32 0.0, %v1017
    %v1019 = vpop.f32.mrb[0].mxu0
    %v1020 = vadd.f32 0.0, %v1019
    %v1021 = vpop.f32.mrb[0].mxu0
    %v1022 = vpop.f32.mrb[0].mxu0
    %1023 = vdwg.mxu0
    %v1024 = vadd.f32 %v905, %v977
    %v1025 = vadd.f32 %v906, %v979
    %v1026 = vadd.f32 %v907, %v1018
    %v1027 = vadd.f32 %v908, %v1020
    %v1028 = vxor.u32 %v1024, 2147483648
    %v1029 = vmul.f32 %v1028, 1.442695
    %v1030 = vpow.pop %v1029
    %v1031 = vadd.f32 %v1030, 1.0
    %v1032 = vrcp.pop %v1031
    %v1033 = vmul.f32 1.0, %v1032
    %v1034 = vxor.u32 %v1025, 2147483648
    %v1035 = vmul.f32 %v1034, 1.442695
    %v1036 = vpow.pop %v1035
    %v1037 = vadd.f32 %v1036, 1.0
    %v1038 = vrcp.pop %v1037
    %v1039 = vmul.f32 1.0, %v1038
    %v1040 = vtanh.pop %v1026
    %v1041 = vxor.u32 %v1027, 2147483648
    %v1042 = vmul.f32 %v1041, 1.442695
    %v1043 = vpow.pop %v1042
    %v1044 = vadd.f32 %v1043, 1.0
    %v1045 = vrcp.pop %v1044
    %v1046 = vmul.f32 1.0, %v1045
    %v1047 = vmul.f32 %v1039, %v904
    %v1048 = vmul.f32 %v1033, %v1040
    %v1049 = vadd.f32 %v1047, %v1048
    %v1050 = vtanh.pop %v1049
    %v1051 = vmul.f32 %v1046, %v1050
    %v1052 = vpack.c.bf16 %v1051, %v1051
    %1053 = vst [vmem:[#allocation8] sm:$0xf] %v1052
    %s1054 = scalar_lea.vmem [#allocation4], 32
    %v1055 = vld [vmem:[%s1054] sm:$0xff]
    %v1056 = vld [vmem:[%s1054 + $0x8] sm:$0xff]
    %v1057 = vld [vmem:[%s1054 + $0x10] sm:$0xff]
    %v1058 = vld [vmem:[%s1054 + $0x18] sm:$0xff]
    %v1059 = vld [vmem:[#allocation6] sm:$0xff]
    %v1060 = vld [vmem:[#allocation6 + $0x8] sm:$0xff]
    %v1061 = vld [vmem:[#allocation6 + $0x10] sm:$0xff]
    %v1062 = vld [vmem:[#allocation6 + $0x18] sm:$0xff]
    %v1063 = vld [vmem:[#allocation6 + $0x20] sm:$0xff]
    %v1064 = vld [vmem:[#allocation6 + $0x28] sm:$0xff]
    %v1065 = vld [vmem:[#allocation6 + $0x30] sm:$0xff]
    %v1066 = vld [vmem:[#allocation6 + $0x38] sm:$0xff]
    %v1067 = vld [vmem:[#allocation6 + $0x40] sm:$0xff]
    %v1068 = vld [vmem:[#allocation6 + $0x48] sm:$0xff]
    %v1069 = vld [vmem:[#allocation6 + $0x50] sm:$0xff]
    %v1070 = vld [vmem:[#allocation6 + $0x58] sm:$0xff]
    %v1071 = vld [vmem:[#allocation6 + $0x60] sm:$0xff]
    %v1072 = vld [vmem:[#allocation6 + $0x68] sm:$0xff]
    %v1073 = vld [vmem:[#allocation6 + $0x70] sm:$0xff]
    %v1074 = vld [vmem:[#allocation6 + $0x78] sm:$0xff]
    %v1075 = vld [vmem:[#allocation6 + $0x80] sm:$0xff]
    %v1076 = vld [vmem:[#allocation6 + $0x88] sm:$0xff]
    %v1077 = vld [vmem:[#allocation6 + $0x90] sm:$0xff]
    %v1078 = vld [vmem:[#allocation6 + $0x98] sm:$0xff]
    %v1079 = vld [vmem:[#allocation6 + $0xa0] sm:$0xff]
    %v1080 = vld [vmem:[#allocation6 + $0xa8] sm:$0xff]
    %v1081 = vld [vmem:[#allocation6 + $0xb0] sm:$0xff]
    %v1082 = vld [vmem:[#allocation6 + $0xb8] sm:$0xff]
    %v1083 = vld [vmem:[#allocation6 + $0xc0] sm:$0xff]
    %v1084 = vld [vmem:[#allocation6 + $0xc8] sm:$0xff]
    %v1085 = vld [vmem:[#allocation6 + $0xd0] sm:$0xff]
    %v1086 = vld [vmem:[#allocation6 + $0xd8] sm:$0xff]
    %v1087 = vld [vmem:[#allocation6 + $0xe0] sm:$0xff]
    %v1088 = vld [vmem:[#allocation6 + $0xe8] sm:$0xff]
    %v1089 = vld [vmem:[#allocation6 + $0xf0] sm:$0xff]
    %v1090 = vld [vmem:[#allocation6 + $0xf8] sm:$0xff]
    %1091 = vmatprep.subr.bf16.mxu0 %v1060
    %1092 = vmatpush1.bf16.msra.mxu0 %v1059
    %1093 = vmatprep.subr.bf16.mxu0 %v1064
    %1094 = vmatpush1.bf16.msra.mxu0 %v1063
    %1095 = vmatprep.subr.bf16.mxu0 %v1068
    %1096 = vmatpush1.bf16.msra.mxu0 %v1067
    %1097 = vmatprep.subr.bf16.mxu0 %v1072
    %1098 = vmatpush1.bf16.msra.mxu0 %v1071
    %1099 = vmatprep.subr.bf16.mxu0 %v1076
    %1100 = vmatpush1.bf16.msra.mxu0 %v1075
    %1101 = vmatprep.subr.bf16.mxu0 %v1080
    %1102 = vmatpush1.bf16.msra.mxu0 %v1079
    %1103 = vmatprep.subr.bf16.mxu0 %v1084
    %1104 = vmatpush1.bf16.msra.mxu0 %v1083
    %1105 = vmatprep.subr.bf16.mxu0 %v1088
    %1106 = vmatpush1.bf16.msra.mxu0 %v1087
    %1107 = vmatprep.subr.bf16.mxu0 0
    %1108 = vmatpush1.bf16.msra.mxu0 0
    %1109 = vmatprep.subr.bf16.mxu0 0
    %1110 = vmatpush1.bf16.msra.mxu0 0
    %1111 = vmatprep.subr.bf16.mxu0 0
    %1112 = vmatpush1.bf16.msra.mxu0 0
    %1113 = vmatprep.subr.bf16.mxu0 0
    %1114 = vmatpush1.bf16.msra.mxu0 0
    %1115 = vmatprep.subr.bf16.mxu0 0
    %1116 = vmatpush1.bf16.msra.mxu0 0
    %1117 = vmatprep.subr.bf16.mxu0 0
    %1118 = vmatpush1.bf16.msra.mxu0 0
    %1119 = vmatprep.subr.bf16.mxu0 0
    %1120 = vmatpush1.bf16.msra.mxu0 0
    %1121 = vmatprep.subr.bf16.mxu0 0
    %1122 = vmatpush1.bf16.msra.mxu0 0
    %1123 = vmatprep.mubr.bf16.mxu0 0
    %1124 = vmatmul.mubr.bf16.gmra.mrb[0].mxu0 %v1052
    %v1125 = vpop.f32.mrb[0].mxu0
    %v1126 = vadd.f32 0.0, %v1125
    %v1127 = vpop.f32.mrb[0].mxu0
    %v1128 = vadd.f32 0.0, %v1127
    %v1129 = vpop.f32.mrb[0].mxu0
    %v1130 = vpop.f32.mrb[0].mxu0
    %1131 = vdwg.mxu0
    %1132 = vmatprep.subr.bf16.mxu0 %v1062
    %1133 = vmatpush1.bf16.msra.mxu0 %v1061
    %1134 = vmatprep.subr.bf16.mxu0 %v1066
    %1135 = vmatpush1.bf16.msra.mxu0 %v1065
    %1136 = vmatprep.subr.bf16.mxu0 %v1070
    %1137 = vmatpush1.bf16.msra.mxu0 %v1069
    %1138 = vmatprep.subr.bf16.mxu0 %v1074
    %1139 = vmatpush1.bf16.msra.mxu0 %v1073
    %1140 = vmatprep.subr.bf16.mxu0 %v1078
    %1141 = vmatpush1.bf16.msra.mxu0 %v1077
    %1142 = vmatprep.subr.bf16.mxu0 %v1082
    %1143 = vmatpush1.bf16.msra.mxu0 %v1081
    %1144 = vmatprep.subr.bf16.mxu0 %v1086
    %1145 = vmatpush1.bf16.msra.mxu0 %v1085
    %1146 = vmatprep.subr.bf16.mxu0 %v1090
    %1147 = vmatpush1.bf16.msra.mxu0 %v1089
    %1148 = vmatprep.subr.bf16.mxu0 0
    %1149 = vmatpush1.bf16.msra.mxu0 0
    %1150 = vmatprep.subr.bf16.mxu0 0
    %1151 = vmatpush1.bf16.msra.mxu0 0
    %1152 = vmatprep.subr.bf16.mxu0 0
    %1153 = vmatpush1.bf16.msra.mxu0 0
    %1154 = vmatprep.subr.bf16.mxu0 0
    %1155 = vmatpush1.bf16.msra.mxu0 0
    %1156 = vmatprep.subr.bf16.mxu0 0
    %1157 = vmatpush1.bf16.msra.mxu0 0
    %1158 = vmatprep.subr.bf16.mxu0 0
    %1159 = vmatpush1.bf16.msra.mxu0 0
    %1160 = vmatprep.subr.bf16.mxu0 0
    %1161 = vmatpush1.bf16.msra.mxu0 0
    %1162 = vmatprep.subr.bf16.mxu0 0
    %1163 = vmatpush1.bf16.msra.mxu0 0
    %1164 = vmatprep.mubr.bf16.mxu0 0
    %1165 = vmatmul.mubr.bf16.gmra.mrb[0].mxu0 %v1052
    %v1166 = vpop.f32.mrb[0].mxu0
    %v1167 = vadd.f32 0.0, %v1166
    %v1168 = vpop.f32.mrb[0].mxu0
    %v1169 = vadd.f32 0.0, %v1168
    %v1170 = vpop.f32.mrb[0].mxu0
    %v1171 = vpop.f32.mrb[0].mxu0
    %1172 = vdwg.mxu0
    %v1173 = vadd.f32 %v1055, %v1126
    %v1174 = vadd.f32 %v1056, %v1128
    %v1175 = vadd.f32 %v1057, %v1167
    %v1176 = vadd.f32 %v1058, %v1169
    %v1177 = vxor.u32 %v1173, 2147483648
    %v1178 = vmul.f32 %v1177, 1.442695
    %v1179 = vpow.pop %v1178
    %v1180 = vadd.f32 %v1179, 1.0
    %v1181 = vrcp.pop %v1180
    %v1182 = vmul.f32 1.0, %v1181
    %v1183 = vxor.u32 %v1174, 2147483648
    %v1184 = vmul.f32 %v1183, 1.442695
    %v1185 = vpow.pop %v1184
    %v1186 = vadd.f32 %v1185, 1.0
    %v1187 = vrcp.pop %v1186
    %v1188 = vmul.f32 1.0, %v1187
    %v1189 = vtanh.pop %v1175
    %v1190 = vxor.u32 %v1176, 2147483648
    %v1191 = vmul.f32 %v1190, 1.442695
    %v1192 = vpow.pop %v1191
    %v1193 = vadd.f32 %v1192, 1.0
    %v1194 = vrcp.pop %v1193
    %v1195 = vmul.f32 1.0, %v1194
    %v1196 = vmul.f32 %v1188, %v1049
    %v1197 = vmul.f32 %v1182, %v1189
    %v1198 = vadd.f32 %v1196, %v1197
    %v1199 = vtanh.pop %v1198
    %v1200 = vmul.f32 %v1195, %v1199
    %v1201 = vpack.c.bf16 %v1200, %v1200
    %s1202 = scalar_lea.vmem [#allocation8], 4
    %1203 = vst [vmem:[%s1202] sm:$0xf] %v1201
    %s1204 = scalar_lea.vmem [#allocation4], 64
    %v1205 = vld [vmem:[%s1204] sm:$0xff]
    %v1206 = vld [vmem:[%s1204 + $0x8] sm:$0xff]
    %v1207 = vld [vmem:[%s1204 + $0x10] sm:$0xff]
    %v1208 = vld [vmem:[%s1204 + $0x18] sm:$0xff]
    %v1209 = vld [vmem:[#allocation6] sm:$0xff]
    %v1210 = vld [vmem:[#allocation6 + $0x8] sm:$0xff]
    %v1211 = vld [vmem:[#allocation6 + $0x10] sm:$0xff]
    %v1212 = vld [vmem:[#allocation6 + $0x18] sm:$0xff]
    %v1213 = vld [vmem:[#allocation6 + $0x20] sm:$0xff]
    %v1214 = vld [vmem:[#allocation6 + $0x28] sm:$0xff]
    %v1215 = vld [vmem:[#allocation6 + $0x30] sm:$0xff]
    %v1216 = vld [vmem:[#allocation6 + $0x38] sm:$0xff]
    %v1217 = vld [vmem:[#allocation6 + $0x40] sm:$0xff]
    %v1218 = vld [vmem:[#allocation6 + $0x48] sm:$0xff]
    %v1219 = vld [vmem:[#allocation6 + $0x50] sm:$0xff]
    %v1220 = vld [vmem:[#allocation6 + $0x58] sm:$0xff]
    %v1221 = vld [vmem:[#allocation6 + $0x60] sm:$0xff]
    %v1222 = vld [vmem:[#allocation6 + $0x68] sm:$0xff]
    %v1223 = vld [vmem:[#allocation6 + $0x70] sm:$0xff]
    %v1224 = vld [vmem:[#allocation6 + $0x78] sm:$0xff]
    %v1225 = vld [vmem:[#allocation6 + $0x80] sm:$0xff]
    %v1226 = vld [vmem:[#allocation6 + $0x88] sm:$0xff]
    %v1227 = vld [vmem:[#allocation6 + $0x90] sm:$0xff]
    %v1228 = vld [vmem:[#allocation6 + $0x98] sm:$0xff]
    %v1229 = vld [vmem:[#allocation6 + $0xa0] sm:$0xff]
    %v1230 = vld [vmem:[#allocation6 + $0xa8] sm:$0xff]
    %v1231 = vld [vmem:[#allocation6 + $0xb0] sm:$0xff]
    %v1232 = vld [vmem:[#allocation6 + $0xb8] sm:$0xff]
    %v1233 = vld [vmem:[#allocation6 + $0xc0] sm:$0xff]
    %v1234 = vld [vmem:[#allocation6 + $0xc8] sm:$0xff]
    %v1235 = vld [vmem:[#allocation6 + $0xd0] sm:$0xff]
    %v1236 = vld [vmem:[#allocation6 + $0xd8] sm:$0xff]
    %v1237 = vld [vmem:[#allocation6 + $0xe0] sm:$0xff]
    %v1238 = vld [vmem:[#allocation6 + $0xe8] sm:$0xff]
    %v1239 = vld [vmem:[#allocation6 + $0xf0] sm:$0xff]
    %v1240 = vld [vmem:[#allocation6 + $0xf8] sm:$0xff]
    %1241 = vmatprep.subr.bf16.mxu0 %v1210
    %1242 = vmatpush1.bf16.msra.mxu0 %v1209
    %1243 = vmatprep.subr.bf16.mxu0 %v1214
    %1244 = vmatpush1.bf16.msra.mxu0 %v1213
    %1245 = vmatprep.subr.bf16.mxu0 %v1218
    %1246 = vmatpush1.bf16.msra.mxu0 %v1217
    %1247 = vmatprep.subr.bf16.mxu0 %v1222
    %1248 = vmatpush1.bf16.msra.mxu0 %v1221
    %1249 = vmatprep.subr.bf16.mxu0 %v1226
    %1250 = vmatpush1.bf16.msra.mxu0 %v1225
    %1251 = vmatprep.subr.bf16.mxu0 %v1230
    %1252 = vmatpush1.bf16.msra.mxu0 %v1229
    %1253 = vmatprep.subr.bf16.mxu0 %v1234
    %1254 = vmatpush1.bf16.msra.mxu0 %v1233
    %1255 = vmatprep.subr.bf16.mxu0 %v1238
    %1256 = vmatpush1.bf16.msra.mxu0 %v1237
    %1257 = vmatprep.subr.bf16.mxu0 0
    %1258 = vmatpush1.bf16.msra.mxu0 0
    %1259 = vmatprep.subr.bf16.mxu0 0
    %1260 = vmatpush1.bf16.msra.mxu0 0
    %1261 = vmatprep.subr.bf16.mxu0 0
    %1262 = vmatpush1.bf16.msra.mxu0 0
    %1263 = vmatprep.subr.bf16.mxu0 0
    %1264 = vmatpush1.bf16.msra.mxu0 0
    %1265 = vmatprep.subr.bf16.mxu0 0
    %1266 = vmatpush1.bf16.msra.mxu0 0
    %1267 = vmatprep.subr.bf16.mxu0 0
    %1268 = vmatpush1.bf16.msra.mxu0 0
    %1269 = vmatprep.subr.bf16.mxu0 0
    %1270 = vmatpush1.bf16.msra.mxu0 0
    %1271 = vmatprep.subr.bf16.mxu0 0
    %1272 = vmatpush1.bf16.msra.mxu0 0
    %1273 = vmatprep.mubr.bf16.mxu0 0
    %1274 = vmatmul.mubr.bf16.gmra.mrb[0].mxu0 %v1201
    %v1275 = vpop.f32.mrb[0].mxu0
    %v1276 = vadd.f32 0.0, %v1275
    %v1277 = vpop.f32.mrb[0].mxu0
    %v1278 = vadd.f32 0.0, %v1277
    %v1279 = vpop.f32.mrb[0].mxu0
    %v1280 = vpop.f32.mrb[0].mxu0
    %1281 = vdwg.mxu0
    %1282 = vmatprep.subr.bf16.mxu0 %v1212
    %1283 = vmatpush1.bf16.msra.mxu0 %v1211
    %1284 = vmatprep.subr.bf16.mxu0 %v1216
    %1285 = vmatpush1.bf16.msra.mxu0 %v1215
    %1286 = vmatprep.subr.bf16.mxu0 %v1220
    %1287 = vmatpush1.bf16.msra.mxu0 %v1219
    %1288 = vmatprep.subr.bf16.mxu0 %v1224
    %1289 = vmatpush1.bf16.msra.mxu0 %v1223
    %1290 = vmatprep.subr.bf16.mxu0 %v1228
    %1291 = vmatpush1.bf16.msra.mxu0 %v1227
    %1292 = vmatprep.subr.bf16.mxu0 %v1232
    %1293 = vmatpush1.bf16.msra.mxu0 %v1231
    %1294 = vmatprep.subr.bf16.mxu0 %v1236
    %1295 = vmatpush1.bf16.msra.mxu0 %v1235
    %1296 = vmatprep.subr.bf16.mxu0 %v1240
    %1297 = vmatpush1.bf16.msra.mxu0 %v1239
    %1298 = vmatprep.subr.bf16.mxu0 0
    %1299 = vmatpush1.bf16.msra.mxu0 0
    %1300 = vmatprep.subr.bf16.mxu0 0
    %1301 = vmatpush1.bf16.msra.mxu0 0
    %1302 = vmatprep.subr.bf16.mxu0 0
    %1303 = vmatpush1.bf16.msra.mxu0 0
    %1304 = vmatprep.subr.bf16.mxu0 0
    %1305 = vmatpush1.bf16.msra.mxu0 0
    %1306 = vmatprep.subr.bf16.mxu0 0
    %1307 = vmatpush1.bf16.msra.mxu0 0
    %1308 = vmatprep.subr.bf16.mxu0 0
    %1309 = vmatpush1.bf16.msra.mxu0 0
    %1310 = vmatprep.subr.bf16.mxu0 0
    %1311 = vmatpush1.bf16.msra.mxu0 0
    %1312 = vmatprep.subr.bf16.mxu0 0
    %1313 = vmatpush1.bf16.msra.mxu0 0
    %1314 = vmatprep.mubr.bf16.mxu0 0
    %1315 = vmatmul.mubr.bf16.gmra.mrb[0].mxu0 %v1201
    %v1316 = vpop.f32.mrb[0].mxu0
    %v1317 = vadd.f32 0.0, %v1316
    %v1318 = vpop.f32.mrb[0].mxu0
    %v1319 = vadd.f32 0.0, %v1318
    %v1320 = vpop.f32.mrb[0].mxu0
    %v1321 = vpop.f32.mrb[0].mxu0
    %1322 = vdwg.mxu0
    %v1323 = vadd.f32 %v1205, %v1276
    %v1324 = vadd.f32 %v1206, %v1278
    %v1325 = vadd.f32 %v1207, %v1317
    %v1326 = vadd.f32 %v1208, %v1319
    %v1327 = vxor.u32 %v1323, 2147483648
    %v1328 = vmul.f32 %v1327, 1.442695
    %v1329 = vpow.pop %v1328
    %v1330 = vadd.f32 %v1329, 1.0
    %v1331 = vrcp.pop %v1330
    %v1332 = vmul.f32 1.0, %v1331
    %v1333 = vxor.u32 %v1324, 2147483648
    %v1334 = vmul.f32 %v1333, 1.442695
    %v1335 = vpow.pop %v1334
    %v1336 = vadd.f32 %v1335, 1.0
    %v1337 = vrcp.pop %v1336
    %v1338 = vmul.f32 1.0, %v1337
    %v1339 = vtanh.pop %v1325
    %v1340 = vxor.u32 %v1326, 2147483648
    %v1341 = vmul.f32 %v1340, 1.442695
    %v1342 = vpow.pop %v1341
    %v1343 = vadd.f32 %v1342, 1.0
    %v1344 = vrcp.pop %v1343
    %v1345 = vmul.f32 1.0, %v1344
    %v1346 = vmul.f32 %v1338, %v1198
    %v1347 = vmul.f32 %v1332, %v1339
    %v1348 = vadd.f32 %v1346, %v1347
    %v1349 = vtanh.pop %v1348
    %v1350 = vmul.f32 %v1345, %v1349
    %v1351 = vpack.c.bf16 %v1350, %v1350
    %s1352 = scalar_lea.vmem [#allocation8], 8
    %1353 = vst [vmem:[%s1352] sm:$0xf] %v1351
    %s1354 = scalar_lea.vmem [#allocation4], 96
    %v1355 = vld [vmem:[%s1354] sm:$0xff]
    %v1356 = vld [vmem:[%s1354 + $0x8] sm:$0xff]
    %v1357 = vld [vmem:[%s1354 + $0x10] sm:$0xff]
    %v1358 = vld [vmem:[%s1354 + $0x18] sm:$0xff]
    %v1359 = vld [vmem:[#allocation6] sm:$0xff]
    %v1360 = vld [vmem:[#allocation6 + $0x8] sm:$0xff]
    %v1361 = vld [vmem:[#allocation6 + $0x10] sm:$0xff]
    %v1362 = vld [vmem:[#allocation6 + $0x18] sm:$0xff]
    %v1363 = vld [vmem:[#allocation6 + $0x20] sm:$0xff]
    %v1364 = vld [vmem:[#allocation6 + $0x28] sm:$0xff]
    %v1365 = vld [vmem:[#allocation6 + $0x30] sm:$0xff]
    %v1366 = vld [vmem:[#allocation6 + $0x38] sm:$0xff]
    %v1367 = vld [vmem:[#allocation6 + $0x40] sm:$0xff]
    %v1368 = vld [vmem:[#allocation6 + $0x48] sm:$0xff]
    %v1369 = vld [vmem:[#allocation6 + $0x50] sm:$0xff]
    %v1370 = vld [vmem:[#allocation6 + $0x58] sm:$0xff]
    %v1371 = vld [vmem:[#allocation6 + $0x60] sm:$0xff]
    %v1372 = vld [vmem:[#allocation6 + $0x68] sm:$0xff]
    %v1373 = vld [vmem:[#allocation6 + $0x70] sm:$0xff]
    %v1374 = vld [vmem:[#allocation6 + $0x78] sm:$0xff]
    %v1375 = vld [vmem:[#allocation6 + $0x80] sm:$0xff]
    %v1376 = vld [vmem:[#allocation6 + $0x88] sm:$0xff]
    %v1377 = vld [vmem:[#allocation6 + $0x90] sm:$0xff]
    %v1378 = vld [vmem:[#allocation6 + $0x98] sm:$0xff]
    %v1379 = vld [vmem:[#allocation6 + $0xa0] sm:$0xff]
    %v1380 = vld [vmem:[#allocation6 + $0xa8] sm:$0xff]
    %v1381 = vld [vmem:[#allocation6 + $0xb0] sm:$0xff]
    %v1382 = vld [vmem:[#allocation6 + $0xb8] sm:$0xff]
    %v1383 = vld [vmem:[#allocation6 + $0xc0] sm:$0xff]
    %v1384 = vld [vmem:[#allocation6 + $0xc8] sm:$0xff]
    %v1385 = vld [vmem:[#allocation6 + $0xd0] sm:$0xff]
    %v1386 = vld [vmem:[#allocation6 + $0xd8] sm:$0xff]
    %v1387 = vld [vmem:[#allocation6 + $0xe0] sm:$0xff]
    %v1388 = vld [vmem:[#allocation6 + $0xe8] sm:$0xff]
    %v1389 = vld [vmem:[#allocation6 + $0xf0] sm:$0xff]
    %v1390 = vld [vmem:[#allocation6 + $0xf8] sm:$0xff]
    %1391 = vmatprep.subr.bf16.mxu0 %v1360
    %1392 = vmatpush1.bf16.msra.mxu0 %v1359
    %1393 = vmatprep.subr.bf16.mxu0 %v1364
    %1394 = vmatpush1.bf16.msra.mxu0 %v1363
    %1395 = vmatprep.subr.bf16.mxu0 %v1368
    %1396 = vmatpush1.bf16.msra.mxu0 %v1367
    %1397 = vmatprep.subr.bf16.mxu0 %v1372
    %1398 = vmatpush1.bf16.msra.mxu0 %v1371
    %1399 = vmatprep.subr.bf16.mxu0 %v1376
    %1400 = vmatpush1.bf16.msra.mxu0 %v1375
    %1401 = vmatprep.subr.bf16.mxu0 %v1380
    %1402 = vmatpush1.bf16.msra.mxu0 %v1379
    %1403 = vmatprep.subr.bf16.mxu0 %v1384
    %1404 = vmatpush1.bf16.msra.mxu0 %v1383
    %1405 = vmatprep.subr.bf16.mxu0 %v1388
    %1406 = vmatpush1.bf16.msra.mxu0 %v1387
    %1407 = vmatprep.subr.bf16.mxu0 0
    %1408 = vmatpush1.bf16.msra.mxu0 0
    %1409 = vmatprep.subr.bf16.mxu0 0
    %1410 = vmatpush1.bf16.msra.mxu0 0
    %1411 = vmatprep.subr.bf16.mxu0 0
    %1412 = vmatpush1.bf16.msra.mxu0 0
    %1413 = vmatprep.subr.bf16.mxu0 0
    %1414 = vmatpush1.bf16.msra.mxu0 0
    %1415 = vmatprep.subr.bf16.mxu0 0
    %1416 = vmatpush1.bf16.msra.mxu0 0
    %1417 = vmatprep.subr.bf16.mxu0 0
    %1418 = vmatpush1.bf16.msra.mxu0 0
    %1419 = vmatprep.subr.bf16.mxu0 0
    %1420 = vmatpush1.bf16.msra.mxu0 0
    %1421 = vmatprep.subr.bf16.mxu0 0
    %1422 = vmatpush1.bf16.msra.mxu0 0
    %1423 = vmatprep.mubr.bf16.mxu0 0
    %1424 = vmatmul.mubr.bf16.gmra.mrb[0].mxu0 %v1351
    %v1425 = vpop.f32.mrb[0].mxu0
    %v1426 = vadd.f32 0.0, %v1425
    %v1427 = vpop.f32.mrb[0].mxu0
    %v1428 = vadd.f32 0.0, %v1427
    %v1429 = vpop.f32.mrb[0].mxu0
    %v1430 = vpop.f32.mrb[0].mxu0
    %1431 = vdwg.mxu0
    %1432 = vmatprep.subr.bf16.mxu0 %v1362
    %1433 = vmatpush1.bf16.msra.mxu0 %v1361
    %1434 = vmatprep.subr.bf16.mxu0 %v1366
    %1435 = vmatpush1.bf16.msra.mxu0 %v1365
    %1436 = vmatprep.subr.bf16.mxu0 %v1370
    %1437 = vmatpush1.bf16.msra.mxu0 %v1369
    %1438 = vmatprep.subr.bf16.mxu0 %v1374
    %1439 = vmatpush1.bf16.msra.mxu0 %v1373
    %1440 = vmatprep.subr.bf16.mxu0 %v1378
    %1441 = vmatpush1.bf16.msra.mxu0 %v1377
    %1442 = vmatprep.subr.bf16.mxu0 %v1382
    %1443 = vmatpush1.bf16.msra.mxu0 %v1381
    %1444 = vmatprep.subr.bf16.mxu0 %v1386
    %1445 = vmatpush1.bf16.msra.mxu0 %v1385
    %1446 = vmatprep.subr.bf16.mxu0 %v1390
    %1447 = vmatpush1.bf16.msra.mxu0 %v1389
    %1448 = vmatprep.subr.bf16.mxu0 0
    %1449 = vmatpush1.bf16.msra.mxu0 0
    %1450 = vmatprep.subr.bf16.mxu0 0
    %1451 = vmatpush1.bf16.msra.mxu0 0
    %1452 = vmatprep.subr.bf16.mxu0 0
    %1453 = vmatpush1.bf16.msra.mxu0 0
    %1454 = vmatprep.subr.bf16.mxu0 0
    %1455 = vmatpush1.bf16.msra.mxu0 0
    %1456 = vmatprep.subr.bf16.mxu0 0
    %1457 = vmatpush1.bf16.msra.mxu0 0
    %1458 = vmatprep.subr.bf16.mxu0 0
    %1459 = vmatpush1.bf16.msra.mxu0 0
    %1460 = vmatprep.subr.bf16.mxu0 0
    %1461 = vmatpush1.bf16.msra.mxu0 0
    %1462 = vmatprep.subr.bf16.mxu0 0
    %1463 = vmatpush1.bf16.msra.mxu0 0
    %1464 = vmatprep.mubr.bf16.mxu0 0
    %1465 = vmatmul.mubr.bf16.gmra.mrb[0].mxu0 %v1351
    %v1466 = vpop.f32.mrb[0].mxu0
    %v1467 = vadd.f32 0.0, %v1466
    %v1468 = vpop.f32.mrb[0].mxu0
    %v1469 = vadd.f32 0.0, %v1468
    %v1470 = vpop.f32.mrb[0].mxu0
    %v1471 = vpop.f32.mrb[0].mxu0
    %1472 = vdwg.mxu0
    %v1473 = vadd.f32 %v1355, %v1426
    %v1474 = vadd.f32 %v1356, %v1428
    %v1475 = vadd.f32 %v1357, %v1467
    %v1476 = vadd.f32 %v1358, %v1469
    %v1477 = vxor.u32 %v1473, 2147483648
    %v1478 = vmul.f32 %v1477, 1.442695
    %v1479 = vpow.pop %v1478
    %v1480 = vadd.f32 %v1479, 1.0
    %v1481 = vrcp.pop %v1480
    %v1482 = vmul.f32 1.0, %v1481
    %v1483 = vxor.u32 %v1474, 2147483648
    %v1484 = vmul.f32 %v1483, 1.442695
    %v1485 = vpow.pop %v1484
    %v1486 = vadd.f32 %v1485, 1.0
    %v1487 = vrcp.pop %v1486
    %v1488 = vmul.f32 1.0, %v1487
    %v1489 = vtanh.pop %v1475
    %v1490 = vxor.u32 %v1476, 2147483648
    %v1491 = vmul.f32 %v1490, 1.442695
    %v1492 = vpow.pop %v1491
    %v1493 = vadd.f32 %v1492, 1.0
    %v1494 = vrcp.pop %v1493
    %v1495 = vmul.f32 1.0, %v1494
    %v1496 = vmul.f32 %v1488, %v1348
    %v1497 = vmul.f32 %v1482, %v1489
    %v1498 = vadd.f32 %v1496, %v1497
    %v1499 = vtanh.pop %v1498
    %v1500 = vmul.f32 %v1495, %v1499
    %v1501 = vpack.c.bf16 %v1500, %v1500
    %s1502 = scalar_lea.vmem [#allocation8], 12
    %1503 = vst [vmem:[%s1502] sm:$0xf] %v1501
    %s1504 = scalar_lea.vmem [#allocation4], 128
    %v1505 = vld [vmem:[%s1504] sm:$0xff]
    %v1506 = vld [vmem:[%s1504 + $0x8] sm:$0xff]
    %v1507 = vld [vmem:[%s1504 + $0x10] sm:$0xff]
    %v1508 = vld [vmem:[%s1504 + $0x18] sm:$0xff]
    %v1509 = vld [vmem:[#allocation6] sm:$0xff]
    %v1510 = vld [vmem:[#allocation6 + $0x8] sm:$0xff]
    %v1511 = vld [vmem:[#allocation6 + $0x10] sm:$0xff]
    %v1512 = vld [vmem:[#allocation6 + $0x18] sm:$0xff]
    %v1513 = vld [vmem:[#allocation6 + $0x20] sm:$0xff]
    %v1514 = vld [vmem:[#allocation6 + $0x28] sm:$0xff]
    %v1515 = vld [vmem:[#allocation6 + $0x30] sm:$0xff]
    %v1516 = vld [vmem:[#allocation6 + $0x38] sm:$0xff]
    %v1517 = vld [vmem:[#allocation6 + $0x40] sm:$0xff]
    %v1518 = vld [vmem:[#allocation6 + $0x48] sm:$0xff]
    %v1519 = vld [vmem:[#allocation6 + $0x50] sm:$0xff]
    %v1520 = vld [vmem:[#allocation6 + $0x58] sm:$0xff]
    %v1521 = vld [vmem:[#allocation6 + $0x60] sm:$0xff]
    %v1522 = vld [vmem:[#allocation6 + $0x68] sm:$0xff]
    %v1523 = vld [vmem:[#allocation6 + $0x70] sm:$0xff]
    %v1524 = vld [vmem:[#allocation6 + $0x78] sm:$0xff]
    %v1525 = vld [vmem:[#allocation6 + $0x80] sm:$0xff]
    %v1526 = vld [vmem:[#allocation6 + $0x88] sm:$0xff]
    %v1527 = vld [vmem:[#allocation6 + $0x90] sm:$0xff]
    %v1528 = vld [vmem:[#allocation6 + $0x98] sm:$0xff]
    %v1529 = vld [vmem:[#allocation6 + $0xa0] sm:$0xff]
    %v1530 = vld [vmem:[#allocation6 + $0xa8] sm:$0xff]
    %v1531 = vld [vmem:[#allocation6 + $0xb0] sm:$0xff]
    %v1532 = vld [vmem:[#allocation6 + $0xb8] sm:$0xff]
    %v1533 = vld [vmem:[#allocation6 + $0xc0] sm:$0xff]
    %v1534 = vld [vmem:[#allocation6 + $0xc8] sm:$0xff]
    %v1535 = vld [vmem:[#allocation6 + $0xd0] sm:$0xff]
    %v1536 = vld [vmem:[#allocation6 + $0xd8] sm:$0xff]
    %v1537 = vld [vmem:[#allocation6 + $0xe0] sm:$0xff]
    %v1538 = vld [vmem:[#allocation6 + $0xe8] sm:$0xff]
    %v1539 = vld [vmem:[#allocation6 + $0xf0] sm:$0xff]
    %v1540 = vld [vmem:[#allocation6 + $0xf8] sm:$0xff]
    %1541 = vmatprep.subr.bf16.mxu0 %v1510
    %1542 = vmatpush1.bf16.msra.mxu0 %v1509
    %1543 = vmatprep.subr.bf16.mxu0 %v1514
    %1544 = vmatpush1.bf16.msra.mxu0 %v1513
    %1545 = vmatprep.subr.bf16.mxu0 %v1518
    %1546 = vmatpush1.bf16.msra.mxu0 %v1517
    %1547 = vmatprep.subr.bf16.mxu0 %v1522
    %1548 = vmatpush1.bf16.msra.mxu0 %v1521
    %1549 = vmatprep.subr.bf16.mxu0 %v1526
    %1550 = vmatpush1.bf16.msra.mxu0 %v1525
    %1551 = vmatprep.subr.bf16.mxu0 %v1530
    %1552 = vmatpush1.bf16.msra.mxu0 %v1529
    %1553 = vmatprep.subr.bf16.mxu0 %v1534
    %1554 = vmatpush1.bf16.msra.mxu0 %v1533
    %1555 = vmatprep.subr.bf16.mxu0 %v1538
    %1556 = vmatpush1.bf16.msra.mxu0 %v1537
    %1557 = vmatprep.subr.bf16.mxu0 0
    %1558 = vmatpush1.bf16.msra.mxu0 0
    %1559 = vmatprep.subr.bf16.mxu0 0
    %1560 = vmatpush1.bf16.msra.mxu0 0
    %1561 = vmatprep.subr.bf16.mxu0 0
    %1562 = vmatpush1.bf16.msra.mxu0 0
    %1563 = vmatprep.subr.bf16.mxu0 0
    %1564 = vmatpush1.bf16.msra.mxu0 0
    %1565 = vmatprep.subr.bf16.mxu0 0
    %1566 = vmatpush1.bf16.msra.mxu0 0
    %1567 = vmatprep.subr.bf16.mxu0 0
    %1568 = vmatpush1.bf16.msra.mxu0 0
    %1569 = vmatprep.subr.bf16.mxu0 0
    %1570 = vmatpush1.bf16.msra.mxu0 0
    %1571 = vmatprep.subr.bf16.mxu0 0
    %1572 = vmatpush1.bf16.msra.mxu0 0
    %1573 = vmatprep.mubr.bf16.mxu0 0
    %1574 = vmatmul.mubr.bf16.gmra.mrb[0].mxu0 %v1501
    %v1575 = vpop.f32.mrb[0].mxu0
    %v1576 = vadd.f32 0.0, %v1575
    %v1577 = vpop.f32.mrb[0].mxu0
    %v1578 = vadd.f32 0.0, %v1577
    %v1579 = vpop.f32.mrb[0].mxu0
    %v1580 = vpop.f32.mrb[0].mxu0
    %1581 = vdwg.mxu0
    %1582 = vmatprep.subr.bf16.mxu0 %v1512
    %1583 = vmatpush1.bf16.msra.mxu0 %v1511
    %1584 = vmatprep.subr.bf16.mxu0 %v1516
    %1585 = vmatpush1.bf16.msra.mxu0 %v1515
    %1586 = vmatprep.subr.bf16.mxu0 %v1520
    %1587 = vmatpush1.bf16.msra.mxu0 %v1519
    %1588 = vmatprep.subr.bf16.mxu0 %v1524
    %1589 = vmatpush1.bf16.msra.mxu0 %v1523
    %1590 = vmatprep.subr.bf16.mxu0 %v1528
    %1591 = vmatpush1.bf16.msra.mxu0 %v1527
    %1592 = vmatprep.subr.bf16.mxu0 %v1532
    %1593 = vmatpush1.bf16.msra.mxu0 %v1531
    %1594 = vmatprep.subr.bf16.mxu0 %v1536
    %1595 = vmatpush1.bf16.msra.mxu0 %v1535
    %1596 = vmatprep.subr.bf16.mxu0 %v1540
    %1597 = vmatpush1.bf16.msra.mxu0 %v1539
    %1598 = vmatprep.subr.bf16.mxu0 0
    %1599 = vmatpush1.bf16.msra.mxu0 0
    %1600 = vmatprep.subr.bf16.mxu0 0
    %1601 = vmatpush1.bf16.msra.mxu0 0
    %1602 = vmatprep.subr.bf16.mxu0 0
    %1603 = vmatpush1.bf16.msra.mxu0 0
    %1604 = vmatprep.subr.bf16.mxu0 0
    %1605 = vmatpush1.bf16.msra.mxu0 0
    %1606 = vmatprep.subr.bf16.mxu0 0
    %1607 = vmatpush1.bf16.msra.mxu0 0
    %1608 = vmatprep.subr.bf16.mxu0 0
    %1609 = vmatpush1.bf16.msra.mxu0 0
    %1610 = vmatprep.subr.bf16.mxu0 0
    %1611 = vmatpush1.bf16.msra.mxu0 0
    %1612 = vmatprep.subr.bf16.mxu0 0
    %1613 = vmatpush1.bf16.msra.mxu0 0
    %1614 = vmatprep.mubr.bf16.mxu0 0
    %1615 = vmatmul.mubr.bf16.gmra.mrb[0].mxu0 %v1501
    %v1616 = vpop.f32.mrb[0].mxu0
    %v1617 = vadd.f32 0.0, %v1616
    %v1618 = vpop.f32.mrb[0].mxu0
    %v1619 = vadd.f32 0.0, %v1618
    %v1620 = vpop.f32.mrb[0].mxu0
    %v1621 = vpop.f32.mrb[0].mxu0
    %1622 = vdwg.mxu0
    %v1623 = vadd.f32 %v1505, %v1576
    %v1624 = vadd.f32 %v1506, %v1578
    %v1625 = vadd.f32 %v1507, %v1617
    %v1626 = vadd.f32 %v1508, %v1619
    %v1627 = vxor.u32 %v1623, 2147483648
    %v1628 = vmul.f32 %v1627, 1.442695
    %v1629 = vpow.pop %v1628
    %v1630 = vadd.f32 %v1629, 1.0
    %v1631 = vrcp.pop %v1630
    %v1632 = vmul.f32 1.0, %v1631
    %v1633 = vxor.u32 %v1624, 2147483648
    %v1634 = vmul.f32 %v1633, 1.442695
    %v1635 = vpow.pop %v1634
    %v1636 = vadd.f32 %v1635, 1.0
    %v1637 = vrcp.pop %v1636
    %v1638 = vmul.f32 1.0, %v1637
    %v1639 = vtanh.pop %v1625
    %v1640 = vxor.u32 %v1626, 2147483648
    %v1641 = vmul.f32 %v1640, 1.442695
    %v1642 = vpow.pop %v1641
    %v1643 = vadd.f32 %v1642, 1.0
    %v1644 = vrcp.pop %v1643
    %v1645 = vmul.f32 1.0, %v1644
    %v1646 = vmul.f32 %v1638, %v1498
    %v1647 = vmul.f32 %v1632, %v1639
    %v1648 = vadd.f32 %v1646, %v1647
    %v1649 = vtanh.pop %v1648
    %v1650 = vmul.f32 %v1645, %v1649
    %v1651 = vpack.c.bf16 %v1650, %v1650
    %s1652 = scalar_lea.vmem [#allocation8], 16
    %1653 = vst [vmem:[%s1652] sm:$0xf] %v1651
    %s1654 = scalar_lea.vmem [#allocation4], 160
    %v1655 = vld [vmem:[%s1654] sm:$0xff]
    %v1656 = vld [vmem:[%s1654 + $0x8] sm:$0xff]
    %v1657 = vld [vmem:[%s1654 + $0x10] sm:$0xff]
    %v1658 = vld [vmem:[%s1654 + $0x18] sm:$0xff]
    %v1659 = vld [vmem:[#allocation6] sm:$0xff]
    %v1660 = vld [vmem:[#allocation6 + $0x8] sm:$0xff]
    %v1661 = vld [vmem:[#allocation6 + $0x10] sm:$0xff]
    %v1662 = vld [vmem:[#allocation6 + $0x18] sm:$0xff]
    %v1663 = vld [vmem:[#allocation6 + $0x20] sm:$0xff]
    %v1664 = vld [vmem:[#allocation6 + $0x28] sm:$0xff]
    %v1665 = vld [vmem:[#allocation6 + $0x30] sm:$0xff]
    %v1666 = vld [vmem:[#allocation6 + $0x38] sm:$0xff]
    %v1667 = vld [vmem:[#allocation6 + $0x40] sm:$0xff]
    %v1668 = vld [vmem:[#allocation6 + $0x48] sm:$0xff]
    %v1669 = vld [vmem:[#allocation6 + $0x50] sm:$0xff]
    %v1670 = vld [vmem:[#allocation6 + $0x58] sm:$0xff]
    %v1671 = vld [vmem:[#allocation6 + $0x60] sm:$0xff]
    %v1672 = vld [vmem:[#allocation6 + $0x68] sm:$0xff]
    %v1673 = vld [vmem:[#allocation6 + $0x70] sm:$0xff]
    %v1674 = vld [vmem:[#allocation6 + $0x78] sm:$0xff]
    %v1675 = vld [vmem:[#allocation6 + $0x80] sm:$0xff]
    %v1676 = vld [vmem:[#allocation6 + $0x88] sm:$0xff]
    %v1677 = vld [vmem:[#allocation6 + $0x90] sm:$0xff]
    %v1678 = vld [vmem:[#allocation6 + $0x98] sm:$0xff]
    %v1679 = vld [vmem:[#allocation6 + $0xa0] sm:$0xff]
    %v1680 = vld [vmem:[#allocation6 + $0xa8] sm:$0xff]
    %v1681 = vld [vmem:[#allocation6 + $0xb0] sm:$0xff]
    %v1682 = vld [vmem:[#allocation6 + $0xb8] sm:$0xff]
    %v1683 = vld [vmem:[#allocation6 + $0xc0] sm:$0xff]
    %v1684 = vld [vmem:[#allocation6 + $0xc8] sm:$0xff]
    %v1685 = vld [vmem:[#allocation6 + $0xd0] sm:$0xff]
    %v1686 = vld [vmem:[#allocation6 + $0xd8] sm:$0xff]
    %v1687 = vld [vmem:[#allocation6 + $0xe0] sm:$0xff]
    %v1688 = vld [vmem:[#allocation6 + $0xe8] sm:$0xff]
    %v1689 = vld [vmem:[#allocation6 + $0xf0] sm:$0xff]
    %v1690 = vld [vmem:[#allocation6 + $0xf8] sm:$0xff]
    %1691 = vmatprep.subr.bf16.mxu0 %v1660
    %1692 = vmatpush1.bf16.msra.mxu0 %v1659
    %1693 = vmatprep.subr.bf16.mxu0 %v1664
    %1694 = vmatpush1.bf16.msra.mxu0 %v1663
    %1695 = vmatprep.subr.bf16.mxu0 %v1668
    %1696 = vmatpush1.bf16.msra.mxu0 %v1667
    %1697 = vmatprep.subr.bf16.mxu0 %v1672
    %1698 = vmatpush1.bf16.msra.mxu0 %v1671
    %1699 = vmatprep.subr.bf16.mxu0 %v1676
    %1700 = vmatpush1.bf16.msra.mxu0 %v1675
    %1701 = vmatprep.subr.bf16.mxu0 %v1680
    %1702 = vmatpush1.bf16.msra.mxu0 %v1679
    %1703 = vmatprep.subr.bf16.mxu0 %v1684
    %1704 = vmatpush1.bf16.msra.mxu0 %v1683
    %1705 = vmatprep.subr.bf16.mxu0 %v1688
    %1706 = vmatpush1.bf16.msra.mxu0 %v1687
    %1707 = vmatprep.subr.bf16.mxu0 0
    %1708 = vmatpush1.bf16.msra.mxu0 0
    %1709 = vmatprep.subr.bf16.mxu0 0
    %1710 = vmatpush1.bf16.msra.mxu0 0
    %1711 = vmatprep.subr.bf16.mxu0 0
    %1712 = vmatpush1.bf16.msra.mxu0 0
    %1713 = vmatprep.subr.bf16.mxu0 0
    %1714 = vmatpush1.bf16.msra.mxu0 0
    %1715 = vmatprep.subr.bf16.mxu0 0
    %1716 = vmatpush1.bf16.msra.mxu0 0
    %1717 = vmatprep.subr.bf16.mxu0 0
    %1718 = vmatpush1.bf16.msra.mxu0 0
    %1719 = vmatprep.subr.bf16.mxu0 0
    %1720 = vmatpush1.bf16.msra.mxu0 0
    %1721 = vmatprep.subr.bf16.mxu0 0
    %1722 = vmatpush1.bf16.msra.mxu0 0
    %1723 = vmatprep.mubr.bf16.mxu0 0
    %1724 = vmatmul.mubr.bf16.gmra.mrb[0].mxu0 %v1651
    %v1725 = vpop.f32.mrb[0].mxu0
    %v1726 = vadd.f32 0.0, %v1725
    %v1727 = vpop.f32.mrb[0].mxu0
    %v1728 = vadd.f32 0.0, %v1727
    %v1729 = vpop.f32.mrb[0].mxu0
    %v1730 = vpop.f32.mrb[0].mxu0
    %1731 = vdwg.mxu0
    %1732 = vmatprep.subr.bf16.mxu0 %v1662
    %1733 = vmatpush1.bf16.msra.mxu0 %v1661
    %1734 = vmatprep.subr.bf16.mxu0 %v1666
    %1735 = vmatpush1.bf16.msra.mxu0 %v1665
    %1736 = vmatprep.subr.bf16.mxu0 %v1670
    %1737 = vmatpush1.bf16.msra.mxu0 %v1669
    %1738 = vmatprep.subr.bf16.mxu0 %v1674
    %1739 = vmatpush1.bf16.msra.mxu0 %v1673
    %1740 = vmatprep.subr.bf16.mxu0 %v1678
    %1741 = vmatpush1.bf16.msra.mxu0 %v1677
    %1742 = vmatprep.subr.bf16.mxu0 %v1682
    %1743 = vmatpush1.bf16.msra.mxu0 %v1681
    %1744 = vmatprep.subr.bf16.mxu0 %v1686
    %1745 = vmatpush1.bf16.msra.mxu0 %v1685
    %1746 = vmatprep.subr.bf16.mxu0 %v1690
    %1747 = vmatpush1.bf16.msra.mxu0 %v1689
    %1748 = vmatprep.subr.bf16.mxu0 0
    %1749 = vmatpush1.bf16.msra.mxu0 0
    %1750 = vmatprep.subr.bf16.mxu0 0
    %1751 = vmatpush1.bf16.msra.mxu0 0
    %1752 = vmatprep.subr.bf16.mxu0 0
    %1753 = vmatpush1.bf16.msra.mxu0 0
    %1754 = vmatprep.subr.bf16.mxu0 0
    %1755 = vmatpush1.bf16.msra.mxu0 0
    %1756 = vmatprep.subr.bf16.mxu0 0
    %1757 = vmatpush1.bf16.msra.mxu0 0
    %1758 = vmatprep.subr.bf16.mxu0 0
    %1759 = vmatpush1.bf16.msra.mxu0 0
    %1760 = vmatprep.subr.bf16.mxu0 0
    %1761 = vmatpush1.bf16.msra.mxu0 0
    %1762 = vmatprep.subr.bf16.mxu0 0
    %1763 = vmatpush1.bf16.msra.mxu0 0
    %1764 = vmatprep.mubr.bf16.mxu0 0
    %1765 = vmatmul.mubr.bf16.gmra.mrb[0].mxu0 %v1651
    %v1766 = vpop.f32.mrb[0].mxu0
    %v1767 = vadd.f32 0.0, %v1766
    %v1768 = vpop.f32.mrb[0].mxu0
    %v1769 = vadd.f32 0.0, %v1768
    %v1770 = vpop.f32.mrb[0].mxu0
    %v1771 = vpop.f32.mrb[0].mxu0
    %1772 = vdwg.mxu0
    %v1773 = vadd.f32 %v1655, %v1726
    %v1774 = vadd.f32 %v1656, %v1728
    %v1775 = vadd.f32 %v1657, %v1767
    %v1776 = vadd.f32 %v1658, %v1769
    %v1777 = vxor.u32 %v1773, 2147483648
    %v1778 = vmul.f32 %v1777, 1.442695
    %v1779 = vpow.pop %v1778
    %v1780 = vadd.f32 %v1779, 1.0
    %v1781 = vrcp.pop %v1780
    %v1782 = vmul.f32 1.0, %v1781
    %v1783 = vxor.u32 %v1774, 2147483648
    %v1784 = vmul.f32 %v1783, 1.442695
    %v1785 = vpow.pop %v1784
    %v1786 = vadd.f32 %v1785, 1.0
    %v1787 = vrcp.pop %v1786
    %v1788 = vmul.f32 1.0, %v1787
    %v1789 = vtanh.pop %v1775
    %v1790 = vxor.u32 %v1776, 2147483648
    %v1791 = vmul.f32 %v1790, 1.442695
    %v1792 = vpow.pop %v1791
    %v1793 = vadd.f32 %v1792, 1.0
    %v1794 = vrcp.pop %v1793
    %v1795 = vmul.f32 1.0, %v1794
    %v1796 = vmul.f32 %v1788, %v1648
    %v1797 = vmul.f32 %v1782, %v1789
    %v1798 = vadd.f32 %v1796, %v1797
    %v1799 = vtanh.pop %v1798
    %v1800 = vmul.f32 %v1795, %v1799
    %v1801 = vpack.c.bf16 %v1800, %v1800
    %s1802 = scalar_lea.vmem [#allocation8], 20
    %1803 = vst [vmem:[%s1802] sm:$0xf] %v1801
    %s1804 = scalar_lea.vmem [#allocation4], 192
    %v1805 = vld [vmem:[%s1804] sm:$0xff]
    %v1806 = vld [vmem:[%s1804 + $0x8] sm:$0xff]
    %v1807 = vld [vmem:[%s1804 + $0x10] sm:$0xff]
    %v1808 = vld [vmem:[%s1804 + $0x18] sm:$0xff]
    %v1809 = vld [vmem:[#allocation6] sm:$0xff]
    %v1810 = vld [vmem:[#allocation6 + $0x8] sm:$0xff]
    %v1811 = vld [vmem:[#allocation6 + $0x10] sm:$0xff]
    %v1812 = vld [vmem:[#allocation6 + $0x18] sm:$0xff]
    %v1813 = vld [vmem:[#allocation6 + $0x20] sm:$0xff]
    %v1814 = vld [vmem:[#allocation6 + $0x28] sm:$0xff]
    %v1815 = vld [vmem:[#allocation6 + $0x30] sm:$0xff]
    %v1816 = vld [vmem:[#allocation6 + $0x38] sm:$0xff]
    %v1817 = vld [vmem:[#allocation6 + $0x40] sm:$0xff]
    %v1818 = vld [vmem:[#allocation6 + $0x48] sm:$0xff]
    %v1819 = vld [vmem:[#allocation6 + $0x50] sm:$0xff]
    %v1820 = vld [vmem:[#allocation6 + $0x58] sm:$0xff]
    %v1821 = vld [vmem:[#allocation6 + $0x60] sm:$0xff]
    %v1822 = vld [vmem:[#allocation6 + $0x68] sm:$0xff]
    %v1823 = vld [vmem:[#allocation6 + $0x70] sm:$0xff]
    %v1824 = vld [vmem:[#allocation6 + $0x78] sm:$0xff]
    %v1825 = vld [vmem:[#allocation6 + $0x80] sm:$0xff]
    %v1826 = vld [vmem:[#allocation6 + $0x88] sm:$0xff]
    %v1827 = vld [vmem:[#allocation6 + $0x90] sm:$0xff]
    %v1828 = vld [vmem:[#allocation6 + $0x98] sm:$0xff]
    %v1829 = vld [vmem:[#allocation6 + $0xa0] sm:$0xff]
    %v1830 = vld [vmem:[#allocation6 + $0xa8] sm:$0xff]
    %v1831 = vld [vmem:[#allocation6 + $0xb0] sm:$0xff]
    %v1832 = vld [vmem:[#allocation6 + $0xb8] sm:$0xff]
    %v1833 = vld [vmem:[#allocation6 + $0xc0] sm:$0xff]
    %v1834 = vld [vmem:[#allocation6 + $0xc8] sm:$0xff]
    %v1835 = vld [vmem:[#allocation6 + $0xd0] sm:$0xff]
    %v1836 = vld [vmem:[#allocation6 + $0xd8] sm:$0xff]
    %v1837 = vld [vmem:[#allocation6 + $0xe0] sm:$0xff]
    %v1838 = vld [vmem:[#allocation6 + $0xe8] sm:$0xff]
    %v1839 = vld [vmem:[#allocation6 + $0xf0] sm:$0xff]
    %v1840 = vld [vmem:[#allocation6 + $0xf8] sm:$0xff]
    %1841 = vmatprep.subr.bf16.mxu0 %v1810
    %1842 = vmatpush1.bf16.msra.mxu0 %v1809
    %1843 = vmatprep.subr.bf16.mxu0 %v1814
    %1844 = vmatpush1.bf16.msra.mxu0 %v1813
    %1845 = vmatprep.subr.bf16.mxu0 %v1818
    %1846 = vmatpush1.bf16.msra.mxu0 %v1817
    %1847 = vmatprep.subr.bf16.mxu0 %v1822
    %1848 = vmatpush1.bf16.msra.mxu0 %v1821
    %1849 = vmatprep.subr.bf16.mxu0 %v1826
    %1850 = vmatpush1.bf16.msra.mxu0 %v1825
    %1851 = vmatprep.subr.bf16.mxu0 %v1830
    %1852 = vmatpush1.bf16.msra.mxu0 %v1829
    %1853 = vmatprep.subr.bf16.mxu0 %v1834
    %1854 = vmatpush1.bf16.msra.mxu0 %v1833
    %1855 = vmatprep.subr.bf16.mxu0 %v1838
    %1856 = vmatpush1.bf16.msra.mxu0 %v1837
    %1857 = vmatprep.subr.bf16.mxu0 0
    %1858 = vmatpush1.bf16.msra.mxu0 0
    %1859 = vmatprep.subr.bf16.mxu0 0
    %1860 = vmatpush1.bf16.msra.mxu0 0
    %1861 = vmatprep.subr.bf16.mxu0 0
    %1862 = vmatpush1.bf16.msra.mxu0 0
    %1863 = vmatprep.subr.bf16.mxu0 0
    %1864 = vmatpush1.bf16.msra.mxu0 0
    %1865 = vmatprep.subr.bf16.mxu0 0
    %1866 = vmatpush1.bf16.msra.mxu0 0
    %1867 = vmatprep.subr.bf16.mxu0 0
    %1868 = vmatpush1.bf16.msra.mxu0 0
    %1869 = vmatprep.subr.bf16.mxu0 0
    %1870 = vmatpush1.bf16.msra.mxu0 0
    %1871 = vmatprep.subr.bf16.mxu0 0
    %1872 = vmatpush1.bf16.msra.mxu0 0
    %1873 = vmatprep.mubr.bf16.mxu0 0
    %1874 = vmatmul.mubr.bf16.gmra.mrb[0].mxu0 %v1801
    %v1875 = vpop.f32.mrb[0].mxu0
    %v1876 = vadd.f32 0.0, %v1875
    %v1877 = vpop.f32.mrb[0].mxu0
    %v1878 = vadd.f32 0.0, %v1877
    %v1879 = vpop.f32.mrb[0].mxu0
    %v1880 = vpop.f32.mrb[0].mxu0
    %1881 = vdwg.mxu0
    %1882 = vmatprep.subr.bf16.mxu0 %v1812
    %1883 = vmatpush1.bf16.msra.mxu0 %v1811
    %1884 = vmatprep.subr.bf16.mxu0 %v1816
    %1885 = vmatpush1.bf16.msra.mxu0 %v1815
    %1886 = vmatprep.subr.bf16.mxu0 %v1820
    %1887 = vmatpush1.bf16.msra.mxu0 %v1819
    %1888 = vmatprep.subr.bf16.mxu0 %v1824
    %1889 = vmatpush1.bf16.msra.mxu0 %v1823
    %1890 = vmatprep.subr.bf16.mxu0 %v1828
    %1891 = vmatpush1.bf16.msra.mxu0 %v1827
    %1892 = vmatprep.subr.bf16.mxu0 %v1832
    %1893 = vmatpush1.bf16.msra.mxu0 %v1831
    %1894 = vmatprep.subr.bf16.mxu0 %v1836
    %1895 = vmatpush1.bf16.msra.mxu0 %v1835
    %1896 = vmatprep.subr.bf16.mxu0 %v1840
    %1897 = vmatpush1.bf16.msra.mxu0 %v1839
    %1898 = vmatprep.subr.bf16.mxu0 0
    %1899 = vmatpush1.bf16.msra.mxu0 0
    %1900 = vmatprep.subr.bf16.mxu0 0
    %1901 = vmatpush1.bf16.msra.mxu0 0
    %1902 = vmatprep.subr.bf16.mxu0 0
    %1903 = vmatpush1.bf16.msra.mxu0 0
    %1904 = vmatprep.subr.bf16.mxu0 0
    %1905 = vmatpush1.bf16.msra.mxu0 0
    %1906 = vmatprep.subr.bf16.mxu0 0
    %1907 = vmatpush1.bf16.msra.mxu0 0
    %1908 = vmatprep.subr.bf16.mxu0 0
    %1909 = vmatpush1.bf16.msra.mxu0 0
    %1910 = vmatprep.subr.bf16.mxu0 0
    %1911 = vmatpush1.bf16.msra.mxu0 0
    %1912 = vmatprep.subr.bf16.mxu0 0
    %1913 = vmatpush1.bf16.msra.mxu0 0
    %1914 = vmatprep.mubr.bf16.mxu0 0
    %1915 = vmatmul.mubr.bf16.gmra.mrb[0].mxu0 %v1801
    %v1916 = vpop.f32.mrb[0].mxu0
    %v1917 = vadd.f32 0.0, %v1916
    %v1918 = vpop.f32.mrb[0].mxu0
    %v1919 = vadd.f32 0.0, %v1918
    %v1920 = vpop.f32.mrb[0].mxu0
    %v1921 = vpop.f32.mrb[0].mxu0
    %1922 = vdwg.mxu0
    %v1923 = vadd.f32 %v1805, %v1876
    %v1924 = vadd.f32 %v1806, %v1878
    %v1925 = vadd.f32 %v1807, %v1917
    %v1926 = vadd.f32 %v1808, %v1919
    %v1927 = vxor.u32 %v1923, 2147483648
    %v1928 = vmul.f32 %v1927, 1.442695
    %v1929 = vpow.pop %v1928
    %v1930 = vadd.f32 %v1929, 1.0
    %v1931 = vrcp.pop %v1930
    %v1932 = vmul.f32 1.0, %v1931
    %v1933 = vxor.u32 %v1924, 2147483648
    %v1934 = vmul.f32 %v1933, 1.442695
    %v1935 = vpow.pop %v1934
    %v1936 = vadd.f32 %v1935, 1.0
    %v1937 = vrcp.pop %v1936
    %v1938 = vmul.f32 1.0, %v1937
    %v1939 = vtanh.pop %v1925
    %v1940 = vxor.u32 %v1926, 2147483648
    %v1941 = vmul.f32 %v1940, 1.442695
    %v1942 = vpow.pop %v1941
    %v1943 = vadd.f32 %v1942, 1.0
    %v1944 = vrcp.pop %v1943
    %v1945 = vmul.f32 1.0, %v1944
    %v1946 = vmul.f32 %v1938, %v1798
    %v1947 = vmul.f32 %v1932, %v1939
    %v1948 = vadd.f32 %v1946, %v1947
    %v1949 = vtanh.pop %v1948
    %v1950 = vmul.f32 %v1945, %v1949
    %v1951 = vpack.c.bf16 %v1950, %v1950
    %s1952 = scalar_lea.vmem [#allocation8], 24
    %1953 = vst [vmem:[%s1952] sm:$0xf] %v1951
    %s1954 = scalar_lea.vmem [#allocation4], 224
    %v1955 = vld [vmem:[%s1954] sm:$0xff]
    %v1956 = vld [vmem:[%s1954 + $0x8] sm:$0xff]
    %v1957 = vld [vmem:[%s1954 + $0x10] sm:$0xff]
    %v1958 = vld [vmem:[%s1954 + $0x18] sm:$0xff]
    %v1959 = vld [vmem:[#allocation6] sm:$0xff]
    %v1960 = vld [vmem:[#allocation6 + $0x8] sm:$0xff]
    %v1961 = vld [vmem:[#allocation6 + $0x10] sm:$0xff]
    %v1962 = vld [vmem:[#allocation6 + $0x18] sm:$0xff]
    %v1963 = vld [vmem:[#allocation6 + $0x20] sm:$0xff]
    %v1964 = vld [vmem:[#allocation6 + $0x28] sm:$0xff]
    %v1965 = vld [vmem:[#allocation6 + $0x30] sm:$0xff]
    %v1966 = vld [vmem:[#allocation6 + $0x38] sm:$0xff]
    %v1967 = vld [vmem:[#allocation6 + $0x40] sm:$0xff]
    %v1968 = vld [vmem:[#allocation6 + $0x48] sm:$0xff]
    %v1969 = vld [vmem:[#allocation6 + $0x50] sm:$0xff]
    %v1970 = vld [vmem:[#allocation6 + $0x58] sm:$0xff]
    %v1971 = vld [vmem:[#allocation6 + $0x60] sm:$0xff]
    %v1972 = vld [vmem:[#allocation6 + $0x68] sm:$0xff]
    %v1973 = vld [vmem:[#allocation6 + $0x70] sm:$0xff]
    %v1974 = vld [vmem:[#allocation6 + $0x78] sm:$0xff]
    %v1975 = vld [vmem:[#allocation6 + $0x80] sm:$0xff]
    %v1976 = vld [vmem:[#allocation6 + $0x88] sm:$0xff]
    %v1977 = vld [vmem:[#allocation6 + $0x90] sm:$0xff]
    %v1978 = vld [vmem:[#allocation6 + $0x98] sm:$0xff]
    %v1979 = vld [vmem:[#allocation6 + $0xa0] sm:$0xff]
    %v1980 = vld [vmem:[#allocation6 + $0xa8] sm:$0xff]
    %v1981 = vld [vmem:[#allocation6 + $0xb0] sm:$0xff]
    %v1982 = vld [vmem:[#allocation6 + $0xb8] sm:$0xff]
    %v1983 = vld [vmem:[#allocation6 + $0xc0] sm:$0xff]
    %v1984 = vld [vmem:[#allocation6 + $0xc8] sm:$0xff]
    %v1985 = vld [vmem:[#allocation6 + $0xd0] sm:$0xff]
    %v1986 = vld [vmem:[#allocation6 + $0xd8] sm:$0xff]
    %v1987 = vld [vmem:[#allocation6 + $0xe0] sm:$0xff]
    %v1988 = vld [vmem:[#allocation6 + $0xe8] sm:$0xff]
    %v1989 = vld [vmem:[#allocation6 + $0xf0] sm:$0xff]
    %v1990 = vld [vmem:[#allocation6 + $0xf8] sm:$0xff]
    %1991 = vmatprep.subr.bf16.mxu0 %v1960
    %1992 = vmatpush1.bf16.msra.mxu0 %v1959
    %1993 = vmatprep.subr.bf16.mxu0 %v1964
    %1994 = vmatpush1.bf16.msra.mxu0 %v1963
    %1995 = vmatprep.subr.bf16.mxu0 %v1968
    %1996 = vmatpush1.bf16.msra.mxu0 %v1967
    %1997 = vmatprep.subr.bf16.mxu0 %v1972
    %1998 = vmatpush1.bf16.msra.mxu0 %v1971
    %1999 = vmatprep.subr.bf16.mxu0 %v1976
    %2000 = vmatpush1.bf16.msra.mxu0 %v1975
    %2001 = vmatprep.subr.bf16.mxu0 %v1980
    %2002 = vmatpush1.bf16.msra.mxu0 %v1979
    %2003 = vmatprep.subr.bf16.mxu0 %v1984
    %2004 = vmatpush1.bf16.msra.mxu0 %v1983
    %2005 = vmatprep.subr.bf16.mxu0 %v1988
    %2006 = vmatpush1.bf16.msra.mxu0 %v1987
    %2007 = vmatprep.subr.bf16.mxu0 0
    %2008 = vmatpush1.bf16.msra.mxu0 0
    %2009 = vmatprep.subr.bf16.mxu0 0
    %2010 = vmatpush1.bf16.msra.mxu0 0
    %2011 = vmatprep.subr.bf16.mxu0 0
    %2012 = vmatpush1.bf16.msra.mxu0 0
    %2013 = vmatprep.subr.bf16.mxu0 0
    %2014 = vmatpush1.bf16.msra.mxu0 0
    %2015 = vmatprep.subr.bf16.mxu0 0
    %2016 = vmatpush1.bf16.msra.mxu0 0
    %2017 = vmatprep.subr.bf16.mxu0 0
    %2018 = vmatpush1.bf16.msra.mxu0 0
    %2019 = vmatprep.subr.bf16.mxu0 0
    %2020 = vmatpush1.bf16.msra.mxu0 0
    %2021 = vmatprep.subr.bf16.mxu0 0
    %2022 = vmatpush1.bf16.msra.mxu0 0
    %2023 = vmatprep.mubr.bf16.mxu0 0
    %2024 = vmatmul.mubr.bf16.gmra.mrb[0].mxu0 %v1951
    %v2025 = vpop.f32.mrb[0].mxu0
    %v2026 = vadd.f32 0.0, %v2025
    %v2027 = vpop.f32.mrb[0].mxu0
    %v2028 = vadd.f32 0.0, %v2027
    %v2029 = vpop.f32.mrb[0].mxu0
    %v2030 = vpop.f32.mrb[0].mxu0
    %2031 = vdwg.mxu0
    %2032 = vmatprep.subr.bf16.mxu0 %v1962
    %2033 = vmatpush1.bf16.msra.mxu0 %v1961
    %2034 = vmatprep.subr.bf16.mxu0 %v1966
    %2035 = vmatpush1.bf16.msra.mxu0 %v1965
    %2036 = vmatprep.subr.bf16.mxu0 %v1970
    %2037 = vmatpush1.bf16.msra.mxu0 %v1969
    %2038 = vmatprep.subr.bf16.mxu0 %v1974
    %2039 = vmatpush1.bf16.msra.mxu0 %v1973
    %2040 = vmatprep.subr.bf16.mxu0 %v1978
    %2041 = vmatpush1.bf16.msra.mxu0 %v1977
    %2042 = vmatprep.subr.bf16.mxu0 %v1982
    %2043 = vmatpush1.bf16.msra.mxu0 %v1981
    %2044 = vmatprep.subr.bf16.mxu0 %v1986
    %2045 = vmatpush1.bf16.msra.mxu0 %v1985
    %2046 = vmatprep.subr.bf16.mxu0 %v1990
    %2047 = vmatpush1.bf16.msra.mxu0 %v1989
    %2048 = vmatprep.subr.bf16.mxu0 0
    %2049 = vmatpush1.bf16.msra.mxu0 0
    %2050 = vmatprep.subr.bf16.mxu0 0
    %2051 = vmatpush1.bf16.msra.mxu0 0
    %2052 = vmatprep.subr.bf16.mxu0 0
    %2053 = vmatpush1.bf16.msra.mxu0 0
    %2054 = vmatprep.subr.bf16.mxu0 0
    %2055 = vmatpush1.bf16.msra.mxu0 0
    %2056 = vmatprep.subr.bf16.mxu0 0
    %2057 = vmatpush1.bf16.msra.mxu0 0
    %2058 = vmatprep.subr.bf16.mxu0 0
    %2059 = vmatpush1.bf16.msra.mxu0 0
    %2060 = vmatprep.subr.bf16.mxu0 0
    %2061 = vmatpush1.bf16.msra.mxu0 0
    %2062 = vmatprep.subr.bf16.mxu0 0
    %2063 = vmatpush1.bf16.msra.mxu0 0
    %2064 = vmatprep.mubr.bf16.mxu0 0
    %2065 = vmatmul.mubr.bf16.gmra.mrb[0].mxu0 %v1951
    %v2066 = vpop.f32.mrb[0].mxu0
    %v2067 = vadd.f32 0.0, %v2066
    %v2068 = vpop.f32.mrb[0].mxu0
    %v2069 = vadd.f32 0.0, %v2068
    %v2070 = vpop.f32.mrb[0].mxu0
    %v2071 = vpop.f32.mrb[0].mxu0
    %2072 = vdwg.mxu0
    %v2073 = vadd.f32 %v1955, %v2026
    %v2074 = vadd.f32 %v1956, %v2028
    %v2075 = vadd.f32 %v1957, %v2067
    %v2076 = vadd.f32 %v1958, %v2069
    %v2077 = vxor.u32 %v2073, 2147483648
    %v2078 = vmul.f32 %v2077, 1.442695
    %v2079 = vpow.pop %v2078
    %v2080 = vadd.f32 %v2079, 1.0
    %v2081 = vrcp.pop %v2080
    %v2082 = vmul.f32 1.0, %v2081
    %v2083 = vxor.u32 %v2074, 2147483648
    %v2084 = vmul.f32 %v2083, 1.442695
    %v2085 = vpow.pop %v2084
    %v2086 = vadd.f32 %v2085, 1.0
    %v2087 = vrcp.pop %v2086
    %v2088 = vmul.f32 1.0, %v2087
    %v2089 = vtanh.pop %v2075
    %v2090 = vxor.u32 %v2076, 2147483648
    %v2091 = vmul.f32 %v2090, 1.442695
    %v2092 = vpow.pop %v2091
    %v2093 = vadd.f32 %v2092, 1.0
    %v2094 = vrcp.pop %v2093
    %v2095 = vmul.f32 1.0, %v2094
    %v2096 = vmul.f32 %v2088, %v1948
    %v2097 = vmul.f32 %v2082, %v2089
    %v2098 = vadd.f32 %v2096, %v2097
    %v2099 = vtanh.pop %v2098
    %v2100 = vmul.f32 %v2095, %v2099
    %v2101 = vpack.c.bf16 %v2100, %v2100
    %s2102 = scalar_lea.vmem [#allocation8], 28
    %2103 = vst [vmem:[%s2102] sm:$0xf] %v2101
    %2104 = vst [vmem:[#allocation2] sm:$0xff] %v2100
    %2105 = vst [vmem:[#allocation3] sm:$0xff] %v2098
    // Predicated region
    $region88: #{encoder_forward.3} parent=1 // pred_check
      %p2106 = pneg %p18
    $region89: #{encoder_forward.3} parent=1 // pred_check_branch
      %2108 = sbr.rel (%p2106) target = $region91
    $region90: #{encoder_forward.3} parent=1 // pred_region
      %2109 = vst [vmem:[%s5] sm:$0xff] %v2100
      %2110 = vst [vmem:[%s6] sm:$0xff] %v2098
    $region91: #{encoder_forward.3} parent=1 // pred_fallthru
      _
    // Predicated region
    $region92: #{encoder_forward.3} parent=1 // pred_check
      _
    $region93: #{encoder_forward.3} parent=1 // pred_check_branch
      %2112 = sbr.rel (0) target = $region95
    $region94: #{encoder_forward.3} parent=1 // pred_region
      %s2114 = ssub.s32 512, 512
      %2115 = vsyncadd [#allocation9], %s2114
      %s2116 = sshll.u32 [#allocation8], 4
      %s2117 = int_to_ptr.vmem [resolvable:$true] %s2116
      %2122 = dma.vmem_to_hbm [thread:$0]  %s2117, 512, %s4, [#allocation9], 64, 64, 4
    $region95: #{encoder_forward.3} parent=1 // pred_fallthru
      _
    // Predicated region
    $region96: #{encoder_forward.3} parent=1 // pred_check
      _
    $region97: #{encoder_forward.3} parent=1 // pred_check_branch
      %2124 = sbr.rel (0) target = $region99
    $region98: #{encoder_forward.3} parent=1 // pred_region
      _
    $region99: #{encoder_forward.3} parent=1 // pred_fallthru
      _
    // Predicated region
    $region100: #{encoder_forward.3} parent=1 // pred_check
      _
    $region101: #{encoder_forward.3} parent=1 // pred_check_branch
      %2126 = sbr.rel (0) target = $region103
    $region102: #{encoder_forward.3} parent=1 // pred_region
      _
    $region103: #{encoder_forward.3} parent=1 // pred_fallthru
      _
    // Predicated region
    $region104: #{encoder_forward.3} parent=1 // pred_check
      _
    $region105: #{encoder_forward.3} parent=1 // pred_check_branch
      %2128 = sbr.rel (0) target = $region107
    $region106: #{encoder_forward.3} parent=1 // pred_region
      %2129 = dma.done [#allocation9], 512
    $region107: #{encoder_forward.3} parent=1 // pred_fallthru
      _
    // Predicated region
    $region108: #{encoder_forward.3} parent=1 // pred_check
      _
    $region109: #{encoder_forward.3} parent=1 // pred_check_branch
      %2131 = sbr.rel (0) target = $region111
    $region110: #{encoder_forward.3} parent=1 // pred_region
      _
    $region111: #{encoder_forward.3} parent=1 // pred_fallthru
      _
    // Predicated region
    $region112: #{encoder_forward.3} parent=1 // pred_check
      _
    $region113: #{encoder_forward.3} parent=1 // pred_check_branch
      %2133 = sbr.rel (0) target = $region115
    $region114: #{encoder_forward.3} parent=1 // pred_region
      _
    $region115: #{encoder_forward.3} parent=1 // pred_fallthru
      _
    %2134 = vsyncpa [#allocation9], 1
  %2135 = vsyncmov [#allocation7]
  %s2136 = vpop.sfrf %2135
  %p2137 = scmp.eq.s32.totalorder %s2136, 0
  %p2138 = pneg %p2137
  %2140 = shalt.err (%p2138)
  %s2141 = scalar_lea.sflag [#allocation7], 1
  %2142 = vsyncmov %s2141
  %s2143 = vpop.sfrf %2142
  %p2144 = scmp.eq.s32.totalorder %s2143, 0
  %p2145 = pneg %p2144
  %2147 = shalt.err (%p2145)

</llo_original>
